<compile_context>
chip_gen: v6e
topology: v6e:2x2x1
jax: 0.10.0
libtpu: 0.0.40
codegen_flags: <defaults>
</compile_context>

<pallas_src>
import numpy as np
import jax
import jax.numpy as jnp
from jax.experimental import pallas as pl
from jax.experimental.pallas import tpu as pltpu

F = 128            # feature dim (module default)
N_RBF = 20         # rbf count (w_layer input dim is hard-coded to 20)
N_RBF_PAD = 32     # rbf lanes padded to 32; lanes 20..22 carry dx, dy, dz
R_CUT = 2.0

EDGE_CHUNK = 512                     # v7x-safe; 1024-2048 also fine on v5e/v6e
_VMEM_LIMIT = 48 * 1024 * 1024       # sized for v7x (64 MiB/TC); raise on v5e/v6e


def _round_up(x, m):
    return ((x + m - 1) // m) * m


# --------------------------------------------------------------------------
# fused message + update layer kernel
# grid = (node tiles ["parallel"], edge chunks ["arbitrary"])
# --------------------------------------------------------------------------
def _layer_kernel(nchunk_ref,
                  idx_ref, feat_ref, s_ref, v_ref,
                  pw1_ref, pb1_ref, pw2_ref, pb2_ref, ww_ref, wb_ref,
                  vw_ref, uw_ref, aw1v_ref, aw1s_ref, ab1_ref, aw2_ref, ab2_ref,
                  s_out_ref, v_out_ref, acc_ref):
    t = pl.program_id(0)
    c = pl.program_id(1)
    tn = s_ref.shape[0]
    f = s_ref.shape[1]

    @pl.when(c == 0)
    def _():
        acc_ref[...] = jnp.zeros_like(acc_ref)

    # ---- message block: accumulate this edge chunk's scatter contribution ----
    @pl.when(c < nchunk_ref[t])
    def _():
        idx = idx_ref[0]                     # (1, chunk) local receiver id, -1 = pad
        feat = feat_ref[0]                   # (chunk, 32): [rbf*fcut (20), dx, dy, dz, 0..]
        chunk = feat.shape[0]

        s_nodes = s_ref[...]                 # (TN, F)
        v0, v1, v2 = v_ref[0], v_ref[1], v_ref[2]

        # one-hot scatter matrix (TN, chunk); its transpose is the gather matrix
        onehot = (jax.lax.broadcasted_iota(jnp.int32, (tn, chunk), 0)
                  == idx).astype(jnp.float32)
        scatter_b = onehot.astype(jnp.bfloat16)
        gather_b = jnp.transpose(onehot).astype(jnp.bfloat16)       # (chunk, TN)

        # gather the RECEIVER node's own s/v onto its edges (reference gathers
        # s[idx_i] / v[idx_i], so every gathered node lives in this tile)
        nodes4 = jnp.concatenate([s_nodes, v0, v1, v2],
                                 axis=-1).astype(jnp.bfloat16)      # (TN, 4F)
        edges4 = jnp.dot(gather_b, nodes4, preferred_element_type=jnp.float32)
        s_e = edges4[:, :f]
        vx_e = edges4[:, f:2 * f]
        vy_e = edges4[:, 2 * f:3 * f]
        vz_e = edges4[:, 3 * f:]

        # phi MLP: Linear(F,F) -> SiLU -> Linear(F,3F) (fused 3F-wide matmul)
        h = jnp.dot(s_e.astype(jnp.bfloat16), pw1_ref[...],
                    preferred_element_type=jnp.float32) + pb1_ref[...]
        h = h * jax.nn.sigmoid(h)
        phi = jnp.dot(h.astype(jnp.bfloat16), pw2_ref[...],
                      preferred_element_type=jnp.float32) + pb2_ref[...]

        # w = Linear(20, 3F) on host-precomputed rbf*cutoff features
        # (lanes 20..31 of feat hit zero rows of ww, so dx/dy/dz do not leak in)
        w = jnp.dot(feat.astype(jnp.bfloat16), ww_ref[...],
                    preferred_element_type=jnp.float32) + wb_ref[...]

        m = w * phi                                                  # (chunk, 3F)
        s0 = m[:, :f]
        s1 = m[:, f:2 * f]
        s2 = m[:, 2 * f:]

        dx = feat[:, N_RBF:N_RBF + 1]        # r / ||r||_F (global Frobenius norm,
        dy = feat[:, N_RBF + 1:N_RBF + 2]    #  exactly as in the reference)
        dz = feat[:, N_RBF + 2:N_RBF + 3]
        msgs = jnp.concatenate(
            [s1,
             s0 * vx_e + dx * s2,
             s0 * vy_e + dy * s2,
             s0 * vz_e + dz * s2], axis=-1)                          # (chunk, 4F)

        acc_ref[...] += jnp.dot(scatter_b, msgs.astype(jnp.bfloat16),
                                preferred_element_type=jnp.float32)

    # ---- last chunk: message residual + fused update block (+ residual) ----
    @pl.when(c == pl.num_programs(1) - 1)
    def _():
        contrib = acc_ref[...]
        s_mid = s_ref[...] + contrib[:, :f]
        v0 = v_ref[0] + contrib[:, f:2 * f]
        v1 = v_ref[1] + contrib[:, 2 * f:3 * f]
        v2 = v_ref[2] + contrib[:, 3 * f:]

        # V / U linears with the 3 spatial components batched along sublanes
        vcat = jnp.concatenate([v0, v1, v2], axis=0).astype(jnp.bfloat16)  # (3TN, F)
        vv = jnp.dot(vcat, vw_ref[...], preferred_element_type=jnp.float32)
        uu = jnp.dot(vv.astype(jnp.bfloat16), uw_ref[...],
                     preferred_element_type=jnp.float32)
        vv0, vv1, vv2 = vv[:tn], vv[tn:2 * tn], vv[2 * tn:]
        uu0, uu1, uu2 = uu[:tn], uu[tn:2 * tn], uu[2 * tn:]

        vnorm = jnp.sqrt(vv0 * vv0 + vv1 * vv1 + vv2 * vv2)
        # a([||Vv||, s]): the 2F-wide first linear split into two F-wide matmuls
        h = (jnp.dot(vnorm.astype(jnp.bfloat16), aw1v_ref[...],
                     preferred_element_type=jnp.float32)
             + jnp.dot(s_mid.astype(jnp.bfloat16), aw1s_ref[...],
                       preferred_element_type=jnp.float32)
             + ab1_ref[...])
        h = h * jax.nn.sigmoid(h)
        a = jnp.dot(h.astype(jnp.bfloat16), aw2_ref[...],
                    preferred_element_type=jnp.float32) + ab2_ref[...]
        a0 = a[:, :f]
        a1 = a[:, f:2 * f]
        a2 = a[:, 2 * f:]

        v_out_ref[0] = v0 + uu0 * a0
        v_out_ref[1] = v1 + uu1 * a0
        v_out_ref[2] = v2 + uu2 * a0
        sdot = uu0 * vv0 + uu1 * vv1 + uu2 * vv2
        s_out_ref[...] = s_mid + sdot * a1 + a2


def painn_layer(nchunks, idx, feat, s, v, p, *, node_tile, chunk,
                num_tiles, num_chunks):
    n_pad = s.shape[0]
    const = lambda t, c, nc: (0, 0)
    grid_spec = pltpu.PrefetchScalarGridSpec(
        num_scalar_prefetch=1,
        grid=(num_tiles, num_chunks),
        in_specs=[
            pl.BlockSpec((1, 1, chunk), lambda t, c, nc: (t, 0, c)),      # idx
            pl.BlockSpec((1, chunk, N_RBF_PAD), lambda t, c, nc: (t, c, 0)),  # feat
            pl.BlockSpec((node_tile, F), lambda t, c, nc: (t, 0)),        # s
            pl.BlockSpec((3, node_tile, F), lambda t, c, nc: (0, t, 0)),  # v
            pl.BlockSpec((F, F), const),                                  # pw1
            pl.BlockSpec((1, F), const),                                  # pb1
            pl.BlockSpec((F, 3 * F), const),                              # pw2
            pl.BlockSpec((1, 3 * F), const),                              # pb2
            pl.BlockSpec((N_RBF_PAD, 3 * F), const),                      # ww
            pl.BlockSpec((1, 3 * F), const),                              # wb
            pl.BlockSpec((F, F), const),                                  # Vw
            pl.BlockSpec((F, F), const),                                  # Uw
            pl.BlockSpec((F, F), const),                                  # aw1_v
            pl.BlockSpec((F, F), const),                                  # aw1_s
            pl.BlockSpec((1, F), const),                                  # ab1
            pl.BlockSpec((F, 3 * F), const),                              # aw2
            pl.BlockSpec((1, 3 * F), const),                              # ab2
        ],
        out_specs=(pl.BlockSpec((node_tile, F), lambda t, c, nc: (t, 0)),
                   pl.BlockSpec((3, node_tile, F), lambda t, c, nc: (0, t, 0))),
        scratch_shapes=[pltpu.VMEM((node_tile, 4 * F), jnp.float32)],
    )
    return pl.pallas_call(
        _layer_kernel,
        grid_spec=grid_spec,
        out_shape=(jax.ShapeDtypeStruct((n_pad, F), jnp.float32),
                   jax.ShapeDtypeStruct((3, n_pad, F), jnp.float32)),
        compiler_params=pltpu.CompilerParams(
            dimension_semantics=("parallel", "arbitrary"),
            vmem_limit_bytes=_VMEM_LIMIT),
    )(nchunks, idx, feat, s, v,
      p['pw1'], p['pb1'], p['pw2'], p['pb2'], p['ww'], p['wb'],
      p['Vw'], p['Uw'], p['aw1_v'], p['aw1_s'], p['ab1'], p['aw2'], p['ab2'])


# --------------------------------------------------------------------------
# output MLP + per-graph pooling kernel (accumulates across node tiles)
# --------------------------------------------------------------------------
def _output_kernel(gidx_ref, s_ref, ow1_ref, ob1_ref, ow2_ref, ob2_ref,
                   out_ref, acc_ref):
    t = pl.program_id(0)

    @pl.when(t == 0)
    def _():
        acc_ref[...] = jnp.zeros_like(acc_ref)

    h = jnp.dot(s_ref[...].astype(jnp.bfloat16), ow1_ref[...],
                preferred_element_type=jnp.float32) + ob1_ref[...]
    h = h * jax.nn.sigmoid(h)
    o = jnp.dot(h.astype(jnp.bfloat16), ow2_ref[...],
                preferred_element_type=jnp.float32) + ob2_ref[...]

    gid = gidx_ref[0]                                     # (1, TN), -1 = pad
    g_pad = acc_ref.shape[0]
    pool = (jax.lax.broadcasted_iota(jnp.int32, (g_pad, gid.shape[1]), 0)
            == gid).astype(jnp.bfloat16)                  # (G_pad, TN)
    acc_ref[...] += jnp.dot(pool, o.astype(jnp.bfloat16),
                            preferred_element_type=jnp.float32)

    @pl.when(t == pl.num_programs(0) - 1)
    def _():
        out_ref[...] = jnp.sum(acc_ref[...], axis=1, keepdims=True)


def output_block(gidx, s, p, *, node_tile, num_tiles, g_pad):
    const = lambda g: (0, 0)
    return pl.pallas_call(
        _output_kernel,
        grid=(num_tiles,),
        out_shape=jax.ShapeDtypeStruct((g_pad, 1), jnp.float32),
        in_specs=[
            pl.BlockSpec((1, 1, node_tile), lambda g: (g, 0, 0)),     # gidx
            pl.BlockSpec((node_tile, F), lambda g: (g, 0)),           # s
            pl.BlockSpec((F, F), const),                              # ow1
            pl.BlockSpec((1, F), const),                              # ob1
            pl.BlockSpec((F, F), const),                              # ow2
            pl.BlockSpec((1, F), const),                              # ob2
        ],
        out_specs=pl.BlockSpec((g_pad, 1), lambda g: (0, 0)),
        scratch_shapes=[pltpu.VMEM((g_pad, F), jnp.float32)],
        compiler_params=pltpu.CompilerParams(
            dimension_semantics=("arbitrary",),
            vmem_limit_bytes=_VMEM_LIMIT),
    )(gidx, s, p['ow1'], p['ob1'], p['ow2'], p['ob2'])


# --------------------------------------------------------------------------
# parameters (deterministic, shared=True variant of the module, f = 128)
# matmul weights pre-cast to bf16 once; biases / embedding stay f32
# --------------------------------------------------------------------------
def init_params(key):
    keys = jax.random.split(key, 17)

    def w(k, shape, scale=0.05):
        return jax.random.normal(k, shape, jnp.float32) * scale

    bf = lambda x: x.astype(jnp.bfloat16)
    aw1 = w(keys[9], (2 * F, F))
    ww = jnp.zeros((N_RBF_PAD, 3 * F), jnp.float32).at[:N_RBF].set(
        w(keys[5], (N_RBF, 3 * F)))
    p = {
        'emb': w(keys[0], (10, F), 1.0),
        # shared message weights: phi = Linear(F,F)+SiLU+Linear(F,3F); w = Linear(20,3F)
        'pw1': bf(w(keys[1], (F, F))), 'pb1': w(keys[2], (1, F)),
        'pw2': bf(w(keys[3], (F, 3 * F))), 'pb2': w(keys[4], (1, 3 * F)),
        'ww': bf(ww), 'wb': w(keys[6], (1, 3 * F)),
        # shared update weights: V,U = Linear(F,F,no bias); a = Linear(2F,F)+SiLU+Linear(F,3F)
        'Vw': bf(w(keys[7], (F, F))), 'Uw': bf(w(keys[8], (F, F))),
        'aw1_v': bf(aw1[:F, :]), 'aw1_s': bf(aw1[F:, :]), 'ab1': w(keys[10], (1, F)),
        'aw2': bf(w(keys[11], (F, 3 * F))), 'ab2': w(keys[12], (1, 3 * F)),
        # output layers: Linear(F,F)+SiLU+Linear(F,F)
        'ow1': bf(w(keys[13], (F, F))), 'ob1': w(keys[14], (1, F)),
        'ow2': bf(w(keys[15], (F, F))), 'ob2': w(keys[16], (1, F)),
    }
    return p


# --------------------------------------------------------------------------
# host-side graph preprocessing (mirrors positional_adjacency / r_ij_calc
# plus the rbf/cutoff featurization, all in NumPy)
# --------------------------------------------------------------------------
def positional_adjacency_np(pos, r_cut, graph_idx):
    diff = pos[:, None, :] - pos[None, :, :]
    dist = np.linalg.norm(diff, axis=2)
    adj = (dist <= r_cut) & (graph_idx[:, None] == graph_idx[None, :])
    np.fill_diagonal(adj, False)
    ii, jj = np.nonzero(adj)   # row-major, sorted by receiver ii (torch .nonzero order)
    return ii, jj


def _edge_features(r):
    rn = np.linalg.norm(r, axis=1, keepdims=True)                     # per-edge ||r_ij||
    n_vals = np.arange(1, N_RBF + 1, dtype=np.float32)[None, :]
    rbf = np.sin(n_vals * (np.pi / R_CUT) * rn) / rn                  # exact division
    # cosine cutoff applied to the RBF values (exactly as in the reference)
    fc = np.where(rbf <= R_CUT,
                  0.5 * (np.cos(np.pi * rbf / R_CUT) + 1.0),
                  0.0).astype(np.float32)
    dirs = (r / np.linalg.norm(r)).astype(np.float32)                 # global Frobenius norm
    return fc, dirs


def _pack_edges(ii, fc, dirs, node_tile, num_tiles, edge_chunk):
    """Bucket edges by receiver node tile, pad to 128-aligned chunked capacity."""
    tile_of_edge = ii // node_tile
    counts = np.bincount(tile_of_edge, minlength=num_tiles)
    cap = max(128, _round_up(int(counts.max()), 128))
    chunk = min(edge_chunk, cap)
    cap = _round_up(cap, chunk)
    num_chunks = cap // chunk

    idx = np.full((num_tiles, 1, cap), -1, np.int32)
    feat = np.zeros((num_tiles, cap, N_RBF_PAD), np.float32)
    for g in range(num_tiles):
        sel = np.nonzero(tile_of_edge == g)[0]
        k = sel.shape[0]
        if k:
            idx[g, 0, :k] = (ii[sel] - g * node_tile).astype(np.int32)
            feat[g, :k, :N_RBF] = fc[sel]
            feat[g, :k, N_RBF:N_RBF + 3] = dirs[sel]
    nchunks = np.ceil(counts / chunk).astype(np.int32)
    return idx, feat, nchunks, chunk, num_chunks


# --------------------------------------------------------------------------
# full PaiNN forward
# --------------------------------------------------------------------------
def painn_forward(atomic_numbers, positions, graph_indices, params, *,
                  node_tile=128, edge_chunk=EDGE_CHUNK):
    atomic_numbers = np.asarray(atomic_numbers, np.int32)
    positions = np.asarray(positions, np.float32)
    graph_indices = np.asarray(graph_indices, np.int32)

    n_atoms = atomic_numbers.shape[0]
    ii, jj = positional_adjacency_np(positions, R_CUT, graph_indices)
    # the reference module sizes its scatter buffers by len(set(idx_i)):
    assert len(set(ii.tolist())) == n_atoms, "every atom must receive at least one message"

    r = (positions[ii] - positions[jj]).astype(np.float32)            # (E, 3)
    fc, dirs = _edge_features(r)

    n_pad = _round_up(n_atoms, node_tile)
    num_tiles = n_pad // node_tile
    idx, feat, nchunks, chunk, num_chunks = _pack_edges(
        ii, fc, dirs, node_tile, num_tiles, edge_chunk)

    n_graphs = int(graph_indices[-1]) + 1
    g_pad = _round_up(n_graphs, 8)
    gflat = np.full((n_pad,), -1, np.int32)
    gflat[:n_atoms] = graph_indices
    gidx = jnp.asarray(gflat.reshape(num_tiles, 1, node_tile))

    nchunks = jnp.asarray(nchunks)
    idx = jnp.asarray(idx)
    feat = jnp.asarray(feat)

    s = params['emb'][jnp.asarray(atomic_numbers)]                    # (N, F)
    s = jnp.pad(s, ((0, n_pad - n_atoms), (0, 0)))
    v = jnp.zeros((3, n_pad, F), jnp.float32)                         # (3, N_pad, F)

    for _ in range(3):   # shared weights across the 3 layers
        s, v = painn_layer(nchunks, idx, feat, s, v, params,
                           node_tile=node_tile, chunk=chunk,
                           num_tiles=num_tiles, num_chunks=num_chunks)

    sums = output_block(gidx, s, params,
                        node_tile=node_tile, num_tiles=num_tiles, g_pad=g_pad)
    return sums[:n_graphs, 0]


if __name__ == "__main__":
    key = jax.random.PRNGKey(0)
    pkey, poskey = jax.random.split(key)
    params = init_params(pkey)

    # 2 graphs x 4 atoms; clusters tight enough that every same-graph pair
    # lies within r_cut = 2.0
    graph_indices = np.array([0, 0, 0, 0, 1, 1, 1, 1], np.int32)
    atomic_numbers = np.array([1, 6, 8, 1, 6, 7, 1, 8], np.int32)
    base = np.asarray(jax.random.normal(poskey, (8, 3), jnp.float32)) * 0.25
    positions = (base + graph_indices[:, None].astype(np.float32) * 10.0).astype(np.float32)

    out = painn_forward(atomic_numbers, positions, graph_indices, params)
    out = jax.block_until_ready(out)
    assert out.shape == (int(graph_indices[-1]) + 1,)
    assert bool(jnp.all(jnp.isfinite(out)))
    print("KERNEL_OK")
</pallas_src>

<mosaic_0001>
module attributes {stable_mosaic.version = 11 : i64} {
  func.func @_layer_kernel(%arg0: i32, %arg1: i32, %arg2: memref<1xi32, #tpu.memory_space<smem>>, %arg3: memref<1x1x128xi32, #tpu.memory_space<vmem>>, %arg4: memref<1x128x32xf32, #tpu.memory_space<vmem>>, %arg5: memref<128x128xf32, #tpu.memory_space<vmem>>, %arg6: memref<3x128x128xf32, #tpu.memory_space<vmem>>, %arg7: memref<128x128xbf16, #tpu.memory_space<vmem>>, %arg8: memref<1x128xf32, #tpu.memory_space<vmem>>, %arg9: memref<128x384xbf16, #tpu.memory_space<vmem>>, %arg10: memref<1x384xf32, #tpu.memory_space<vmem>>, %arg11: memref<32x384xbf16, #tpu.memory_space<vmem>>, %arg12: memref<1x384xf32, #tpu.memory_space<vmem>>, %arg13: memref<128x128xbf16, #tpu.memory_space<vmem>>, %arg14: memref<128x128xbf16, #tpu.memory_space<vmem>>, %arg15: memref<128x128xbf16, #tpu.memory_space<vmem>>, %arg16: memref<128x128xbf16, #tpu.memory_space<vmem>>, %arg17: memref<1x128xf32, #tpu.memory_space<vmem>>, %arg18: memref<128x384xbf16, #tpu.memory_space<vmem>>, %arg19: memref<1x384xf32, #tpu.memory_space<vmem>>, %arg20: memref<128x128xf32, #tpu.memory_space<vmem>>, %arg21: memref<3x128x128xf32, #tpu.memory_space<vmem>>, %arg22: memref<128x512xf32, #tpu.memory_space<vmem>>) attributes {dimension_semantics = [#tpu.dimension_semantics<parallel>, #tpu.dimension_semantics<arbitrary>], iteration_bounds = array<i64: 1, 1>, scalar_prefetch = 1 : i64, scratch_operands = 1 : i64, tpu.core_type = #tpu.core_type<tc>, window_params = [{transform_indices = @transform_0, window_bounds = array<i64: 1, 1, 128>}, {transform_indices = @transform_1, window_bounds = array<i64: 1, 128, 32>}, {transform_indices = @transform_2, window_bounds = array<i64: 128, 128>}, {transform_indices = @transform_3, window_bounds = array<i64: 3, 128, 128>}, {pipeline_mode = #tpu.pipeline_mode<synchronous>, transform_indices = @transform_4, window_bounds = array<i64: 128, 128>}, {pipeline_mode = #tpu.pipeline_mode<synchronous>, transform_indices = @transform_5, window_bounds = array<i64: 1, 128>}, {pipeline_mode = #tpu.pipeline_mode<synchronous>, transform_indices = @transform_6, window_bounds = array<i64: 128, 384>}, {pipeline_mode = #tpu.pipeline_mode<synchronous>, transform_indices = @transform_7, window_bounds = array<i64: 1, 384>}, {pipeline_mode = #tpu.pipeline_mode<synchronous>, transform_indices = @transform_8, window_bounds = array<i64: 32, 384>}, {pipeline_mode = #tpu.pipeline_mode<synchronous>, transform_indices = @transform_9, window_bounds = array<i64: 1, 384>}, {pipeline_mode = #tpu.pipeline_mode<synchronous>, transform_indices = @transform_10, window_bounds = array<i64: 128, 128>}, {pipeline_mode = #tpu.pipeline_mode<synchronous>, transform_indices = @transform_11, window_bounds = array<i64: 128, 128>}, {pipeline_mode = #tpu.pipeline_mode<synchronous>, transform_indices = @transform_12, window_bounds = array<i64: 128, 128>}, {pipeline_mode = #tpu.pipeline_mode<synchronous>, transform_indices = @transform_13, window_bounds = array<i64: 128, 128>}, {pipeline_mode = #tpu.pipeline_mode<synchronous>, transform_indices = @transform_14, window_bounds = array<i64: 1, 128>}, {pipeline_mode = #tpu.pipeline_mode<synchronous>, transform_indices = @transform_15, window_bounds = array<i64: 128, 384>}, {pipeline_mode = #tpu.pipeline_mode<synchronous>, transform_indices = @transform_16, window_bounds = array<i64: 1, 384>}, {transform_indices = @transform_17, window_bounds = array<i64: 128, 128>}, {transform_indices = @transform_18, window_bounds = array<i64: 3, 128, 128>}]} {
    %c0_i32 = arith.constant 0 : i32
    %0 = arith.cmpi eq, %arg1, %c0_i32 : i32
    %1 = arith.extui %0 : i1 to i32
    %c0_i32_0 = arith.constant 0 : i32
    %2 = arith.cmpi ne, %1, %c0_i32_0 : i32
    scf.if %2 {
      %cst = arith.constant 0.000000e+00 : f32
      %11 = vector.broadcast %cst : f32 to vector<128x512xf32>
      %c0 = arith.constant 0 : index
      %c0_4 = arith.constant 0 : index
      %12 = vector.load %arg22[%c0, %c0_4] : memref<128x512xf32, #tpu.memory_space<vmem>>, vector<128x512xf32>
      tpu.vector_store %arg22[%c0, %c0_4], %11 {strides = array<i32>} : memref<128x512xf32, #tpu.memory_space<vmem>>, vector<128x512xf32>,
    } else {
    }
    %3 = arith.index_cast %arg0 : i32 to index
    %4 = memref.load %arg2[%3] : memref<1xi32, #tpu.memory_space<smem>>
    %5 = arith.cmpi slt, %arg1, %4 : i32
    %6 = arith.extui %5 : i1 to i32
    %c0_i32_1 = arith.constant 0 : i32
    %7 = arith.cmpi ne, %6, %c0_i32_1 : i32
    scf.if %7 {
      %c0 = arith.constant 0 : index
      %c0_4 = arith.constant 0 : index
      %c0_5 = arith.constant 0 : index
      %11 = vector.load %arg3[%c0, %c0_4, %c0_5] : memref<1x1x128xi32, #tpu.memory_space<vmem>>, vector<1x1x128xi32>
      %12 = vector.shape_cast %11 : vector<1x1x128xi32> to vector<1x128xi32>
      %c0_6 = arith.constant 0 : index
      %c0_7 = arith.constant 0 : index
      %c0_8 = arith.constant 0 : index
      %13 = vector.load %arg4[%c0_6, %c0_7, %c0_8] : memref<1x128x32xf32, #tpu.memory_space<vmem>>, vector<1x128x32xf32>
      %14 = vector.shape_cast %13 : vector<1x128x32xf32> to vector<128x32xf32>
      %c0_9 = arith.constant 0 : index
      %c0_10 = arith.constant 0 : index
      %15 = vector.load %arg5[%c0_9, %c0_10] : memref<128x128xf32, #tpu.memory_space<vmem>>, vector<128x128xf32>
      %c0_11 = arith.constant 0 : index
      %c0_12 = arith.constant 0 : index
      %c0_13 = arith.constant 0 : index
      %16 = vector.load %arg6[%c0_11, %c0_12, %c0_13] : memref<3x128x128xf32, #tpu.memory_space<vmem>>, vector<1x128x128xf32>
      %17 = vector.shape_cast %16 : vector<1x128x128xf32> to vector<128x128xf32>
      %c1 = arith.constant 1 : index
      %c0_14 = arith.constant 0 : index
      %c0_15 = arith.constant 0 : index
      %18 = vector.load %arg6[%c1, %c0_14, %c0_15] : memref<3x128x128xf32, #tpu.memory_space<vmem>>, vector<1x128x128xf32>
      %19 = vector.shape_cast %18 : vector<1x128x128xf32> to vector<128x128xf32>
      %c2 = arith.constant 2 : index
      %c0_16 = arith.constant 0 : index
      %c0_17 = arith.constant 0 : index
      %20 = vector.load %arg6[%c2, %c0_16, %c0_17] : memref<3x128x128xf32, #tpu.memory_space<vmem>>, vector<1x128x128xf32>
      %21 = vector.shape_cast %20 : vector<1x128x128xf32> to vector<128x128xf32>
      %22 = tpu.iota {dimensions = array<i32: 0>} : vector<128x128xi32>
      %23 = vector.broadcast %12 : vector<1x128xi32> to vector<128x128xi32>
      %24 = arith.cmpi eq, %22, %23 : vector<128x128xi32>
      %25 = arith.extui %24 : vector<128x128xi1> to vector<128x128xi32>
      %26 = arith.sitofp %25 : vector<128x128xi32> to vector<128x128xf32>
      %27 = arith.truncf %26 : vector<128x128xf32> to vector<128x128xbf16>
      %28 = tpu.transpose %26, [1, 0] : vector<128x128xf32> -> vector<128x128xf32>
      %29 = arith.truncf %28 : vector<128x128xf32> to vector<128x128xbf16>
      %30 = tpu.concatenate %15, %17, %19, %21 in 1 : vector<128x128xf32>, vector<128x128xf32>, vector<128x128xf32>, vector<128x128xf32> -> vector<128x512xf32>
      %31 = arith.truncf %30 : vector<128x512xf32> to vector<128x512xbf16>
      %cst = arith.constant dense<0.000000e+00> : vector<128x512xf32>
      %32 = tpu.matmul %29, %31, %cst {dimension_numbers = #tpu.dot_dimension_numbers<[1], [0], [0], [1], [0, 0, 1, 1], [], []>} : vector<128x128xbf16>, vector<128x512xbf16>, vector<128x512xf32> -> vector<128x512xf32>
      %33 = vector.extract_strided_slice %32 {offsets = [0, 0], sizes = [128, 128], strides = [1, 1]} : vector<128x512xf32> to vector<128x128xf32>
      %34 = vector.extract_strided_slice %32 {offsets = [0, 128], sizes = [128, 128], strides = [1, 1]} : vector<128x512xf32> to vector<128x128xf32>
      %35 = vector.extract_strided_slice %32 {offsets = [0, 256], sizes = [128, 128], strides = [1, 1]} : vector<128x512xf32> to vector<128x128xf32>
      %36 = vector.extract_strided_slice %32 {offsets = [0, 384], sizes = [128, 128], strides = [1, 1]} : vector<128x512xf32> to vector<128x128xf32>
      %37 = arith.truncf %33 : vector<128x128xf32> to vector<128x128xbf16>
      %c0_18 = arith.constant 0 : index
      %c0_19 = arith.constant 0 : index
      %38 = vector.load %arg7[%c0_18, %c0_19] : memref<128x128xbf16, #tpu.memory_space<vmem>>, vector<128x128xbf16>
      %cst_20 = arith.constant dense<0.000000e+00> : vector<128x128xf32>
      %39 = tpu.matmul %37, %38, %cst_20 {dimension_numbers = #tpu.dot_dimension_numbers<[1], [0], [0], [1], [0, 0, 1, 1], [], []>} : vector<128x128xbf16>, vector<128x128xbf16>, vector<128x128xf32> -> vector<128x128xf32>
      %c0_21 = arith.constant 0 : index
      %c0_22 = arith.constant 0 : index
      %40 = vector.load %arg8[%c0_21, %c0_22] : memref<1x128xf32, #tpu.memory_space<vmem>>, vector<1x128xf32>
      %41 = vector.broadcast %40 : vector<1x128xf32> to vector<128x128xf32>
      %42 = arith.addf %39, %41 : vector<128x128xf32>
      %43 = arith.negf %42 : vector<128x128xf32>
      %44 = math.exp %43 : vector<128x128xf32>
      %cst_23 = arith.constant 1.000000e+00 : f32
      %45 = vector.broadcast %cst_23 : f32 to vector<128x128xf32>
      %46 = arith.addf %45, %44 : vector<128x128xf32>
      %47 = arith.divf %45, %46 : vector<128x128xf32>
      %48 = arith.mulf %42, %47 : vector<128x128xf32>
      %49 = arith.truncf %48 : vector<128x128xf32> to vector<128x128xbf16>
      %c0_24 = arith.constant 0 : index
      %c0_25 = arith.constant 0 : index
      %50 = vector.load %arg9[%c0_24, %c0_25] : memref<128x384xbf16, #tpu.memory_space<vmem>>, vector<128x384xbf16>
      %cst_26 = arith.constant dense<0.000000e+00> : vector<128x384xf32>
      %51 = tpu.matmul %49, %50, %cst_26 {dimension_numbers = #tpu.dot_dimension_numbers<[1], [0], [0], [1], [0, 0, 1, 1], [], []>} : vector<128x128xbf16>, vector<128x384xbf16>, vector<128x384xf32> -> vector<128x384xf32>
      %c0_27 = arith.constant 0 : index
      %c0_28 = arith.constant 0 : index
      %52 = vector.load %arg10[%c0_27, %c0_28] : memref<1x384xf32, #tpu.memory_space<vmem>>, vector<1x384xf32>
      %53 = vector.broadcast %52 : vector<1x384xf32> to vector<128x384xf32>
      %54 = arith.addf %51, %53 : vector<128x384xf32>
      %55 = arith.truncf %14 : vector<128x32xf32> to vector<128x32xbf16>
      %c0_29 = arith.constant 0 : index
      %c0_30 = arith.constant 0 : index
      %56 = vector.load %arg11[%c0_29, %c0_30] : memref<32x384xbf16, #tpu.memory_space<vmem>>, vector<32x384xbf16>
      %cst_31 = arith.constant dense<0.000000e+00> : vector<128x384xf32>
      %57 = tpu.matmul %55, %56, %cst_31 {dimension_numbers = #tpu.dot_dimension_numbers<[1], [0], [0], [1], [0, 0, 1, 1], [], []>} : vector<128x32xbf16>, vector<32x384xbf16>, vector<128x384xf32> -> vector<128x384xf32>
      %c0_32 = arith.constant 0 : index
      %c0_33 = arith.constant 0 : index
      %58 = vector.load %arg12[%c0_32, %c0_33] : memref<1x384xf32, #tpu.memory_space<vmem>>, vector<1x384xf32>
      %59 = vector.broadcast %58 : vector<1x384xf32> to vector<128x384xf32>
      %60 = arith.addf %57, %59 : vector<128x384xf32>
      %61 = arith.mulf %60, %54 : vector<128x384xf32>
      %62 = vector.extract_strided_slice %61 {offsets = [0, 0], sizes = [128, 128], strides = [1, 1]} : vector<128x384xf32> to vector<128x128xf32>
      %63 = vector.extract_strided_slice %61 {offsets = [0, 128], sizes = [128, 128], strides = [1, 1]} : vector<128x384xf32> to vector<128x128xf32>
      %64 = vector.extract_strided_slice %61 {offsets = [0, 256], sizes = [128, 128], strides = [1, 1]} : vector<128x384xf32> to vector<128x128xf32>
      %65 = vector.extract_strided_slice %14 {offsets = [0, 20], sizes = [128, 1], strides = [1, 1]} : vector<128x32xf32> to vector<128x1xf32>
      %66 = vector.extract_strided_slice %14 {offsets = [0, 21], sizes = [128, 1], strides = [1, 1]} : vector<128x32xf32> to vector<128x1xf32>
      %67 = vector.extract_strided_slice %14 {offsets = [0, 22], sizes = [128, 1], strides = [1, 1]} : vector<128x32xf32> to vector<128x1xf32>
      %68 = arith.mulf %62, %34 : vector<128x128xf32>
      %69 = vector.broadcast %65 : vector<128x1xf32> to vector<128x128xf32>
      %70 = arith.mulf %69, %64 : vector<128x128xf32>
      %71 = arith.addf %68, %70 : vector<128x128xf32>
      %72 = arith.mulf %62, %35 : vector<128x128xf32>
      %73 = vector.broadcast %66 : vector<128x1xf32> to vector<128x128xf32>
      %74 = arith.mulf %73, %64 : vector<128x128xf32>
      %75 = arith.addf %72, %74 : vector<128x128xf32>
      %76 = arith.mulf %62, %36 : vector<128x128xf32>
      %77 = vector.broadcast %67 : vector<128x1xf32> to vector<128x128xf32>
      %78 = arith.mulf %77, %64 : vector<128x128xf32>
      %79 = arith.addf %76, %78 : vector<128x128xf32>
      %80 = tpu.concatenate %63, %71, %75, %79 in 1 : vector<128x128xf32>, vector<128x128xf32>, vector<128x128xf32>, vector<128x128xf32> -> vector<128x512xf32>
      %c0_34 = arith.constant 0 : index
      %c0_35 = arith.constant 0 : index
      %81 = vector.load %arg22[%c0_34, %c0_35] : memref<128x512xf32, #tpu.memory_space<vmem>>, vector<128x512xf32>
      %82 = arith.truncf %80 : vector<128x512xf32> to vector<128x512xbf16>
      %cst_36 = arith.constant dense<0.000000e+00> : vector<128x512xf32>
      %83 = tpu.matmul %27, %82, %cst_36 {dimension_numbers = #tpu.dot_dimension_numbers<[1], [0], [0], [1], [0, 0, 1, 1], [], []>} : vector<128x128xbf16>, vector<128x512xbf16>, vector<128x512xf32> -> vector<128x512xf32>
      %84 = arith.addf %81, %83 : vector<128x512xf32>
      %c0_37 = arith.constant 0 : index
      %c0_38 = arith.constant 0 : index
      %85 = vector.load %arg22[%c0_37, %c0_38] : memref<128x512xf32, #tpu.memory_space<vmem>>, vector<128x512xf32>
      tpu.vector_store %arg22[%c0_37, %c0_38], %84 {strides = array<i32>} : memref<128x512xf32, #tpu.memory_space<vmem>>, vector<128x512xf32>,
    } else {
    }
    %c0_i32_2 = arith.constant 0 : i32
    %8 = arith.cmpi eq, %arg1, %c0_i32_2 : i32
    %9 = arith.extui %8 : i1 to i32
    %c0_i32_3 = arith.constant 0 : i32
    %10 = arith.cmpi ne, %9, %c0_i32_3 : i32
    scf.if %10 {
      %c0 = arith.constant 0 : index
      %c0_4 = arith.constant 0 : index
      %11 = vector.load %arg22[%c0, %c0_4] : memref<128x512xf32, #tpu.memory_space<vmem>>, vector<128x512xf32>
      %c0_5 = arith.constant 0 : index
      %c0_6 = arith.constant 0 : index
      %12 = vector.load %arg5[%c0_5, %c0_6] : memref<128x128xf32, #tpu.memory_space<vmem>>, vector<128x128xf32>
      %13 = vector.extract_strided_slice %11 {offsets = [0, 0], sizes = [128, 128], strides = [1, 1]} : vector<128x512xf32> to vector<128x128xf32>
      %14 = arith.addf %12, %13 : vector<128x128xf32>
      %c0_7 = arith.constant 0 : index
      %c0_8 = arith.constant 0 : index
      %c0_9 = arith.constant 0 : index
      %15 = vector.load %arg6[%c0_7, %c0_8, %c0_9] : memref<3x128x128xf32, #tpu.memory_space<vmem>>, vector<1x128x128xf32>
      %16 = vector.shape_cast %15 : vector<1x128x128xf32> to vector<128x128xf32>
      %17 = vector.extract_strided_slice %11 {offsets = [0, 128], sizes = [128, 128], strides = [1, 1]} : vector<128x512xf32> to vector<128x128xf32>
      %18 = arith.addf %16, %17 : vector<128x128xf32>
      %c1 = arith.constant 1 : index
      %c0_10 = arith.constant 0 : index
      %c0_11 = arith.constant 0 : index
      %19 = vector.load %arg6[%c1, %c0_10, %c0_11] : memref<3x128x128xf32, #tpu.memory_space<vmem>>, vector<1x128x128xf32>
      %20 = vector.shape_cast %19 : vector<1x128x128xf32> to vector<128x128xf32>
      %21 = vector.extract_strided_slice %11 {offsets = [0, 256], sizes = [128, 128], strides = [1, 1]} : vector<128x512xf32> to vector<128x128xf32>
      %22 = arith.addf %20, %21 : vector<128x128xf32>
      %c2 = arith.constant 2 : index
      %c0_12 = arith.constant 0 : index
      %c0_13 = arith.constant 0 : index
      %23 = vector.load %arg6[%c2, %c0_12, %c0_13] : memref<3x128x128xf32, #tpu.memory_space<vmem>>, vector<1x128x128xf32>
      %24 = vector.shape_cast %23 : vector<1x128x128xf32> to vector<128x128xf32>
      %25 = vector.extract_strided_slice %11 {offsets = [0, 384], sizes = [128, 128], strides = [1, 1]} : vector<128x512xf32> to vector<128x128xf32>
      %26 = arith.addf %24, %25 : vector<128x128xf32>
      %27 = tpu.concatenate %18, %22, %26 in 0 : vector<128x128xf32>, vector<128x128xf32>, vector<128x128xf32> -> vector<384x128xf32>
      %28 = arith.truncf %27 : vector<384x128xf32> to vector<384x128xbf16>
      %c0_14 = arith.constant 0 : index
      %c0_15 = arith.constant 0 : index
      %29 = vector.load %arg13[%c0_14, %c0_15] : memref<128x128xbf16, #tpu.memory_space<vmem>>, vector<128x128xbf16>
      %cst = arith.constant dense<0.000000e+00> : vector<384x128xf32>
      %30 = tpu.matmul %28, %29, %cst {dimension_numbers = #tpu.dot_dimension_numbers<[1], [0], [0], [1], [0, 0, 1, 1], [], []>} : vector<384x128xbf16>, vector<128x128xbf16>, vector<384x128xf32> -> vector<384x128xf32>
      %31 = arith.truncf %30 : vector<384x128xf32> to vector<384x128xbf16>
      %c0_16 = arith.constant 0 : index
      %c0_17 = arith.constant 0 : index
      %32 = vector.load %arg14[%c0_16, %c0_17] : memref<128x128xbf16, #tpu.memory_space<vmem>>, vector<128x128xbf16>
      %cst_18 = arith.constant dense<0.000000e+00> : vector<384x128xf32>
      %33 = tpu.matmul %31, %32, %cst_18 {dimension_numbers = #tpu.dot_dimension_numbers<[1], [0], [0], [1], [0, 0, 1, 1], [], []>} : vector<384x128xbf16>, vector<128x128xbf16>, vector<384x128xf32> -> vector<384x128xf32>
      %34 = vector.extract_strided_slice %30 {offsets = [0, 0], sizes = [128, 128], strides = [1, 1]} : vector<384x128xf32> to vector<128x128xf32>
      %35 = vector.extract_strided_slice %30 {offsets = [128, 0], sizes = [128, 128], strides = [1, 1]} : vector<384x128xf32> to vector<128x128xf32>
      %36 = vector.extract_strided_slice %30 {offsets = [256, 0], sizes = [128, 128], strides = [1, 1]} : vector<384x128xf32> to vector<128x128xf32>
      %37 = vector.extract_strided_slice %33 {offsets = [0, 0], sizes = [128, 128], strides = [1, 1]} : vector<384x128xf32> to vector<128x128xf32>
      %38 = vector.extract_strided_slice %33 {offsets = [128, 0], sizes = [128, 128], strides = [1, 1]} : vector<384x128xf32> to vector<128x128xf32>
      %39 = vector.extract_strided_slice %33 {offsets = [256, 0], sizes = [128, 128], strides = [1, 1]} : vector<384x128xf32> to vector<128x128xf32>
      %40 = arith.mulf %34, %34 : vector<128x128xf32>
      %41 = arith.mulf %35, %35 : vector<128x128xf32>
      %42 = arith.addf %40, %41 : vector<128x128xf32>
      %43 = arith.mulf %36, %36 : vector<128x128xf32>
      %44 = arith.addf %42, %43 : vector<128x128xf32>
      %45 = math.sqrt %44 : vector<128x128xf32>
      %46 = arith.truncf %45 : vector<128x128xf32> to vector<128x128xbf16>
      %c0_19 = arith.constant 0 : index
      %c0_20 = arith.constant 0 : index
      %47 = vector.load %arg15[%c0_19, %c0_20] : memref<128x128xbf16, #tpu.memory_space<vmem>>, vector<128x128xbf16>
      %cst_21 = arith.constant dense<0.000000e+00> : vector<128x128xf32>
      %48 = tpu.matmul %46, %47, %cst_21 {dimension_numbers = #tpu.dot_dimension_numbers<[1], [0], [0], [1], [0, 0, 1, 1], [], []>} : vector<128x128xbf16>, vector<128x128xbf16>, vector<128x128xf32> -> vector<128x128xf32>
      %49 = arith.truncf %14 : vector<128x128xf32> to vector<128x128xbf16>
      %c0_22 = arith.constant 0 : index
      %c0_23 = arith.constant 0 : index
      %50 = vector.load %arg16[%c0_22, %c0_23] : memref<128x128xbf16, #tpu.memory_space<vmem>>, vector<128x128xbf16>
      %cst_24 = arith.constant dense<0.000000e+00> : vector<128x128xf32>
      %51 = tpu.matmul %49, %50, %cst_24 {dimension_numbers = #tpu.dot_dimension_numbers<[1], [0], [0], [1], [0, 0, 1, 1], [], []>} : vector<128x128xbf16>, vector<128x128xbf16>, vector<128x128xf32> -> vector<128x128xf32>
      %52 = arith.addf %48, %51 : vector<128x128xf32>
      %c0_25 = arith.constant 0 : index
      %c0_26 = arith.constant 0 : index
      %53 = vector.load %arg17[%c0_25, %c0_26] : memref<1x128xf32, #tpu.memory_space<vmem>>, vector<1x128xf32>
      %54 = vector.broadcast %53 : vector<1x128xf32> to vector<128x128xf32>
      %55 = arith.addf %52, %54 : vector<128x128xf32>
      %56 = arith.negf %55 : vector<128x128xf32>
      %57 = math.exp %56 : vector<128x128xf32>
      %cst_27 = arith.constant 1.000000e+00 : f32
      %58 = vector.broadcast %cst_27 : f32 to vector<128x128xf32>
      %59 = arith.addf %58, %57 : vector<128x128xf32>
      %60 = arith.divf %58, %59 : vector<128x128xf32>
      %61 = arith.mulf %55, %60 : vector<128x128xf32>
      %62 = arith.truncf %61 : vector<128x128xf32> to vector<128x128xbf16>
      %c0_28 = arith.constant 0 : index
      %c0_29 = arith.constant 0 : index
      %63 = vector.load %arg18[%c0_28, %c0_29] : memref<128x384xbf16, #tpu.memory_space<vmem>>, vector<128x384xbf16>
      %cst_30 = arith.constant dense<0.000000e+00> : vector<128x384xf32>
      %64 = tpu.matmul %62, %63, %cst_30 {dimension_numbers = #tpu.dot_dimension_numbers<[1], [0], [0], [1], [0, 0, 1, 1], [], []>} : vector<128x128xbf16>, vector<128x384xbf16>, vector<128x384xf32> -> vector<128x384xf32>
      %c0_31 = arith.constant 0 : index
      %c0_32 = arith.constant 0 : index
      %65 = vector.load %arg19[%c0_31, %c0_32] : memref<1x384xf32, #tpu.memory_space<vmem>>, vector<1x384xf32>
      %66 = vector.broadcast %65 : vector<1x384xf32> to vector<128x384xf32>
      %67 = arith.addf %64, %66 : vector<128x384xf32>
      %68 = vector.extract_strided_slice %67 {offsets = [0, 0], sizes = [128, 128], strides = [1, 1]} : vector<128x384xf32> to vector<128x128xf32>
      %69 = vector.extract_strided_slice %67 {offsets = [0, 128], sizes = [128, 128], strides = [1, 1]} : vector<128x384xf32> to vector<128x128xf32>
      %70 = vector.extract_strided_slice %67 {offsets = [0, 256], sizes = [128, 128], strides = [1, 1]} : vector<128x384xf32> to vector<128x128xf32>
      %71 = arith.mulf %37, %68 : vector<128x128xf32>
      %72 = arith.addf %18, %71 : vector<128x128xf32>
      %c0_33 = arith.constant 0 : index
      %c0_34 = arith.constant 0 : index
      %c0_35 = arith.constant 0 : index
      %73 = vector.load %arg21[%c0_33, %c0_34, %c0_35] : memref<3x128x128xf32, #tpu.memory_space<vmem>>, vector<1x128x128xf32>
      %74 = vector.shape_cast %73 : vector<1x128x128xf32> to vector<128x128xf32>
      %75 = vector.shape_cast %72 : vector<128x128xf32> to vector<1x128x128xf32>
      tpu.vector_store %arg21[%c0_33, %c0_34, %c0_35], %75 {strides = array<i32>} : memref<3x128x128xf32, #tpu.memory_space<vmem>>, vector<1x128x128xf32>,
      %76 = arith.mulf %38, %68 : vector<128x128xf32>
      %77 = arith.addf %22, %76 : vector<128x128xf32>
      %c1_36 = arith.constant 1 : index
      %c0_37 = arith.constant 0 : index
      %c0_38 = arith.constant 0 : index
      %78 = vector.load %arg21[%c1_36, %c0_37, %c0_38] : memref<3x128x128xf32, #tpu.memory_space<vmem>>, vector<1x128x128xf32>
      %79 = vector.shape_cast %78 : vector<1x128x128xf32> to vector<128x128xf32>
      %80 = vector.shape_cast %77 : vector<128x128xf32> to vector<1x128x128xf32>
      tpu.vector_store %arg21[%c1_36, %c0_37, %c0_38], %80 {strides = array<i32>} : memref<3x128x128xf32, #tpu.memory_space<vmem>>, vector<1x128x128xf32>,
      %81 = arith.mulf %39, %68 : vector<128x128xf32>
      %82 = arith.addf %26, %81 : vector<128x128xf32>
      %c2_39 = arith.constant 2 : index
      %c0_40 = arith.constant 0 : index
      %c0_41 = arith.constant 0 : index
      %83 = vector.load %arg21[%c2_39, %c0_40, %c0_41] : memref<3x128x128xf32, #tpu.memory_space<vmem>>, vector<1x128x128xf32>
      %84 = vector.shape_cast %83 : vector<1x128x128xf32> to vector<128x128xf32>
      %85 = vector.shape_cast %82 : vector<128x128xf32> to vector<1x128x128xf32>
      tpu.vector_store %arg21[%c2_39, %c0_40, %c0_41], %85 {strides = array<i32>} : memref<3x128x128xf32, #tpu.memory_space<vmem>>, vector<1x128x128xf32>,
      %86 = arith.mulf %37, %34 : vector<128x128xf32>
      %87 = arith.mulf %38, %35 : vector<128x128xf32>
      %88 = arith.addf %86, %87 : vector<128x128xf32>
      %89 = arith.mulf %39, %36 : vector<128x128xf32>
      %90 = arith.addf %88, %89 : vector<128x128xf32>
      %91 = arith.mulf %90, %69 : vector<128x128xf32>
      %92 = arith.addf %14, %91 : vector<128x128xf32>
      %93 = arith.addf %92, %70 : vector<128x128xf32>
      %c0_42 = arith.constant 0 : index
      %c0_43 = arith.constant 0 : index
      %94 = vector.load %arg20[%c0_42, %c0_43] : memref<128x128xf32, #tpu.memory_space<vmem>>, vector<128x128xf32>
      tpu.vector_store %arg20[%c0_42, %c0_43], %93 {strides = array<i32>} : memref<128x128xf32, #tpu.memory_space<vmem>>, vector<128x128xf32>,
    } else {
    }
    return
  }
  func.func @transform_0(%arg0: i32, %arg1: i32, %arg2: memref<1xi32, #tpu.memory_space<smem>>) -> (i32, i32, i32) {
    %c0_i32 = arith.constant 0 : i32
    %c0_i32_0 = arith.constant 0 : i32
    return %arg0, %c0_i32, %arg1 : i32, i32, i32
  }
  func.func @transform_1(%arg0: i32, %arg1: i32, %arg2: memref<1xi32, #tpu.memory_space<smem>>) -> (i32, i32, i32) {
    %c0_i32 = arith.constant 0 : i32
    %c0_i32_0 = arith.constant 0 : i32
    return %arg0, %arg1, %c0_i32 : i32, i32, i32
  }
  func.func @transform_2(%arg0: i32, %arg1: i32, %arg2: memref<1xi32, #tpu.memory_space<smem>>) -> (i32, i32) {
    %c0_i32 = arith.constant 0 : i32
    %c0_i32_0 = arith.constant 0 : i32
    return %arg0, %c0_i32 : i32, i32
  }
  func.func @transform_3(%arg0: i32, %arg1: i32, %arg2: memref<1xi32, #tpu.memory_space<smem>>) -> (i32, i32, i32) {
    %c0_i32 = arith.constant 0 : i32
    %c0_i32_0 = arith.constant 0 : i32
    %c0_i32_1 = arith.constant 0 : i32
    return %c0_i32, %arg0, %c0_i32_0 : i32, i32, i32
  }
  func.func @transform_4(%arg0: i32, %arg1: i32, %arg2: memref<1xi32, #tpu.memory_space<smem>>) -> (i32, i32) {
    %c0_i32 = arith.constant 0 : i32
    %c0_i32_0 = arith.constant 0 : i32
    %c0_i32_1 = arith.constant 0 : i32
    return %c0_i32, %c0_i32_0 : i32, i32
  }
  func.func @transform_5(%arg0: i32, %arg1: i32, %arg2: memref<1xi32, #tpu.memory_space<smem>>) -> (i32, i32) {
    %c0_i32 = arith.constant 0 : i32
    %c0_i32_0 = arith.constant 0 : i32
    %c0_i32_1 = arith.constant 0 : i32
    return %c0_i32, %c0_i32_0 : i32, i32
  }
  func.func @transform_6(%arg0: i32, %arg1: i32, %arg2: memref<1xi32, #tpu.memory_space<smem>>) -> (i32, i32) {
    %c0_i32 = arith.constant 0 : i32
    %c0_i32_0 = arith.constant 0 : i32
    %c0_i32_1 = arith.constant 0 : i32
    return %c0_i32, %c0_i32_0 : i32, i32
  }
  func.func @transform_7(%arg0: i32, %arg1: i32, %arg2: memref<1xi32, #tpu.memory_space<smem>>) -> (i32, i32) {
    %c0_i32 = arith.constant 0 : i32
    %c0_i32_0 = arith.constant 0 : i32
    %c0_i32_1 = arith.constant 0 : i32
    return %c0_i32, %c0_i32_0 : i32, i32
  }
  func.func @transform_8(%arg0: i32, %arg1: i32, %arg2: memref<1xi32, #tpu.memory_space<smem>>) -> (i32, i32) {
    %c0_i32 = arith.constant 0 : i32
    %c0_i32_0 = arith.constant 0 : i32
    %c0_i32_1 = arith.constant 0 : i32
    return %c0_i32, %c0_i32_0 : i32, i32
  }
  func.func @transform_9(%arg0: i32, %arg1: i32, %arg2: memref<1xi32, #tpu.memory_space<smem>>) -> (i32, i32) {
    %c0_i32 = arith.constant 0 : i32
    %c0_i32_0 = arith.constant 0 : i32
    %c0_i32_1 = arith.constant 0 : i32
    return %c0_i32, %c0_i32_0 : i32, i32
  }
  func.func @transform_10(%arg0: i32, %arg1: i32, %arg2: memref<1xi32, #tpu.memory_space<smem>>) -> (i32, i32) {
    %c0_i32 = arith.constant 0 : i32
    %c0_i32_0 = arith.constant 0 : i32
    %c0_i32_1 = arith.constant 0 : i32
    return %c0_i32, %c0_i32_0 : i32, i32
  }
  func.func @transform_11(%arg0: i32, %arg1: i32, %arg2: memref<1xi32, #tpu.memory_space<smem>>) -> (i32, i32) {
    %c0_i32 = arith.constant 0 : i32
    %c0_i32_0 = arith.constant 0 : i32
    %c0_i32_1 = arith.constant 0 : i32
    return %c0_i32, %c0_i32_0 : i32, i32
  }
  func.func @transform_12(%arg0: i32, %arg1: i32, %arg2: memref<1xi32, #tpu.memory_space<smem>>) -> (i32, i32) {
    %c0_i32 = arith.constant 0 : i32
    %c0_i32_0 = arith.constant 0 : i32
    %c0_i32_1 = arith.constant 0 : i32
    return %c0_i32, %c0_i32_0 : i32, i32
  }
  func.func @transform_13(%arg0: i32, %arg1: i32, %arg2: memref<1xi32, #tpu.memory_space<smem>>) -> (i32, i32) {
    %c0_i32 = arith.constant 0 : i32
    %c0_i32_0 = arith.constant 0 : i32
    %c0_i32_1 = arith.constant 0 : i32
    return %c0_i32, %c0_i32_0 : i32, i32
  }
  func.func @transform_14(%arg0: i32, %arg1: i32, %arg2: memref<1xi32, #tpu.memory_space<smem>>) -> (i32, i32) {
    %c0_i32 = arith.constant 0 : i32
    %c0_i32_0 = arith.constant 0 : i32
    %c0_i32_1 = arith.constant 0 : i32
    return %c0_i32, %c0_i32_0 : i32, i32
  }
  func.func @transform_15(%arg0: i32, %arg1: i32, %arg2: memref<1xi32, #tpu.memory_space<smem>>) -> (i32, i32) {
    %c0_i32 = arith.constant 0 : i32
    %c0_i32_0 = arith.constant 0 : i32
    %c0_i32_1 = arith.constant 0 : i32
    return %c0_i32, %c0_i32_0 : i32, i32
  }
  func.func @transform_16(%arg0: i32, %arg1: i32, %arg2: memref<1xi32, #tpu.memory_space<smem>>) -> (i32, i32) {
    %c0_i32 = arith.constant 0 : i32
    %c0_i32_0 = arith.constant 0 : i32
    %c0_i32_1 = arith.constant 0 : i32
    return %c0_i32, %c0_i32_0 : i32, i32
  }
  func.func @transform_17(%arg0: i32, %arg1: i32, %arg2: memref<1xi32, #tpu.memory_space<smem>>) -> (i32, i32) {
    %c0_i32 = arith.constant 0 : i32
    %c0_i32_0 = arith.constant 0 : i32
    return %arg0, %c0_i32 : i32, i32
  }
  func.func @transform_18(%arg0: i32, %arg1: i32, %arg2: memref<1xi32, #tpu.memory_space<smem>>) -> (i32, i32, i32) {
    %c0_i32 = arith.constant 0 : i32
    %c0_i32_0 = arith.constant 0 : i32
    %c0_i32_1 = arith.constant 0 : i32
    return %c0_i32, %arg0, %c0_i32_0 : i32, i32, i32
  }
}

</mosaic_0001>

<llo_original>
// kernel: tpu_custom_call.1
$region0: #{tpu_custom_call.1}
  #allocation0 [shape = 'u32[]', space=smem, size = 0x4, offset = 0x4, fixed_abs, tag = 'smem constant byte address 0x4 - core index']
  #allocation1 [shape = 'u32[144,128]{1,0:T(1,128)}', space=vmem, size = 0x12000, scoped, tag = 'internal scratch']
  #allocation2 [shape = 'f32[128,512]{1,0:T(8,128)}', space=vmem, size = 0x40000, scoped, tag = 'scratch operand']
  #allocation3 [shape = 's32[1]{0}', space=sflag, size = 0x4, scoped, tag = 'scoped memory for tpu_custom_call.1']
  #allocation4 [shape = 's32[1]{0:T(128)S(6)}', space=smem, size = 0x200, scoped, tag = 'prefetched SMEM operand 0']
  %s0 = inlined_call_operand.<no memory space> [shape: s32[1], index: 0, kind: input, shape index: {}]
  %s1 = inlined_call_operand.hbm [shape: s32[1,1,128], index: 1, kind: input, shape index: {}]
  %s2 = inlined_call_operand.vmem [shape: f32[1,128,32], index: 2, kind: input, shape index: {}]
  %s3 = inlined_call_operand.vmem [shape: f32[128,128], index: 3, kind: input, shape index: {}]
  %s4 = inlined_call_operand.hbm [shape: f32[3,128,128], index: 4, kind: input, shape index: {}]
  %s5 = inlined_call_operand.hbm [shape: bf16[128,128], index: 5, kind: input, shape index: {}]
  %s6 = inlined_call_operand.hbm [shape: f32[1,128], index: 6, kind: input, shape index: {}]
  %s7 = inlined_call_operand.hbm [shape: bf16[128,384], index: 7, kind: input, shape index: {}]
  %s8 = inlined_call_operand.hbm [shape: f32[1,384], index: 8, kind: input, shape index: {}]
  %s9 = inlined_call_operand.vmem [shape: bf16[32,384], index: 9, kind: input, shape index: {}]
  %s10 = inlined_call_operand.hbm [shape: f32[1,384], index: 10, kind: input, shape index: {}]
  %s11 = inlined_call_operand.hbm [shape: bf16[128,128], index: 11, kind: input, shape index: {}]
  %s12 = inlined_call_operand.hbm [shape: bf16[128,128], index: 12, kind: input, shape index: {}]
  %s13 = inlined_call_operand.hbm [shape: bf16[128,128], index: 13, kind: input, shape index: {}]
  %s14 = inlined_call_operand.hbm [shape: bf16[128,128], index: 14, kind: input, shape index: {}]
  %s15 = inlined_call_operand.vmem [shape: f32[1,128], index: 15, kind: input, shape index: {}]
  %s16 = inlined_call_operand.hbm [shape: bf16[128,384], index: 16, kind: input, shape index: {}]
  %s17 = inlined_call_operand.vmem [shape: f32[1,384], index: 17, kind: input, shape index: {}]
  %s18 = inlined_call_operand.hbm [shape: f32[128,128], index: 18, kind: output, shape index: {0}]
  %s19 = inlined_call_operand.hbm [shape: f32[3,128,128], index: 19, kind: output, shape index: {1}]
  %20 = xla_tuple %s18, %s19
  %s21 = sld [smem:[#allocation0]]
  $region146: #{tpu_custom_call.1} parent=0
    _
  %s23 = ssub.s32 1, %s21
  %s24 = scalar_select 0, %s23, %s21
  %25 = sst [smem:[#allocation4]] %s0
  $region1: #{tpu_custom_call.1} parent=0
    #allocation5 [shape = 'u8[512]{0}', space=vmem, size = 0x400, scoped, tag = 'input window, operand 1, single buffered']
    #allocation6 [shape = 's32[1]{0}', space=sflag, size = 0x4, scoped, tag = 'scoped memory for tpu_custom_call.1']
    #allocation7 [shape = 's32[1]{0}', space=sflag, size = 0x4, scoped, tag = 'scoped memory for tpu_custom_call.1']
    #allocation8 [shape = 'u8[196608]{0}', space=vmem, size = 0x30000, scoped, tag = 'input window, operand 4, single buffered']
    #allocation9 [shape = 's32[1]{0}', space=sflag, size = 0x4, scoped, tag = 'scoped memory for tpu_custom_call.1']
    #allocation10 [shape = 'u8[32768]{0}', space=vmem, size = 0x8000, scoped, tag = 'input window, operand 5, single buffered']
    #allocation11 [shape = 'u8[512]{0}', space=vmem, size = 0x400, scoped, tag = 'input window, operand 6, single buffered']
    #allocation12 [shape = 's32[1]{0}', space=sflag, size = 0x4, scoped, tag = 'scoped memory for tpu_custom_call.1']
    #allocation13 [shape = 'u8[98304]{0}', space=vmem, size = 0x18000, scoped, tag = 'input window, operand 7, single buffered']
    #allocation14 [shape = 'u8[1536]{0}', space=vmem, size = 0x800, scoped, tag = 'input window, operand 8, single buffered']
    #allocation15 [shape = 's32[1]{0}', space=sflag, size = 0x4, scoped, tag = 'scoped memory for tpu_custom_call.1']
    #allocation16 [shape = 'u8[1536]{0}', space=vmem, size = 0x800, scoped, tag = 'input window, operand 10, single buffered']
    #allocation17 [shape = 'u8[32768]{0}', space=vmem, size = 0x8000, scoped, tag = 'input window, operand 11, single buffered']
    #allocation18 [shape = 's32[1]{0}', space=sflag, size = 0x4, scoped, tag = 'scoped memory for tpu_custom_call.1']
    #allocation19 [shape = 'u8[32768]{0}', space=vmem, size = 0x8000, scoped, tag = 'input window, operand 12, single buffered']
    #allocation20 [shape = 'u8[32768]{0}', space=vmem, size = 0x8000, scoped, tag = 'input window, operand 13, single buffered']
    #allocation21 [shape = 's32[1]{0}', space=sflag, size = 0x4, scoped, tag = 'scoped memory for tpu_custom_call.1']
    #allocation22 [shape = 'u8[32768]{0}', space=vmem, size = 0x8000, scoped, tag = 'input window, operand 14, single buffered']
    #allocation23 [shape = 'u8[98304]{0}', space=vmem, size = 0x18000, scoped, tag = 'input window, operand 16, single buffered']
    #allocation24 [shape = 's32[1]{0}', space=sflag, size = 0x4, scoped, tag = 'scoped memory for tpu_custom_call.1']
    #allocation25 [shape = 'u8[65536]{0}', space=vmem, size = 0x10000, scoped, tag = 'output window, operand 0, single buffered']
    #allocation26 [shape = 'u8[196608]{0}', space=vmem, size = 0x30000, scoped, tag = 'output window, operand 1, single buffered']
    #allocation27 [shape = 's32[1]{0}', space=sflag, size = 0x4, scoped, tag = 'scoped memory for tpu_custom_call.1']
    %26 = vsyncpa [#allocation6], 0
    %27 = vsyncpa [#allocation9], 0
    %28 = vsyncpa [#allocation12], 0
    %29 = vsyncpa [#allocation15], 0
    %30 = vsyncpa [#allocation18], 0
    %31 = vsyncpa [#allocation21], 0
    %32 = vsyncpa [#allocation24], 0
    %33 = vsyncpa [#allocation7], 0
    %34 = vsyncpa [#allocation27], 0
    // Predicated region
    $region2: #{tpu_custom_call.1} parent=1 // pred_check
      _
    $region3: #{tpu_custom_call.1} parent=1 // pred_check_branch
      %36 = sbr.rel (0) target = $region5
    $region4: #{tpu_custom_call.1} parent=1 // pred_region
      %s38 = ssub.s32 16, 16
      %39 = vsyncadd [#allocation6], %s38
      %s41 = sshll.u32 [#allocation5], 4
      %s42 = int_to_ptr.vmem [resolvable:$true] %s41
      %44 = dma.hbm_to_vmem [thread:$0]  %s1, 16, %s42, [#allocation6]
    $region5: #{tpu_custom_call.1} parent=1 // pred_fallthru
      _
    // Predicated region
    $region6: #{tpu_custom_call.1} parent=1 // pred_check
      _
    $region7: #{tpu_custom_call.1} parent=1 // pred_check_branch
      %46 = sbr.rel (0) target = $region9
    $region8: #{tpu_custom_call.1} parent=1 // pred_region
      _
    $region9: #{tpu_custom_call.1} parent=1 // pred_fallthru
      _
    // Predicated region
    $region10: #{tpu_custom_call.1} parent=1 // pred_check
      _
    $region11: #{tpu_custom_call.1} parent=1 // pred_check_branch
      %48 = sbr.rel (0) target = $region13
    $region12: #{tpu_custom_call.1} parent=1 // pred_region
      _
    $region13: #{tpu_custom_call.1} parent=1 // pred_fallthru
      _
    // Predicated region
    $region14: #{tpu_custom_call.1} parent=1 // pred_check
      _
    $region15: #{tpu_custom_call.1} parent=1 // pred_check_branch
      %50 = sbr.rel (0) target = $region17
    $region16: #{tpu_custom_call.1} parent=1 // pred_region
      %s52 = ssub.s32 6144, 6144
      %53 = vsyncadd [#allocation9], %s52
      %s54 = sshll.u32 [#allocation8], 4
      %s55 = int_to_ptr.vmem [resolvable:$true] %s54
      %60 = dma.hbm_to_vmem [thread:$0]  %s4, 6144, %s55, [#allocation9], 128, 128, 8
    $region17: #{tpu_custom_call.1} parent=1 // pred_fallthru
      _
    // Predicated region
    $region18: #{tpu_custom_call.1} parent=1 // pred_check
      _
    $region19: #{tpu_custom_call.1} parent=1 // pred_check_branch
      %62 = sbr.rel (0) target = $region21
    $region20: #{tpu_custom_call.1} parent=1 // pred_region
      %s64 = ssub.s32 1024, 1024
      %65 = vsyncadd [#allocation9], %s64
      %s66 = sshll.u32 [#allocation10], 4
      %s67 = int_to_ptr.vmem [resolvable:$true] %s66
      %72 = dma.hbm_to_vmem [thread:$0]  %s5, 1024, %s67, [#allocation9], 64, 64, 4
    $region21: #{tpu_custom_call.1} parent=1 // pred_fallthru
      _
    // Predicated region
    $region22: #{tpu_custom_call.1} parent=1 // pred_check
      _
    $region23: #{tpu_custom_call.1} parent=1 // pred_check_branch
      %74 = sbr.rel (0) target = $region25
    $region24: #{tpu_custom_call.1} parent=1 // pred_region
      %s76 = ssub.s32 16, 16
      %77 = vsyncadd [#allocation12], %s76
      %s79 = sshll.u32 [#allocation11], 4
      %s80 = int_to_ptr.vmem [resolvable:$true] %s79
      %82 = dma.hbm_to_vmem [thread:$0]  %s6, 16, %s80, [#allocation12]
    $region25: #{tpu_custom_call.1} parent=1 // pred_fallthru
      _
    // Predicated region
    $region26: #{tpu_custom_call.1} parent=1 // pred_check
      _
    $region27: #{tpu_custom_call.1} parent=1 // pred_check_branch
      %84 = sbr.rel (0) target = $region29
    $region28: #{tpu_custom_call.1} parent=1 // pred_region
      %s86 = ssub.s32 3072, 3072
      %87 = vsyncadd [#allocation12], %s86
      %s88 = sshll.u32 [#allocation13], 4
      %s89 = int_to_ptr.vmem [resolvable:$true] %s88
      %94 = dma.hbm_to_vmem [thread:$0]  %s7, 3072, %s89, [#allocation12], 192, 192, 12
    $region29: #{tpu_custom_call.1} parent=1 // pred_fallthru
      _
    // Predicated region
    $region30: #{tpu_custom_call.1} parent=1 // pred_check
      _
    $region31: #{tpu_custom_call.1} parent=1 // pred_check_branch
      %96 = sbr.rel (0) target = $region33
    $region32: #{tpu_custom_call.1} parent=1 // pred_region
      %s98 = ssub.s32 48, 48
      %99 = vsyncadd [#allocation15], %s98
      %s101 = sshll.u32 [#allocation14], 4
      %s102 = int_to_ptr.vmem [resolvable:$true] %s101
      %104 = dma.hbm_to_vmem [thread:$0]  %s8, 48, %s102, [#allocation15]
    $region33: #{tpu_custom_call.1} parent=1 // pred_fallthru
      _
    // Predicated region
    $region34: #{tpu_custom_call.1} parent=1 // pred_check
      _
    $region35: #{tpu_custom_call.1} parent=1 // pred_check_branch
      %106 = sbr.rel (0) target = $region37
    $region36: #{tpu_custom_call.1} parent=1 // pred_region
      _
    $region37: #{tpu_custom_call.1} parent=1 // pred_fallthru
      _
    // Predicated region
    $region38: #{tpu_custom_call.1} parent=1 // pred_check
      _
    $region39: #{tpu_custom_call.1} parent=1 // pred_check_branch
      %108 = sbr.rel (0) target = $region41
    $region40: #{tpu_custom_call.1} parent=1 // pred_region
      %s110 = ssub.s32 48, 48
      %111 = vsyncadd [#allocation15], %s110
      %s113 = sshll.u32 [#allocation16], 4
      %s114 = int_to_ptr.vmem [resolvable:$true] %s113
      %116 = dma.hbm_to_vmem [thread:$0]  %s10, 48, %s114, [#allocation15]
    $region41: #{tpu_custom_call.1} parent=1 // pred_fallthru
      _
    // Predicated region
    $region42: #{tpu_custom_call.1} parent=1 // pred_check
      _
    $region43: #{tpu_custom_call.1} parent=1 // pred_check_branch
      %118 = sbr.rel (0) target = $region45
    $region44: #{tpu_custom_call.1} parent=1 // pred_region
      %s120 = ssub.s32 1024, 1024
      %121 = vsyncadd [#allocation18], %s120
      %s122 = sshll.u32 [#allocation17], 4
      %s123 = int_to_ptr.vmem [resolvable:$true] %s122
      %128 = dma.hbm_to_vmem [thread:$0]  %s11, 1024, %s123, [#allocation18], 64, 64, 4
    $region45: #{tpu_custom_call.1} parent=1 // pred_fallthru
      _
    // Predicated region
    $region46: #{tpu_custom_call.1} parent=1 // pred_check
      _
    $region47: #{tpu_custom_call.1} parent=1 // pred_check_branch
      %130 = sbr.rel (0) target = $region49
    $region48: #{tpu_custom_call.1} parent=1 // pred_region
      %s132 = ssub.s32 1024, 1024
      %133 = vsyncadd [#allocation18], %s132
      %s134 = sshll.u32 [#allocation19], 4
      %s135 = int_to_ptr.vmem [resolvable:$true] %s134
      %140 = dma.hbm_to_vmem [thread:$0]  %s12, 1024, %s135, [#allocation18], 64, 64, 4
    $region49: #{tpu_custom_call.1} parent=1 // pred_fallthru
      _
    // Predicated region
    $region50: #{tpu_custom_call.1} parent=1 // pred_check
      _
    $region51: #{tpu_custom_call.1} parent=1 // pred_check_branch
      %142 = sbr.rel (0) target = $region53
    $region52: #{tpu_custom_call.1} parent=1 // pred_region
      %s144 = ssub.s32 1024, 1024
      %145 = vsyncadd [#allocation21], %s144
      %s146 = sshll.u32 [#allocation20], 4
      %s147 = int_to_ptr.vmem [resolvable:$true] %s146
      %152 = dma.hbm_to_vmem [thread:$0]  %s13, 1024, %s147, [#allocation21], 64, 64, 4
    $region53: #{tpu_custom_call.1} parent=1 // pred_fallthru
      _
    // Predicated region
    $region54: #{tpu_custom_call.1} parent=1 // pred_check
      _
    $region55: #{tpu_custom_call.1} parent=1 // pred_check_branch
      %154 = sbr.rel (0) target = $region57
    $region56: #{tpu_custom_call.1} parent=1 // pred_region
      %s156 = ssub.s32 1024, 1024
      %157 = vsyncadd [#allocation21], %s156
      %s158 = sshll.u32 [#allocation22], 4
      %s159 = int_to_ptr.vmem [resolvable:$true] %s158
      %164 = dma.hbm_to_vmem [thread:$0]  %s14, 1024, %s159, [#allocation21], 64, 64, 4
    $region57: #{tpu_custom_call.1} parent=1 // pred_fallthru
      _
    // Predicated region
    $region58: #{tpu_custom_call.1} parent=1 // pred_check
      _
    $region59: #{tpu_custom_call.1} parent=1 // pred_check_branch
      %166 = sbr.rel (0) target = $region61
    $region60: #{tpu_custom_call.1} parent=1 // pred_region
      _
    $region61: #{tpu_custom_call.1} parent=1 // pred_fallthru
      _
    // Predicated region
    $region62: #{tpu_custom_call.1} parent=1 // pred_check
      _
    $region63: #{tpu_custom_call.1} parent=1 // pred_check_branch
      %168 = sbr.rel (0) target = $region65
    $region64: #{tpu_custom_call.1} parent=1 // pred_region
      %s170 = ssub.s32 3072, 3072
      %171 = vsyncadd [#allocation24], %s170
      %s172 = sshll.u32 [#allocation23], 4
      %s173 = int_to_ptr.vmem [resolvable:$true] %s172
      %178 = dma.hbm_to_vmem [thread:$0]  %s16, 3072, %s173, [#allocation24], 192, 192, 12
    $region65: #{tpu_custom_call.1} parent=1 // pred_fallthru
      _
    // Predicated region
    $region66: #{tpu_custom_call.1} parent=1 // pred_check
      _
    $region67: #{tpu_custom_call.1} parent=1 // pred_check_branch
      %180 = sbr.rel (0) target = $region69
    $region68: #{tpu_custom_call.1} parent=1 // pred_region
      _
    $region69: #{tpu_custom_call.1} parent=1 // pred_fallthru
      _
    // Predicated region
    $region70: #{tpu_custom_call.1} parent=1 // pred_check
      _
    $region71: #{tpu_custom_call.1} parent=1 // pred_check_branch
      %182 = sbr.rel (0) target = $region73
    $region72: #{tpu_custom_call.1} parent=1 // pred_region
      %183 = dma.done [#allocation6], 16
    $region73: #{tpu_custom_call.1} parent=1 // pred_fallthru
      _
    // Predicated region
    $region74: #{tpu_custom_call.1} parent=1 // pred_check
      _
    $region75: #{tpu_custom_call.1} parent=1 // pred_check_branch
      %185 = sbr.rel (0) target = $region77
    $region76: #{tpu_custom_call.1} parent=1 // pred_region
      %186 = dma.done [#allocation9], 6144
    $region77: #{tpu_custom_call.1} parent=1 // pred_fallthru
      _
    // Predicated region
    $region78: #{tpu_custom_call.1} parent=1 // pred_check
      _
    $region79: #{tpu_custom_call.1} parent=1 // pred_check_branch
      %188 = sbr.rel (0) target = $region81
    $region80: #{tpu_custom_call.1} parent=1 // pred_region
      %189 = dma.done [#allocation9], 1024
    $region81: #{tpu_custom_call.1} parent=1 // pred_fallthru
      _
    // Predicated region
    $region82: #{tpu_custom_call.1} parent=1 // pred_check
      _
    $region83: #{tpu_custom_call.1} parent=1 // pred_check_branch
      %191 = sbr.rel (0) target = $region85
    $region84: #{tpu_custom_call.1} parent=1 // pred_region
      %192 = dma.done [#allocation12], 16
    $region85: #{tpu_custom_call.1} parent=1 // pred_fallthru
      _
    // Predicated region
    $region86: #{tpu_custom_call.1} parent=1 // pred_check
      _
    $region87: #{tpu_custom_call.1} parent=1 // pred_check_branch
      %194 = sbr.rel (0) target = $region89
    $region88: #{tpu_custom_call.1} parent=1 // pred_region
      %195 = dma.done [#allocation12], 3072
    $region89: #{tpu_custom_call.1} parent=1 // pred_fallthru
      _
    // Predicated region
    $region90: #{tpu_custom_call.1} parent=1 // pred_check
      _
    $region91: #{tpu_custom_call.1} parent=1 // pred_check_branch
      %197 = sbr.rel (0) target = $region93
    $region92: #{tpu_custom_call.1} parent=1 // pred_region
      %198 = dma.done [#allocation15], 48
    $region93: #{tpu_custom_call.1} parent=1 // pred_fallthru
      _
    // Predicated region
    $region94: #{tpu_custom_call.1} parent=1 // pred_check
      _
    $region95: #{tpu_custom_call.1} parent=1 // pred_check_branch
      %200 = sbr.rel (0) target = $region97
    $region96: #{tpu_custom_call.1} parent=1 // pred_region
      %201 = dma.done [#allocation15], 48
    $region97: #{tpu_custom_call.1} parent=1 // pred_fallthru
      _
    // Predicated region
    $region98: #{tpu_custom_call.1} parent=1 // pred_check
      _
    $region99: #{tpu_custom_call.1} parent=1 // pred_check_branch
      %203 = sbr.rel (0) target = $region101
    $region100: #{tpu_custom_call.1} parent=1 // pred_region
      %204 = dma.done [#allocation18], 1024
    $region101: #{tpu_custom_call.1} parent=1 // pred_fallthru
      _
    // Predicated region
    $region102: #{tpu_custom_call.1} parent=1 // pred_check
      _
    $region103: #{tpu_custom_call.1} parent=1 // pred_check_branch
      %206 = sbr.rel (0) target = $region105
    $region104: #{tpu_custom_call.1} parent=1 // pred_region
      %207 = dma.done [#allocation18], 1024
    $region105: #{tpu_custom_call.1} parent=1 // pred_fallthru
      _
    // Predicated region
    $region106: #{tpu_custom_call.1} parent=1 // pred_check
      _
    $region107: #{tpu_custom_call.1} parent=1 // pred_check_branch
      %209 = sbr.rel (0) target = $region109
    $region108: #{tpu_custom_call.1} parent=1 // pred_region
      %210 = dma.done [#allocation21], 1024
    $region109: #{tpu_custom_call.1} parent=1 // pred_fallthru
      _
    // Predicated region
    $region110: #{tpu_custom_call.1} parent=1 // pred_check
      _
    $region111: #{tpu_custom_call.1} parent=1 // pred_check_branch
      %212 = sbr.rel (0) target = $region113
    $region112: #{tpu_custom_call.1} parent=1 // pred_region
      %213 = dma.done [#allocation21], 1024
    $region113: #{tpu_custom_call.1} parent=1 // pred_fallthru
      _
    // Predicated region
    $region114: #{tpu_custom_call.1} parent=1 // pred_check
      _
    $region115: #{tpu_custom_call.1} parent=1 // pred_check_branch
      %215 = sbr.rel (0) target = $region117
    $region116: #{tpu_custom_call.1} parent=1 // pred_region
      %216 = dma.done [#allocation24], 3072
    $region117: #{tpu_custom_call.1} parent=1 // pred_fallthru
      _
    %p218 = scmp.eq.s32.totalorder 0, 0
    // Predicated region
    $region118: #{tpu_custom_call.1} parent=1 // pred_check
      %p219 = pneg %p218
    $region119: #{tpu_custom_call.1} parent=1 // pred_check_branch
      %221 = sbr.rel (%p219) target = $region121
    $region120: #{tpu_custom_call.1} parent=1 // pred_region
      %222 = vst [vmem:[#allocation2] sm:$0xff] 0.0
      %223 = vst [vmem:[#allocation2 + $0x8] sm:$0xff] 0.0
      %224 = vst [vmem:[#allocation2 + $0x10] sm:$0xff] 0.0
      %225 = vst [vmem:[#allocation2 + $0x18] sm:$0xff] 0.0
      %226 = vst [vmem:[#allocation2 + $0x20] sm:$0xff] 0.0
      %227 = vst [vmem:[#allocation2 + $0x28] sm:$0xff] 0.0
      %228 = vst [vmem:[#allocation2 + $0x30] sm:$0xff] 0.0
      %229 = vst [vmem:[#allocation2 + $0x38] sm:$0xff] 0.0
      %230 = vst [vmem:[#allocation2 + $0x40] sm:$0xff] 0.0
      %231 = vst [vmem:[#allocation2 + $0x48] sm:$0xff] 0.0
      %232 = vst [vmem:[#allocation2 + $0x50] sm:$0xff] 0.0
      %233 = vst [vmem:[#allocation2 + $0x58] sm:$0xff] 0.0
      %234 = vst [vmem:[#allocation2 + $0x60] sm:$0xff] 0.0
      %235 = vst [vmem:[#allocation2 + $0x68] sm:$0xff] 0.0
      %236 = vst [vmem:[#allocation2 + $0x70] sm:$0xff] 0.0
      %237 = vst [vmem:[#allocation2 + $0x78] sm:$0xff] 0.0
      %238 = vst [vmem:[#allocation2 + $0x80] sm:$0xff] 0.0
      %239 = vst [vmem:[#allocation2 + $0x88] sm:$0xff] 0.0
      %240 = vst [vmem:[#allocation2 + $0x90] sm:$0xff] 0.0
      %241 = vst [vmem:[#allocation2 + $0x98] sm:$0xff] 0.0
      %242 = vst [vmem:[#allocation2 + $0xa0] sm:$0xff] 0.0
      %243 = vst [vmem:[#allocation2 + $0xa8] sm:$0xff] 0.0
      %244 = vst [vmem:[#allocation2 + $0xb0] sm:$0xff] 0.0
      %245 = vst [vmem:[#allocation2 + $0xb8] sm:$0xff] 0.0
      %246 = vst [vmem:[#allocation2 + $0xc0] sm:$0xff] 0.0
      %247 = vst [vmem:[#allocation2 + $0xc8] sm:$0xff] 0.0
      %248 = vst [vmem:[#allocation2 + $0xd0] sm:$0xff] 0.0
      %249 = vst [vmem:[#allocation2 + $0xd8] sm:$0xff] 0.0
      %250 = vst [vmem:[#allocation2 + $0xe0] sm:$0xff] 0.0
      %251 = vst [vmem:[#allocation2 + $0xe8] sm:$0xff] 0.0
      %252 = vst [vmem:[#allocation2 + $0xf0] sm:$0xff] 0.0
      %253 = vst [vmem:[#allocation2 + $0xf8] sm:$0xff] 0.0
      %254 = vst [vmem:[#allocation2 + $0x100] sm:$0xff] 0.0
      %255 = vst [vmem:[#allocation2 + $0x108] sm:$0xff] 0.0
      %256 = vst [vmem:[#allocation2 + $0x110] sm:$0xff] 0.0
      %257 = vst [vmem:[#allocation2 + $0x118] sm:$0xff] 0.0
      %258 = vst [vmem:[#allocation2 + $0x120] sm:$0xff] 0.0
      %259 = vst [vmem:[#allocation2 + $0x128] sm:$0xff] 0.0
      %260 = vst [vmem:[#allocation2 + $0x130] sm:$0xff] 0.0
      %261 = vst [vmem:[#allocation2 + $0x138] sm:$0xff] 0.0
      %262 = vst [vmem:[#allocation2 + $0x140] sm:$0xff] 0.0
      %263 = vst [vmem:[#allocation2 + $0x148] sm:$0xff] 0.0
      %264 = vst [vmem:[#allocation2 + $0x150] sm:$0xff] 0.0
      %265 = vst [vmem:[#allocation2 + $0x158] sm:$0xff] 0.0
      %266 = vst [vmem:[#allocation2 + $0x160] sm:$0xff] 0.0
      %267 = vst [vmem:[#allocation2 + $0x168] sm:$0xff] 0.0
      %268 = vst [vmem:[#allocation2 + $0x170] sm:$0xff] 0.0
      %269 = vst [vmem:[#allocation2 + $0x178] sm:$0xff] 0.0
      %270 = vst [vmem:[#allocation2 + $0x180] sm:$0xff] 0.0
      %271 = vst [vmem:[#allocation2 + $0x188] sm:$0xff] 0.0
      %272 = vst [vmem:[#allocation2 + $0x190] sm:$0xff] 0.0
      %273 = vst [vmem:[#allocation2 + $0x198] sm:$0xff] 0.0
      %274 = vst [vmem:[#allocation2 + $0x1a0] sm:$0xff] 0.0
      %275 = vst [vmem:[#allocation2 + $0x1a8] sm:$0xff] 0.0
      %276 = vst [vmem:[#allocation2 + $0x1b0] sm:$0xff] 0.0
      %277 = vst [vmem:[#allocation2 + $0x1b8] sm:$0xff] 0.0
      %278 = vst [vmem:[#allocation2 + $0x1c0] sm:$0xff] 0.0
      %279 = vst [vmem:[#allocation2 + $0x1c8] sm:$0xff] 0.0
      %280 = vst [vmem:[#allocation2 + $0x1d0] sm:$0xff] 0.0
      %281 = vst [vmem:[#allocation2 + $0x1d8] sm:$0xff] 0.0
      %282 = vst [vmem:[#allocation2 + $0x1e0] sm:$0xff] 0.0
      %283 = vst [vmem:[#allocation2 + $0x1e8] sm:$0xff] 0.0
      %284 = vst [vmem:[#allocation2 + $0x1f0] sm:$0xff] 0.0
      %285 = vst [vmem:[#allocation2 + $0x1f8] sm:$0xff] 0.0
    $region121: #{tpu_custom_call.1} parent=1 // pred_fallthru
      _
    %s286 = sld [smem:[#allocation4]]
    %p287 = scmp.lt.s32.totalorder 0, %s286
    // Predicated region
    $region122: #{tpu_custom_call.1} parent=1 // pred_check
      %p288 = pneg %p287
    $region123: #{tpu_custom_call.1} parent=1 // pred_check_branch
      %290 = sbr.rel (%p288) target = $region125
    $region124: #{tpu_custom_call.1} parent=1 // pred_region
      %v291 = vld [vmem:[#allocation5] sm:$0x1]
      %v292 = vld [vmem:[%s2] sm:$0xff]
      %v293 = vld [vmem:[%s2 + $0x8] sm:$0xff]
      %v294 = vld [vmem:[%s2 + $0x10] sm:$0xff]
      %v295 = vld [vmem:[%s2 + $0x18] sm:$0xff]
      %v296 = vld [vmem:[%s2 + $0x20] sm:$0xff]
      %v297 = vld [vmem:[%s2 + $0x28] sm:$0xff]
      %v298 = vld [vmem:[%s2 + $0x30] sm:$0xff]
      %v299 = vld [vmem:[%s2 + $0x38] sm:$0xff]
      %v300 = vld [vmem:[%s2 + $0x40] sm:$0xff]
      %v301 = vld [vmem:[%s2 + $0x48] sm:$0xff]
      %v302 = vld [vmem:[%s2 + $0x50] sm:$0xff]
      %v303 = vld [vmem:[%s2 + $0x58] sm:$0xff]
      %v304 = vld [vmem:[%s2 + $0x60] sm:$0xff]
      %v305 = vld [vmem:[%s2 + $0x68] sm:$0xff]
      %v306 = vld [vmem:[%s2 + $0x70] sm:$0xff]
      %v307 = vld [vmem:[%s2 + $0x78] sm:$0xff]
      %v308 = vld [vmem:[%s3] sm:$0xff]
      %v309 = vld [vmem:[%s3 + $0x8] sm:$0xff]
      %v310 = vld [vmem:[%s3 + $0x10] sm:$0xff]
      %v311 = vld [vmem:[%s3 + $0x18] sm:$0xff]
      %v312 = vld [vmem:[%s3 + $0x20] sm:$0xff]
      %v313 = vld [vmem:[%s3 + $0x28] sm:$0xff]
      %v314 = vld [vmem:[%s3 + $0x30] sm:$0xff]
      %v315 = vld [vmem:[%s3 + $0x38] sm:$0xff]
      %v316 = vld [vmem:[%s3 + $0x40] sm:$0xff]
      %v317 = vld [vmem:[%s3 + $0x48] sm:$0xff]
      %v318 = vld [vmem:[%s3 + $0x50] sm:$0xff]
      %v319 = vld [vmem:[%s3 + $0x58] sm:$0xff]
      %v320 = vld [vmem:[%s3 + $0x60] sm:$0xff]
      %v321 = vld [vmem:[%s3 + $0x68] sm:$0xff]
      %v322 = vld [vmem:[%s3 + $0x70] sm:$0xff]
      %v323 = vld [vmem:[%s3 + $0x78] sm:$0xff]
      %v324 = vld [vmem:[#allocation8] sm:$0xff]
      %v325 = vld [vmem:[#allocation8 + $0x8] sm:$0xff]
      %v326 = vld [vmem:[#allocation8 + $0x10] sm:$0xff]
      %v327 = vld [vmem:[#allocation8 + $0x18] sm:$0xff]
      %v328 = vld [vmem:[#allocation8 + $0x20] sm:$0xff]
      %v329 = vld [vmem:[#allocation8 + $0x28] sm:$0xff]
      %v330 = vld [vmem:[#allocation8 + $0x30] sm:$0xff]
      %v331 = vld [vmem:[#allocation8 + $0x38] sm:$0xff]
      %v332 = vld [vmem:[#allocation8 + $0x40] sm:$0xff]
      %v333 = vld [vmem:[#allocation8 + $0x48] sm:$0xff]
      %v334 = vld [vmem:[#allocation8 + $0x50] sm:$0xff]
      %v335 = vld [vmem:[#allocation8 + $0x58] sm:$0xff]
      %v336 = vld [vmem:[#allocation8 + $0x60] sm:$0xff]
      %v337 = vld [vmem:[#allocation8 + $0x68] sm:$0xff]
      %v338 = vld [vmem:[#allocation8 + $0x70] sm:$0xff]
      %v339 = vld [vmem:[#allocation8 + $0x78] sm:$0xff]
      %s340 = scalar_lea.vmem [#allocation8], 128
      %v341 = vld [vmem:[%s340] sm:$0xff]
      %v342 = vld [vmem:[%s340 + $0x8] sm:$0xff]
      %v343 = vld [vmem:[%s340 + $0x10] sm:$0xff]
      %v344 = vld [vmem:[%s340 + $0x18] sm:$0xff]
      %v345 = vld [vmem:[%s340 + $0x20] sm:$0xff]
      %v346 = vld [vmem:[%s340 + $0x28] sm:$0xff]
      %v347 = vld [vmem:[%s340 + $0x30] sm:$0xff]
      %v348 = vld [vmem:[%s340 + $0x38] sm:$0xff]
      %v349 = vld [vmem:[%s340 + $0x40] sm:$0xff]
      %v350 = vld [vmem:[%s340 + $0x48] sm:$0xff]
      %v351 = vld [vmem:[%s340 + $0x50] sm:$0xff]
      %v352 = vld [vmem:[%s340 + $0x58] sm:$0xff]
      %v353 = vld [vmem:[%s340 + $0x60] sm:$0xff]
      %v354 = vld [vmem:[%s340 + $0x68] sm:$0xff]
      %v355 = vld [vmem:[%s340 + $0x70] sm:$0xff]
      %v356 = vld [vmem:[%s340 + $0x78] sm:$0xff]
      %s357 = scalar_lea.vmem [#allocation8], 256
      %v358 = vld [vmem:[%s357] sm:$0xff]
      %v359 = vld [vmem:[%s357 + $0x8] sm:$0xff]
      %v360 = vld [vmem:[%s357 + $0x10] sm:$0xff]
      %v361 = vld [vmem:[%s357 + $0x18] sm:$0xff]
      %v362 = vld [vmem:[%s357 + $0x20] sm:$0xff]
      %v363 = vld [vmem:[%s357 + $0x28] sm:$0xff]
      %v364 = vld [vmem:[%s357 + $0x30] sm:$0xff]
      %v365 = vld [vmem:[%s357 + $0x38] sm:$0xff]
      %v366 = vld [vmem:[%s357 + $0x40] sm:$0xff]
      %v367 = vld [vmem:[%s357 + $0x48] sm:$0xff]
      %v368 = vld [vmem:[%s357 + $0x50] sm:$0xff]
      %v369 = vld [vmem:[%s357 + $0x58] sm:$0xff]
      %v370 = vld [vmem:[%s357 + $0x60] sm:$0xff]
      %v371 = vld [vmem:[%s357 + $0x68] sm:$0xff]
      %v372 = vld [vmem:[%s357 + $0x70] sm:$0xff]
      %v373 = vld [vmem:[%s357 + $0x78] sm:$0xff]
      %v374 = vlaneseq
      %v375 = vshrl.u32 %v374, 7
      %v376 = vadd.s32 %v375, 8
      %v377 = vadd.s32 %v375, 16
      %v378 = vadd.s32 %v375, 24
      %v379 = vadd.s32 %v375, 32
      %v380 = vadd.s32 %v375, 40
      %v381 = vadd.s32 %v375, 48
      %v382 = vadd.s32 %v375, 56
      %v383 = vadd.s32 %v375, 64
      %v384 = vadd.s32 %v375, 72
      %v385 = vadd.s32 %v375, 80
      %v386 = vadd.s32 %v375, 88
      %v387 = vadd.s32 %v375, 96
      %v388 = vadd.s32 %v375, 104
      %v389 = vadd.s32 %v375, 112
      %v390 = vadd.s32 %v375, 120
      %v391 = vlaneseq
      %v392 = vshrl.u32 %v391, 7
      %v393 = vsub.s32 0, %v392
      %v394 = vrot.slane %v291, %v393
      %vm395 = vcmp.eq.s32.totalorder %v375, %v394
      %vm396 = vcmp.eq.s32.totalorder %v376, %v394
      %vm397 = vcmp.eq.s32.totalorder %v377, %v394
      %vm398 = vcmp.eq.s32.totalorder %v378, %v394
      %vm399 = vcmp.eq.s32.totalorder %v379, %v394
      %vm400 = vcmp.eq.s32.totalorder %v380, %v394
      %vm401 = vcmp.eq.s32.totalorder %v381, %v394
      %vm402 = vcmp.eq.s32.totalorder %v382, %v394
      %vm403 = vcmp.eq.s32.totalorder %v383, %v394
      %vm404 = vcmp.eq.s32.totalorder %v384, %v394
      %vm405 = vcmp.eq.s32.totalorder %v385, %v394
      %vm406 = vcmp.eq.s32.totalorder %v386, %v394
      %vm407 = vcmp.eq.s32.totalorder %v387, %v394
      %vm408 = vcmp.eq.s32.totalorder %v388, %v394
      %vm409 = vcmp.eq.s32.totalorder %v389, %v394
      %vm410 = vcmp.eq.s32.totalorder %v390, %v394
      %v411 = vsel %vm395, 1, 0
      %v412 = vsel %vm396, 1, 0
      %v413 = vsel %vm397, 1, 0
      %v414 = vsel %vm398, 1, 0
      %v415 = vsel %vm399, 1, 0
      %v416 = vsel %vm400, 1, 0
      %v417 = vsel %vm401, 1, 0
      %v418 = vsel %vm402, 1, 0
      %v419 = vsel %vm403, 1, 0
      %v420 = vsel %vm404, 1, 0
      %v421 = vsel %vm405, 1, 0
      %v422 = vsel %vm406, 1, 0
      %v423 = vsel %vm407, 1, 0
      %v424 = vsel %vm408, 1, 0
      %v425 = vsel %vm409, 1, 0
      %v426 = vsel %vm410, 1, 0
      %v427 = vcvt.s32.f32 %v411
      %v428 = vcvt.s32.f32 %v412
      %v429 = vcvt.s32.f32 %v413
      %v430 = vcvt.s32.f32 %v414
      %v431 = vcvt.s32.f32 %v415
      %v432 = vcvt.s32.f32 %v416
      %v433 = vcvt.s32.f32 %v417
      %v434 = vcvt.s32.f32 %v418
      %v435 = vcvt.s32.f32 %v419
      %v436 = vcvt.s32.f32 %v420
      %v437 = vcvt.s32.f32 %v421
      %v438 = vcvt.s32.f32 %v422
      %v439 = vcvt.s32.f32 %v423
      %v440 = vcvt.s32.f32 %v424
      %v441 = vcvt.s32.f32 %v425
      %v442 = vcvt.s32.f32 %v426
      %v443 = vpack.c.bf16 %v428, %v427
      %v444 = vpack.c.bf16 %v430, %v429
      %v445 = vpack.c.bf16 %v432, %v431
      %v446 = vpack.c.bf16 %v434, %v433
      %v447 = vpack.c.bf16 %v436, %v435
      %v448 = vpack.c.bf16 %v438, %v437
      %v449 = vpack.c.bf16 %v440, %v439
      %v450 = vpack.c.bf16 %v442, %v441
      %451 = vxpose.xlu0.b32.start [1/16] %v427, 128
      %452 = vxpose.xlu0.b32.cont [2/16] %v428, 128
      %453 = vxpose.xlu0.b32.cont [3/16] %v429, 128
      %454 = vxpose.xlu0.b32.cont [4/16] %v430, 128
      %455 = vxpose.xlu0.b32.cont [5/16] %v431, 128
      %456 = vxpose.xlu0.b32.cont [6/16] %v432, 128
      %457 = vxpose.xlu0.b32.cont [7/16] %v433, 128
      %458 = vxpose.xlu0.b32.cont [8/16] %v434, 128
      %459 = vxpose.xlu0.b32.cont [9/16] %v435, 128
      %460 = vxpose.xlu0.b32.cont [10/16] %v436, 128
      %461 = vxpose.xlu0.b32.cont [11/16] %v437, 128
      %462 = vxpose.xlu0.b32.cont [12/16] %v438, 128
      %463 = vxpose.xlu0.b32.cont [13/16] %v439, 128
      %464 = vxpose.xlu0.b32.cont [14/16] %v440, 128
      %465 = vxpose.xlu0.b32.cont [15/16] %v441, 128
      %466 = vxpose.xlu0.b32.end [16/16] %v442, 128
      %v467 = vpop.trf.xlu0
      %v468 = vpop.trf.xlu0
      %v469 = vpop.trf.xlu0
      %v470 = vpop.trf.xlu0
      %v471 = vpop.trf.xlu0
      %v472 = vpop.trf.xlu0
      %v473 = vpop.trf.xlu0
      %v474 = vpop.trf.xlu0
      %v475 = vpop.trf.xlu0
      %v476 = vpop.trf.xlu0
      %v477 = vpop.trf.xlu0
      %v478 = vpop.trf.xlu0
      %v479 = vpop.trf.xlu0
      %v480 = vpop.trf.xlu0
      %v481 = vpop.trf.xlu0
      %v482 = vpop.trf.xlu0
      %v483 = vpack.c.bf16 %v468, %v467
      %v484 = vpack.c.bf16 %v470, %v469
      %v485 = vpack.c.bf16 %v472, %v471
      %v486 = vpack.c.bf16 %v474, %v473
      %v487 = vpack.c.bf16 %v476, %v475
      %v488 = vpack.c.bf16 %v478, %v477
      %v489 = vpack.c.bf16 %v480, %v479
      %v490 = vpack.c.bf16 %v482, %v481
      %v491 = vpack.c.bf16 %v309, %v308
      %v492 = vpack.c.bf16 %v325, %v324
      %v493 = vpack.c.bf16 %v342, %v341
      %v494 = vpack.c.bf16 %v359, %v358
      %v495 = vpack.c.bf16 %v311, %v310
      %v496 = vpack.c.bf16 %v327, %v326
      %v497 = vpack.c.bf16 %v344, %v343
      %v498 = vpack.c.bf16 %v361, %v360
      %v499 = vpack.c.bf16 %v313, %v312
      %v500 = vpack.c.bf16 %v329, %v328
      %v501 = vpack.c.bf16 %v346, %v345
      %v502 = vpack.c.bf16 %v363, %v362
      %v503 = vpack.c.bf16 %v315, %v314
      %v504 = vpack.c.bf16 %v331, %v330
      %v505 = vpack.c.bf16 %v348, %v347
      %v506 = vpack.c.bf16 %v365, %v364
      %v507 = vpack.c.bf16 %v317, %v316
      %v508 = vpack.c.bf16 %v333, %v332
      %v509 = vpack.c.bf16 %v350, %v349
      %v510 = vpack.c.bf16 %v367, %v366
      %v511 = vpack.c.bf16 %v319, %v318
      %v512 = vpack.c.bf16 %v335, %v334
      %v513 = vpack.c.bf16 %v352, %v351
      %v514 = vpack.c.bf16 %v369, %v368
      %v515 = vpack.c.bf16 %v321, %v320
      %v516 = vpack.c.bf16 %v337, %v336
      %v517 = vpack.c.bf16 %v354, %v353
      %v518 = vpack.c.bf16 %v371, %v370
      %v519 = vpack.c.bf16 %v323, %v322
      %v520 = vpack.c.bf16 %v339, %v338
      %v521 = vpack.c.bf16 %v356, %v355
      %v522 = vpack.c.bf16 %v373, %v372
      %523 = vmatprep.subr.bf16.mxu0 %v520
      %524 = vmatpush1.bf16.msra.mxu0 %v519
      %525 = vmatprep.subr.bf16.mxu0 %v516
      %526 = vmatpush1.bf16.msra.mxu0 %v515
      %527 = vmatprep.subr.bf16.mxu0 %v512
      %528 = vmatpush1.bf16.msra.mxu0 %v511
      %529 = vmatprep.subr.bf16.mxu0 %v508
      %530 = vmatpush1.bf16.msra.mxu0 %v507
      %531 = vmatprep.subr.bf16.mxu0 %v504
      %532 = vmatpush1.bf16.msra.mxu0 %v503
      %533 = vmatprep.subr.bf16.mxu0 %v500
      %534 = vmatpush1.bf16.msra.mxu0 %v499
      %535 = vmatprep.subr.bf16.mxu0 %v496
      %536 = vmatpush1.bf16.msra.mxu0 %v495
      %537 = vmatprep.subr.bf16.mxu0 %v492
      %538 = vmatpush1.bf16.msra.mxu0 %v491
      %539 = vmatprep.subr.bf16.mxu0 0
      %540 = vmatpush2.bf16.msra.mxu0 0
      %541 = vmatprep.subr.bf16.mxu0 0
      %542 = vmatpush2.bf16.msra.mxu0 0
      %543 = vmatprep.subr.bf16.mxu0 0
      %544 = vmatpush2.bf16.msra.mxu0 0
      %545 = vmatprep.subr.bf16.mxu0 0
      %546 = vmatpush2.bf16.msra.mxu0 0
      %547 = vmatprep.subr.bf16.mxu0 0
      %548 = vmatpush2.bf16.msra.mxu0 0
      %549 = vmatprep.subr.bf16.mxu0 0
      %550 = vmatpush2.bf16.msra.mxu0 0
      %551 = vmatprep.subr.bf16.mxu0 0
      %552 = vmatpush2.bf16.msra.mxu0 0
      %553 = vmatprep.subr.bf16.mxu0 0
      %554 = vmatpush2.bf16.msra.mxu0 0
      %555 = vmatprep.mubr.bf16.mxu0 0
      %556 = vmatmul.mubr.bf16.gmra.mxu0 %v483
      %v557 = vpop.f32.mrf.mxu0
      %v558 = vadd.f32 0.0, %v557
      %v559 = vpop.f32.mrf.mxu0
      %v560 = vadd.f32 0.0, %v559
      %v561 = vpop.f32.mrf.mxu0
      %v562 = vadd.f32 0.0, %v561
      %v563 = vpop.f32.mrf.mxu0
      %v564 = vadd.f32 0.0, %v563
      %565 = vmatprep.mubr.bf16.mxu0 0
      %566 = vmatmul.mubr.bf16.gmra.mxu0 %v484
      %v567 = vpop.f32.mrf.mxu0
      %v568 = vadd.f32 0.0, %v567
      %v569 = vpop.f32.mrf.mxu0
      %v570 = vadd.f32 0.0, %v569
      %v571 = vpop.f32.mrf.mxu0
      %v572 = vadd.f32 0.0, %v571
      %v573 = vpop.f32.mrf.mxu0
      %v574 = vadd.f32 0.0, %v573
      %575 = vmatprep.mubr.bf16.mxu0 0
      %576 = vmatmul.mubr.bf16.gmra.mxu0 %v485
      %v577 = vpop.f32.mrf.mxu0
      %v578 = vadd.f32 0.0, %v577
      %v579 = vpop.f32.mrf.mxu0
      %v580 = vadd.f32 0.0, %v579
      %v581 = vpop.f32.mrf.mxu0
      %v582 = vadd.f32 0.0, %v581
      %v583 = vpop.f32.mrf.mxu0
      %v584 = vadd.f32 0.0, %v583
      %585 = vmatprep.mubr.bf16.mxu0 0
      %586 = vmatmul.mubr.bf16.gmra.mxu0 %v486
      %v587 = vpop.f32.mrf.mxu0
      %v588 = vadd.f32 0.0, %v587
      %v589 = vpop.f32.mrf.mxu0
      %v590 = vadd.f32 0.0, %v589
      %v591 = vpop.f32.mrf.mxu0
      %v592 = vadd.f32 0.0, %v591
      %v593 = vpop.f32.mrf.mxu0
      %v594 = vadd.f32 0.0, %v593
      %595 = vmatprep.mubr.bf16.mxu0 0
      %596 = vmatmul.mubr.bf16.gmra.mxu0 %v487
      %v597 = vpop.f32.mrf.mxu0
      %v598 = vadd.f32 0.0, %v597
      %v599 = vpop.f32.mrf.mxu0
      %v600 = vadd.f32 0.0, %v599
      %v601 = vpop.f32.mrf.mxu0
      %v602 = vadd.f32 0.0, %v601
      %v603 = vpop.f32.mrf.mxu0
      %v604 = vadd.f32 0.0, %v603
      %605 = vmatprep.mubr.bf16.mxu0 0
      %606 = vmatmul.mubr.bf16.gmra.mxu0 %v488
      %v607 = vpop.f32.mrf.mxu0
      %v608 = vadd.f32 0.0, %v607
      %v609 = vpop.f32.mrf.mxu0
      %v610 = vadd.f32 0.0, %v609
      %v611 = vpop.f32.mrf.mxu0
      %v612 = vadd.f32 0.0, %v611
      %v613 = vpop.f32.mrf.mxu0
      %v614 = vadd.f32 0.0, %v613
      %615 = vmatprep.mubr.bf16.mxu0 0
      %616 = vmatmul.mubr.bf16.gmra.mxu0 %v489
      %v617 = vpop.f32.mrf.mxu0
      %v618 = vadd.f32 0.0, %v617
      %v619 = vpop.f32.mrf.mxu0
      %v620 = vadd.f32 0.0, %v619
      %v621 = vpop.f32.mrf.mxu0
      %v622 = vadd.f32 0.0, %v621
      %v623 = vpop.f32.mrf.mxu0
      %v624 = vadd.f32 0.0, %v623
      %625 = vmatprep.mubr.bf16.mxu0 0
      %626 = vmatmul.mubr.bf16.gmra.mxu0 %v490
      %v627 = vpop.f32.mrf.mxu0
      %v628 = vadd.f32 0.0, %v627
      %v629 = vpop.f32.mrf.mxu0
      %v630 = vadd.f32 0.0, %v629
      %v631 = vpop.f32.mrf.mxu0
      %v632 = vadd.f32 0.0, %v631
      %v633 = vpop.f32.mrf.mxu0
      %v634 = vadd.f32 0.0, %v633
      %635 = vdwg.mxu0
      %636 = vmatprep.subr.bf16.mxu0 %v522
      %637 = vmatpush1.bf16.msra.mxu0 %v521
      %638 = vmatprep.subr.bf16.mxu0 %v518
      %639 = vmatpush1.bf16.msra.mxu0 %v517
      %640 = vmatprep.subr.bf16.mxu0 %v514
      %641 = vmatpush1.bf16.msra.mxu0 %v513
      %642 = vmatprep.subr.bf16.mxu0 %v510
      %643 = vmatpush1.bf16.msra.mxu0 %v509
      %644 = vmatprep.subr.bf16.mxu0 %v506
      %645 = vmatpush1.bf16.msra.mxu0 %v505
      %646 = vmatprep.subr.bf16.mxu0 %v502
      %647 = vmatpush1.bf16.msra.mxu0 %v501
      %648 = vmatprep.subr.bf16.mxu0 %v498
      %649 = vmatpush1.bf16.msra.mxu0 %v497
      %650 = vmatprep.subr.bf16.mxu0 %v494
      %651 = vmatpush1.bf16.msra.mxu0 %v493
      %652 = vmatprep.subr.bf16.mxu0 0
      %653 = vmatpush2.bf16.msra.mxu0 0
      %654 = vmatprep.subr.bf16.mxu0 0
      %655 = vmatpush2.bf16.msra.mxu0 0
      %656 = vmatprep.subr.bf16.mxu0 0
      %657 = vmatpush2.bf16.msra.mxu0 0
      %658 = vmatprep.subr.bf16.mxu0 0
      %659 = vmatpush2.bf16.msra.mxu0 0
      %660 = vmatprep.subr.bf16.mxu0 0
      %661 = vmatpush2.bf16.msra.mxu0 0
      %662 = vmatprep.subr.bf16.mxu0 0
      %663 = vmatpush2.bf16.msra.mxu0 0
      %664 = vmatprep.subr.bf16.mxu0 0
      %665 = vmatpush2.bf16.msra.mxu0 0
      %666 = vmatprep.subr.bf16.mxu0 0
      %667 = vmatpush2.bf16.msra.mxu0 0
      %668 = vmatprep.mubr.bf16.mxu0 0
      %669 = vmatmul.mubr.bf16.gmra.mxu0 %v483
      %v670 = vpop.f32.mrf.mxu0
      %v671 = vadd.f32 0.0, %v670
      %v672 = vpop.f32.mrf.mxu0
      %v673 = vadd.f32 0.0, %v672
      %v674 = vpop.f32.mrf.mxu0
      %v675 = vadd.f32 0.0, %v674
      %v676 = vpop.f32.mrf.mxu0
      %v677 = vadd.f32 0.0, %v676
      %678 = vmatprep.mubr.bf16.mxu0 0
      %679 = vmatmul.mubr.bf16.gmra.mxu0 %v484
      %v680 = vpop.f32.mrf.mxu0
      %v681 = vadd.f32 0.0, %v680
      %v682 = vpop.f32.mrf.mxu0
      %v683 = vadd.f32 0.0, %v682
      %v684 = vpop.f32.mrf.mxu0
      %v685 = vadd.f32 0.0, %v684
      %v686 = vpop.f32.mrf.mxu0
      %v687 = vadd.f32 0.0, %v686
      %688 = vmatprep.mubr.bf16.mxu0 0
      %689 = vmatmul.mubr.bf16.gmra.mxu0 %v485
      %v690 = vpop.f32.mrf.mxu0
      %v691 = vadd.f32 0.0, %v690
      %v692 = vpop.f32.mrf.mxu0
      %v693 = vadd.f32 0.0, %v692
      %v694 = vpop.f32.mrf.mxu0
      %v695 = vadd.f32 0.0, %v694
      %v696 = vpop.f32.mrf.mxu0
      %v697 = vadd.f32 0.0, %v696
      %698 = vmatprep.mubr.bf16.mxu0 0
      %699 = vmatmul.mubr.bf16.gmra.mxu0 %v486
      %v700 = vpop.f32.mrf.mxu0
      %v701 = vadd.f32 0.0, %v700
      %v702 = vpop.f32.mrf.mxu0
      %v703 = vadd.f32 0.0, %v702
      %v704 = vpop.f32.mrf.mxu0
      %v705 = vadd.f32 0.0, %v704
      %v706 = vpop.f32.mrf.mxu0
      %v707 = vadd.f32 0.0, %v706
      %708 = vmatprep.mubr.bf16.mxu0 0
      %709 = vmatmul.mubr.bf16.gmra.mxu0 %v487
      %v710 = vpop.f32.mrf.mxu0
      %v711 = vadd.f32 0.0, %v710
      %v712 = vpop.f32.mrf.mxu0
      %v713 = vadd.f32 0.0, %v712
      %v714 = vpop.f32.mrf.mxu0
      %v715 = vadd.f32 0.0, %v714
      %v716 = vpop.f32.mrf.mxu0
      %v717 = vadd.f32 0.0, %v716
      %718 = vmatprep.mubr.bf16.mxu0 0
      %719 = vmatmul.mubr.bf16.gmra.mxu0 %v488
      %v720 = vpop.f32.mrf.mxu0
      %v721 = vadd.f32 0.0, %v720
      %v722 = vpop.f32.mrf.mxu0
      %v723 = vadd.f32 0.0, %v722
      %v724 = vpop.f32.mrf.mxu0
      %v725 = vadd.f32 0.0, %v724
      %v726 = vpop.f32.mrf.mxu0
      %v727 = vadd.f32 0.0, %v726
      %728 = vmatprep.mubr.bf16.mxu0 0
      %729 = vmatmul.mubr.bf16.gmra.mxu0 %v489
      %v730 = vpop.f32.mrf.mxu0
      %v731 = vadd.f32 0.0, %v730
      %v732 = vpop.f32.mrf.mxu0
      %v733 = vadd.f32 0.0, %v732
      %v734 = vpop.f32.mrf.mxu0
      %v735 = vadd.f32 0.0, %v734
      %v736 = vpop.f32.mrf.mxu0
      %v737 = vadd.f32 0.0, %v736
      %738 = vmatprep.mubr.bf16.mxu0 0
      %739 = vmatmul.mubr.bf16.gmra.mxu0 %v490
      %v740 = vpop.f32.mrf.mxu0
      %v741 = vadd.f32 0.0, %v740
      %v742 = vpop.f32.mrf.mxu0
      %v743 = vadd.f32 0.0, %v742
      %v744 = vpop.f32.mrf.mxu0
      %v745 = vadd.f32 0.0, %v744
      %v746 = vpop.f32.mrf.mxu0
      %v747 = vadd.f32 0.0, %v746
      %748 = vdwg.mxu0
      %v749 = vpack.c.bf16 %v562, %v558
      %v750 = vpack.c.bf16 %v572, %v568
      %v751 = vpack.c.bf16 %v582, %v578
      %v752 = vpack.c.bf16 %v592, %v588
      %v753 = vpack.c.bf16 %v602, %v598
      %v754 = vpack.c.bf16 %v612, %v608
      %v755 = vpack.c.bf16 %v622, %v618
      %v756 = vpack.c.bf16 %v632, %v628
      %v757 = vld [vmem:[#allocation10] sm:$0xf]
      %v758 = vld [vmem:[#allocation10 + $0x4] sm:$0xf]
      %v759 = vld [vmem:[#allocation10 + $0x8] sm:$0xf]
      %v760 = vld [vmem:[#allocation10 + $0xc] sm:$0xf]
      %v761 = vld [vmem:[#allocation10 + $0x10] sm:$0xf]
      %v762 = vld [vmem:[#allocation10 + $0x14] sm:$0xf]
      %v763 = vld [vmem:[#allocation10 + $0x18] sm:$0xf]
      %v764 = vld [vmem:[#allocation10 + $0x1c] sm:$0xf]
      %v765 = vld [vmem:[#allocation10 + $0x20] sm:$0xf]
      %v766 = vld [vmem:[#allocation10 + $0x24] sm:$0xf]
      %v767 = vld [vmem:[#allocation10 + $0x28] sm:$0xf]
      %v768 = vld [vmem:[#allocation10 + $0x2c] sm:$0xf]
      %v769 = vld [vmem:[#allocation10 + $0x30] sm:$0xf]
      %v770 = vld [vmem:[#allocation10 + $0x34] sm:$0xf]
      %v771 = vld [vmem:[#allocation10 + $0x38] sm:$0xf]
      %v772 = vld [vmem:[#allocation10 + $0x3c] sm:$0xf]
      %v773 = vld [vmem:[#allocation11] sm:$0x1]
      %v775 = vlaneseq
      %v776 = vshrl.u32 %v775, 7
      %v777 = vsub.s32 0, %v776
      %v778 = vrot.slane %v773, %v777
      %v796 = vunpack.c.l.b16 %v757
      %v797 = vunpack.c.l.b16 %v758
      %v798 = vunpack.c.l.b16 %v759
      %v799 = vunpack.c.l.b16 %v760
      %v800 = vunpack.c.l.b16 %v761
      %v801 = vunpack.c.l.b16 %v762
      %v802 = vunpack.c.l.b16 %v763
      %v803 = vunpack.c.l.b16 %v764
      %v804 = vunpack.c.l.b16 %v765
      %v805 = vunpack.c.l.b16 %v766
      %v806 = vunpack.c.l.b16 %v767
      %v807 = vunpack.c.l.b16 %v768
      %v808 = vunpack.c.l.b16 %v769
      %v809 = vunpack.c.l.b16 %v770
      %v810 = vunpack.c.l.b16 %v771
      %v811 = vunpack.c.l.b16 %v772
      %v812 = vpack.c.b16 %v797, %v796
      %v813 = vpack.c.b16 %v799, %v798
      %v814 = vpack.c.b16 %v801, %v800
      %v815 = vpack.c.b16 %v803, %v802
      %v816 = vpack.c.b16 %v805, %v804
      %v817 = vpack.c.b16 %v807, %v806
      %v818 = vpack.c.b16 %v809, %v808
      %v819 = vpack.c.b16 %v811, %v810
      %828 = vmatprep.subr.bf16.mxu0 0
      %829 = vmatpush1.bf16.msra.mxu0 %v819
      %830 = vmatprep.subr.bf16.mxu0 0
      %831 = vmatpush1.bf16.msra.mxu0 %v818
      %832 = vmatprep.subr.bf16.mxu0 0
      %833 = vmatpush1.bf16.msra.mxu0 %v817
      %834 = vmatprep.subr.bf16.mxu0 0
      %835 = vmatpush1.bf16.msra.mxu0 %v816
      %836 = vmatprep.subr.bf16.mxu0 0
      %837 = vmatpush1.bf16.msra.mxu0 %v815
      %838 = vmatprep.subr.bf16.mxu0 0
      %839 = vmatpush1.bf16.msra.mxu0 %v814
      %840 = vmatprep.subr.bf16.mxu0 0
      %841 = vmatpush1.bf16.msra.mxu0 %v813
      %842 = vmatprep.subr.bf16.mxu0 0
      %843 = vmatpush1.bf16.msra.mxu0 %v812
      %844 = vmatprep.subr.bf16.mxu0 0
      %845 = vmatpush2.bf16.msra.mxu0 0
      %846 = vmatprep.subr.bf16.mxu0 0
      %847 = vmatpush2.bf16.msra.mxu0 0
      %848 = vmatprep.subr.bf16.mxu0 0
      %849 = vmatpush2.bf16.msra.mxu0 0
      %850 = vmatprep.subr.bf16.mxu0 0
      %851 = vmatpush2.bf16.msra.mxu0 0
      %852 = vmatprep.subr.bf16.mxu0 0
      %853 = vmatpush2.bf16.msra.mxu0 0
      %854 = vmatprep.subr.bf16.mxu0 0
      %855 = vmatpush2.bf16.msra.mxu0 0
      %856 = vmatprep.subr.bf16.mxu0 0
      %857 = vmatpush2.bf16.msra.mxu0 0
      %858 = vmatprep.subr.bf16.mxu0 0
      %859 = vmatpush2.bf16.msra.mxu0 0
      %860 = vmatprep.mubr.bf16.mxu0 0
      %861 = vmatmul.mubr.bf16.gmra.mxu0 %v749
      %v862 = vpop.f32.mrf.mxu0
      %v863 = vadd.f32 %v778, %v862
      %v864 = vpop.f32.mrf.mxu0
      %v865 = vpop.f32.mrf.mxu0
      %v866 = vadd.f32 %v778, %v865
      %v867 = vpop.f32.mrf.mxu0
      %868 = vmatprep.mubr.bf16.mxu0 0
      %869 = vmatmul.mubr.bf16.gmra.mxu0 %v750
      %v870 = vpop.f32.mrf.mxu0
      %v871 = vadd.f32 %v778, %v870
      %v872 = vpop.f32.mrf.mxu0
      %v873 = vpop.f32.mrf.mxu0
      %v874 = vadd.f32 %v778, %v873
      %v875 = vpop.f32.mrf.mxu0
      %876 = vmatprep.mubr.bf16.mxu0 0
      %877 = vmatmul.mubr.bf16.gmra.mxu0 %v751
      %v878 = vpop.f32.mrf.mxu0
      %v879 = vadd.f32 %v778, %v878
      %v880 = vpop.f32.mrf.mxu0
      %v881 = vpop.f32.mrf.mxu0
      %v882 = vadd.f32 %v778, %v881
      %v883 = vpop.f32.mrf.mxu0
      %884 = vmatprep.mubr.bf16.mxu0 0
      %885 = vmatmul.mubr.bf16.gmra.mxu0 %v752
      %v886 = vpop.f32.mrf.mxu0
      %v887 = vadd.f32 %v778, %v886
      %v888 = vpop.f32.mrf.mxu0
      %v889 = vpop.f32.mrf.mxu0
      %v890 = vadd.f32 %v778, %v889
      %v891 = vpop.f32.mrf.mxu0
      %892 = vmatprep.mubr.bf16.mxu0 0
      %893 = vmatmul.mubr.bf16.gmra.mxu0 %v753
      %v894 = vpop.f32.mrf.mxu0
      %v895 = vadd.f32 %v778, %v894
      %v896 = vpop.f32.mrf.mxu0
      %v897 = vpop.f32.mrf.mxu0
      %v898 = vadd.f32 %v778, %v897
      %v899 = vpop.f32.mrf.mxu0
      %900 = vmatprep.mubr.bf16.mxu0 0
      %901 = vmatmul.mubr.bf16.gmra.mxu0 %v754
      %v902 = vpop.f32.mrf.mxu0
      %v903 = vadd.f32 %v778, %v902
      %v904 = vpop.f32.mrf.mxu0
      %v905 = vpop.f32.mrf.mxu0
      %v906 = vadd.f32 %v778, %v905
      %v907 = vpop.f32.mrf.mxu0
      %908 = vmatprep.mubr.bf16.mxu0 0
      %909 = vmatmul.mubr.bf16.gmra.mxu0 %v755
      %v910 = vpop.f32.mrf.mxu0
      %v911 = vadd.f32 %v778, %v910
      %v912 = vpop.f32.mrf.mxu0
      %v913 = vpop.f32.mrf.mxu0
      %v914 = vadd.f32 %v778, %v913
      %v915 = vpop.f32.mrf.mxu0
      %916 = vmatprep.mubr.bf16.mxu0 0
      %917 = vmatmul.mubr.bf16.gmra.mxu0 %v756
      %v918 = vpop.f32.mrf.mxu0
      %v919 = vadd.f32 %v778, %v918
      %v920 = vpop.f32.mrf.mxu0
      %v921 = vpop.f32.mrf.mxu0
      %v922 = vadd.f32 %v778, %v921
      %v923 = vpop.f32.mrf.mxu0
      %924 = vdwg.mxu0
      %v925 = vxor.u32 %v863, 2147483648
      %v926 = vxor.u32 %v866, 2147483648
      %v927 = vxor.u32 %v871, 2147483648
      %v928 = vxor.u32 %v874, 2147483648
      %v929 = vxor.u32 %v879, 2147483648
      %v930 = vxor.u32 %v882, 2147483648
      %v931 = vxor.u32 %v887, 2147483648
      %v932 = vxor.u32 %v890, 2147483648
      %v933 = vxor.u32 %v895, 2147483648
      %v934 = vxor.u32 %v898, 2147483648
      %v935 = vxor.u32 %v903, 2147483648
      %v936 = vxor.u32 %v906, 2147483648
      %v937 = vxor.u32 %v911, 2147483648
      %v938 = vxor.u32 %v914, 2147483648
      %v939 = vxor.u32 %v919, 2147483648
      %v940 = vxor.u32 %v922, 2147483648
      %v941 = vmul.f32 %v925, 1.442695
      %v942 = vpow.pop %v941
      %v943 = vmul.f32 %v926, 1.442695
      %v944 = vpow.pop %v943
      %v945 = vmul.f32 %v927, 1.442695
      %v946 = vpow.pop %v945
      %v947 = vmul.f32 %v928, 1.442695
      %v948 = vpow.pop %v947
      %v949 = vmul.f32 %v929, 1.442695
      %v950 = vpow.pop %v949
      %v951 = vmul.f32 %v930, 1.442695
      %v952 = vpow.pop %v951
      %v953 = vmul.f32 %v931, 1.442695
      %v954 = vpow.pop %v953
      %v955 = vmul.f32 %v932, 1.442695
      %v956 = vpow.pop %v955
      %v957 = vmul.f32 %v933, 1.442695
      %v958 = vpow.pop %v957
      %v959 = vmul.f32 %v934, 1.442695
      %v960 = vpow.pop %v959
      %v961 = vmul.f32 %v935, 1.442695
      %v962 = vpow.pop %v961
      %v963 = vmul.f32 %v936, 1.442695
      %v964 = vpow.pop %v963
      %v965 = vmul.f32 %v937, 1.442695
      %v966 = vpow.pop %v965
      %v967 = vmul.f32 %v938, 1.442695
      %v968 = vpow.pop %v967
      %v969 = vmul.f32 %v939, 1.442695
      %v970 = vpow.pop %v969
      %v971 = vmul.f32 %v940, 1.442695
      %v972 = vpow.pop %v971
      %v973 = vadd.f32 %v942, 1.0
      %v974 = vadd.f32 %v944, 1.0
      %v975 = vadd.f32 %v946, 1.0
      %v976 = vadd.f32 %v948, 1.0
      %v977 = vadd.f32 %v950, 1.0
      %v978 = vadd.f32 %v952, 1.0
      %v979 = vadd.f32 %v954, 1.0
      %v980 = vadd.f32 %v956, 1.0
      %v981 = vadd.f32 %v958, 1.0
      %v982 = vadd.f32 %v960, 1.0
      %v983 = vadd.f32 %v962, 1.0
      %v984 = vadd.f32 %v964, 1.0
      %v985 = vadd.f32 %v966, 1.0
      %v986 = vadd.f32 %v968, 1.0
      %v987 = vadd.f32 %v970, 1.0
      %v988 = vadd.f32 %v972, 1.0
      %v989 = vrcp.pop %v973
      %v990 = vmul.f32 1.0, %v989
      %v991 = vrcp.pop %v974
      %v992 = vmul.f32 1.0, %v991
      %v993 = vrcp.pop %v975
      %v994 = vmul.f32 1.0, %v993
      %v995 = vrcp.pop %v976
      %v996 = vmul.f32 1.0, %v995
      %v997 = vrcp.pop %v977
      %v998 = vmul.f32 1.0, %v997
      %v999 = vrcp.pop %v978
      %v1000 = vmul.f32 1.0, %v999
      %v1001 = vrcp.pop %v979
      %v1002 = vmul.f32 1.0, %v1001
      %v1003 = vrcp.pop %v980
      %v1004 = vmul.f32 1.0, %v1003
      %v1005 = vrcp.pop %v981
      %v1006 = vmul.f32 1.0, %v1005
      %v1007 = vrcp.pop %v982
      %v1008 = vmul.f32 1.0, %v1007
      %v1009 = vrcp.pop %v983
      %v1010 = vmul.f32 1.0, %v1009
      %v1011 = vrcp.pop %v984
      %v1012 = vmul.f32 1.0, %v1011
      %v1013 = vrcp.pop %v985
      %v1014 = vmul.f32 1.0, %v1013
      %v1015 = vrcp.pop %v986
      %v1016 = vmul.f32 1.0, %v1015
      %v1017 = vrcp.pop %v987
      %v1018 = vmul.f32 1.0, %v1017
      %v1019 = vrcp.pop %v988
      %v1020 = vmul.f32 1.0, %v1019
      %v1021 = vmul.f32 %v863, %v990
      %v1022 = vmul.f32 %v866, %v992
      %v1023 = vmul.f32 %v871, %v994
      %v1024 = vmul.f32 %v874, %v996
      %v1025 = vmul.f32 %v879, %v998
      %v1026 = vmul.f32 %v882, %v1000
      %v1027 = vmul.f32 %v887, %v1002
      %v1028 = vmul.f32 %v890, %v1004
      %v1029 = vmul.f32 %v895, %v1006
      %v1030 = vmul.f32 %v898, %v1008
      %v1031 = vmul.f32 %v903, %v1010
      %v1032 = vmul.f32 %v906, %v1012
      %v1033 = vmul.f32 %v911, %v1014
      %v1034 = vmul.f32 %v914, %v1016
      %v1035 = vmul.f32 %v919, %v1018
      %v1036 = vmul.f32 %v922, %v1020
      %v1037 = vpack.c.bf16 %v1022, %v1021
      %v1038 = vpack.c.bf16 %v1024, %v1023
      %v1039 = vpack.c.bf16 %v1026, %v1025
      %v1040 = vpack.c.bf16 %v1028, %v1027
      %v1041 = vpack.c.bf16 %v1030, %v1029
      %v1042 = vpack.c.bf16 %v1032, %v1031
      %v1043 = vpack.c.bf16 %v1034, %v1033
      %v1044 = vpack.c.bf16 %v1036, %v1035
      %v1045 = vld [vmem:[#allocation13] sm:$0xff]
      %v1046 = vld [vmem:[#allocation13 + $0x8] sm:$0xf]
      %v1047 = vld [vmem:[#allocation13 + $0xc] sm:$0xff]
      %v1048 = vld [vmem:[#allocation13 + $0x14] sm:$0xf]
      %v1049 = vld [vmem:[#allocation13 + $0x18] sm:$0xff]
      %v1050 = vld [vmem:[#allocation13 + $0x20] sm:$0xf]
      %v1051 = vld [vmem:[#allocation13 + $0x24] sm:$0xff]
      %v1052 = vld [vmem:[#allocation13 + $0x2c] sm:$0xf]
      %v1053 = vld [vmem:[#allocation13 + $0x30] sm:$0xff]
      %v1054 = vld [vmem:[#allocation13 + $0x38] sm:$0xf]
      %v1055 = vld [vmem:[#allocation13 + $0x3c] sm:$0xff]
      %v1056 = vld [vmem:[#allocation13 + $0x44] sm:$0xf]
      %v1057 = vld [vmem:[#allocation13 + $0x48] sm:$0xff]
      %v1058 = vld [vmem:[#allocation13 + $0x50] sm:$0xf]
      %v1059 = vld [vmem:[#allocation13 + $0x54] sm:$0xff]
      %v1060 = vld [vmem:[#allocation13 + $0x5c] sm:$0xf]
      %v1061 = vld [vmem:[#allocation13 + $0x60] sm:$0xff]
      %v1062 = vld [vmem:[#allocation13 + $0x68] sm:$0xf]
      %v1063 = vld [vmem:[#allocation13 + $0x6c] sm:$0xff]
      %v1064 = vld [vmem:[#allocation13 + $0x74] sm:$0xf]
      %v1065 = vld [vmem:[#allocation13 + $0x78] sm:$0xff]
      %v1066 = vld [vmem:[#allocation13 + $0x80] sm:$0xf]
      %v1067 = vld [vmem:[#allocation13 + $0x84] sm:$0xff]
      %v1068 = vld [vmem:[#allocation13 + $0x8c] sm:$0xf]
      %v1069 = vld [vmem:[#allocation13 + $0x90] sm:$0xff]
      %v1070 = vld [vmem:[#allocation13 + $0x98] sm:$0xf]
      %v1071 = vld [vmem:[#allocation13 + $0x9c] sm:$0xff]
      %v1072 = vld [vmem:[#allocation13 + $0xa4] sm:$0xf]
      %v1073 = vld [vmem:[#allocation13 + $0xa8] sm:$0xff]
      %v1074 = vld [vmem:[#allocation13 + $0xb0] sm:$0xf]
      %v1075 = vld [vmem:[#allocation13 + $0xb4] sm:$0xff]
      %v1076 = vld [vmem:[#allocation13 + $0xbc] sm:$0xf]
      %v1077 = vld [vmem:[#allocation14] sm:$0x7]
      %v1079 = vlaneseq
      %v1080 = vshrl.u32 %v1079, 7
      %v1081 = vsub.s32 0, %v1080
      %v1082 = vrot.slane %v1077, %v1081
      %v1083 = vlaneseq
      %v1084 = vshrl.u32 %v1083, 7
      %v1085 = vsub.s32 1, %v1084
      %v1086 = vrot.slane %v1077, %v1085
      %v1087 = vlaneseq
      %v1088 = vshrl.u32 %v1087, 7
      %v1089 = vsub.s32 2, %v1088
      %v1090 = vrot.slane %v1077, %v1089
      %v1126 = vunpack.c.l.b16 %v1045
      %v1127 = vunpack.c.h.b16 %v1045
      %v1128 = vunpack.c.l.b16 %v1046
      %v1129 = vunpack.c.l.b16 %v1047
      %v1130 = vunpack.c.h.b16 %v1047
      %v1131 = vunpack.c.l.b16 %v1048
      %v1132 = vunpack.c.l.b16 %v1049
      %v1133 = vunpack.c.h.b16 %v1049
      %v1134 = vunpack.c.l.b16 %v1050
      %v1135 = vunpack.c.l.b16 %v1051
      %v1136 = vunpack.c.h.b16 %v1051
      %v1137 = vunpack.c.l.b16 %v1052
      %v1138 = vunpack.c.l.b16 %v1053
      %v1139 = vunpack.c.h.b16 %v1053
      %v1140 = vunpack.c.l.b16 %v1054
      %v1141 = vunpack.c.l.b16 %v1055
      %v1142 = vunpack.c.h.b16 %v1055
      %v1143 = vunpack.c.l.b16 %v1056
      %v1144 = vunpack.c.l.b16 %v1057
      %v1145 = vunpack.c.h.b16 %v1057
      %v1146 = vunpack.c.l.b16 %v1058
      %v1147 = vunpack.c.l.b16 %v1059
      %v1148 = vunpack.c.h.b16 %v1059
      %v1149 = vunpack.c.l.b16 %v1060
      %v1150 = vunpack.c.l.b16 %v1061
      %v1151 = vunpack.c.h.b16 %v1061
      %v1152 = vunpack.c.l.b16 %v1062
      %v1153 = vunpack.c.l.b16 %v1063
      %v1154 = vunpack.c.h.b16 %v1063
      %v1155 = vunpack.c.l.b16 %v1064
      %v1156 = vunpack.c.l.b16 %v1065
      %v1157 = vunpack.c.h.b16 %v1065
      %v1158 = vunpack.c.l.b16 %v1066
      %v1159 = vunpack.c.l.b16 %v1067
      %v1160 = vunpack.c.h.b16 %v1067
      %v1161 = vunpack.c.l.b16 %v1068
      %v1162 = vunpack.c.l.b16 %v1069
      %v1163 = vunpack.c.h.b16 %v1069
      %v1164 = vunpack.c.l.b16 %v1070
      %v1165 = vunpack.c.l.b16 %v1071
      %v1166 = vunpack.c.h.b16 %v1071
      %v1167 = vunpack.c.l.b16 %v1072
      %v1168 = vunpack.c.l.b16 %v1073
      %v1169 = vunpack.c.h.b16 %v1073
      %v1170 = vunpack.c.l.b16 %v1074
      %v1171 = vunpack.c.l.b16 %v1075
      %v1172 = vunpack.c.h.b16 %v1075
      %v1173 = vunpack.c.l.b16 %v1076
      %v1174 = vpack.c.b16 %v1129, %v1126
      %v1175 = vpack.c.b16 %v1130, %v1127
      %v1176 = vpack.c.b16 %v1131, %v1128
      %v1177 = vpack.c.b16 %v1135, %v1132
      %v1178 = vpack.c.b16 %v1136, %v1133
      %v1179 = vpack.c.b16 %v1137, %v1134
      %v1180 = vpack.c.b16 %v1141, %v1138
      %v1181 = vpack.c.b16 %v1142, %v1139
      %v1182 = vpack.c.b16 %v1143, %v1140
      %v1183 = vpack.c.b16 %v1147, %v1144
      %v1184 = vpack.c.b16 %v1148, %v1145
      %v1185 = vpack.c.b16 %v1149, %v1146
      %v1186 = vpack.c.b16 %v1153, %v1150
      %v1187 = vpack.c.b16 %v1154, %v1151
      %v1188 = vpack.c.b16 %v1155, %v1152
      %v1189 = vpack.c.b16 %v1159, %v1156
      %v1190 = vpack.c.b16 %v1160, %v1157
      %v1191 = vpack.c.b16 %v1161, %v1158
      %v1192 = vpack.c.b16 %v1165, %v1162
      %v1193 = vpack.c.b16 %v1166, %v1163
      %v1194 = vpack.c.b16 %v1167, %v1164
      %v1195 = vpack.c.b16 %v1171, %v1168
      %v1196 = vpack.c.b16 %v1172, %v1169
      %v1197 = vpack.c.b16 %v1173, %v1170
      %1222 = vmatprep.subr.bf16.mxu0 %v1196
      %1223 = vmatpush1.bf16.msra.mxu0 %v1195
      %1224 = vmatprep.subr.bf16.mxu0 %v1193
      %1225 = vmatpush1.bf16.msra.mxu0 %v1192
      %1226 = vmatprep.subr.bf16.mxu0 %v1190
      %1227 = vmatpush1.bf16.msra.mxu0 %v1189
      %1228 = vmatprep.subr.bf16.mxu0 %v1187
      %1229 = vmatpush1.bf16.msra.mxu0 %v1186
      %1230 = vmatprep.subr.bf16.mxu0 %v1184
      %1231 = vmatpush1.bf16.msra.mxu0 %v1183
      %1232 = vmatprep.subr.bf16.mxu0 %v1181
      %1233 = vmatpush1.bf16.msra.mxu0 %v1180
      %1234 = vmatprep.subr.bf16.mxu0 %v1178
      %1235 = vmatpush1.bf16.msra.mxu0 %v1177
      %1236 = vmatprep.subr.bf16.mxu0 %v1175
      %1237 = vmatpush1.bf16.msra.mxu0 %v1174
      %1238 = vmatprep.subr.bf16.mxu0 0
      %1239 = vmatpush2.bf16.msra.mxu0 0
      %1240 = vmatprep.subr.bf16.mxu0 0
      %1241 = vmatpush2.bf16.msra.mxu0 0
      %1242 = vmatprep.subr.bf16.mxu0 0
      %1243 = vmatpush2.bf16.msra.mxu0 0
      %1244 = vmatprep.subr.bf16.mxu0 0
      %1245 = vmatpush2.bf16.msra.mxu0 0
      %1246 = vmatprep.subr.bf16.mxu0 0
      %1247 = vmatpush2.bf16.msra.mxu0 0
      %1248 = vmatprep.subr.bf16.mxu0 0
      %1249 = vmatpush2.bf16.msra.mxu0 0
      %1250 = vmatprep.subr.bf16.mxu0 0
      %1251 = vmatpush2.bf16.msra.mxu0 0
      %1252 = vmatprep.subr.bf16.mxu0 0
      %1253 = vmatpush2.bf16.msra.mxu0 0
      %1254 = vmatprep.mubr.bf16.mxu0 0
      %1255 = vmatmul.mubr.bf16.gmra.mxu0 %v1037
      %v1256 = vpop.f32.mrf.mxu0
      %v1257 = vadd.f32 %v1082, %v1256
      %v1258 = vpop.f32.mrf.mxu0
      %v1259 = vadd.f32 %v1086, %v1258
      %v1260 = vpop.f32.mrf.mxu0
      %v1261 = vadd.f32 %v1082, %v1260
      %v1262 = vpop.f32.mrf.mxu0
      %v1263 = vadd.f32 %v1086, %v1262
      %1264 = vmatprep.mubr.bf16.mxu0 0
      %1265 = vmatmul.mubr.bf16.gmra.mxu0 %v1038
      %v1266 = vpop.f32.mrf.mxu0
      %v1267 = vadd.f32 %v1082, %v1266
      %v1268 = vpop.f32.mrf.mxu0
      %v1269 = vadd.f32 %v1086, %v1268
      %v1270 = vpop.f32.mrf.mxu0
      %v1271 = vadd.f32 %v1082, %v1270
      %v1272 = vpop.f32.mrf.mxu0
      %v1273 = vadd.f32 %v1086, %v1272
      %1274 = vmatprep.mubr.bf16.mxu0 0
      %1275 = vmatmul.mubr.bf16.gmra.mxu0 %v1039
      %v1276 = vpop.f32.mrf.mxu0
      %v1277 = vadd.f32 %v1082, %v1276
      %v1278 = vpop.f32.mrf.mxu0
      %v1279 = vadd.f32 %v1086, %v1278
      %v1280 = vpop.f32.mrf.mxu0
      %v1281 = vadd.f32 %v1082, %v1280
      %v1282 = vpop.f32.mrf.mxu0
      %v1283 = vadd.f32 %v1086, %v1282
      %1284 = vmatprep.mubr.bf16.mxu0 0
      %1285 = vmatmul.mubr.bf16.gmra.mxu0 %v1040
      %v1286 = vpop.f32.mrf.mxu0
      %v1287 = vadd.f32 %v1082, %v1286
      %v1288 = vpop.f32.mrf.mxu0
      %v1289 = vadd.f32 %v1086, %v1288
      %v1290 = vpop.f32.mrf.mxu0
      %v1291 = vadd.f32 %v1082, %v1290
      %v1292 = vpop.f32.mrf.mxu0
      %v1293 = vadd.f32 %v1086, %v1292
      %1294 = vmatprep.mubr.bf16.mxu0 0
      %1295 = vmatmul.mubr.bf16.gmra.mxu0 %v1041
      %v1296 = vpop.f32.mrf.mxu0
      %v1297 = vadd.f32 %v1082, %v1296
      %v1298 = vpop.f32.mrf.mxu0
      %v1299 = vadd.f32 %v1086, %v1298
      %v1300 = vpop.f32.mrf.mxu0
      %v1301 = vadd.f32 %v1082, %v1300
      %v1302 = vpop.f32.mrf.mxu0
      %v1303 = vadd.f32 %v1086, %v1302
      %1304 = vmatprep.mubr.bf16.mxu0 0
      %1305 = vmatmul.mubr.bf16.gmra.mxu0 %v1042
      %v1306 = vpop.f32.mrf.mxu0
      %v1307 = vadd.f32 %v1082, %v1306
      %v1308 = vpop.f32.mrf.mxu0
      %v1309 = vadd.f32 %v1086, %v1308
      %v1310 = vpop.f32.mrf.mxu0
      %v1311 = vadd.f32 %v1082, %v1310
      %v1312 = vpop.f32.mrf.mxu0
      %v1313 = vadd.f32 %v1086, %v1312
      %1314 = vmatprep.mubr.bf16.mxu0 0
      %1315 = vmatmul.mubr.bf16.gmra.mxu0 %v1043
      %v1316 = vpop.f32.mrf.mxu0
      %v1317 = vadd.f32 %v1082, %v1316
      %v1318 = vpop.f32.mrf.mxu0
      %v1319 = vadd.f32 %v1086, %v1318
      %v1320 = vpop.f32.mrf.mxu0
      %v1321 = vadd.f32 %v1082, %v1320
      %v1322 = vpop.f32.mrf.mxu0
      %v1323 = vadd.f32 %v1086, %v1322
      %1324 = vmatprep.mubr.bf16.mxu0 0
      %1325 = vmatmul.mubr.bf16.gmra.mxu0 %v1044
      %v1326 = vpop.f32.mrf.mxu0
      %v1327 = vadd.f32 %v1082, %v1326
      %v1328 = vpop.f32.mrf.mxu0
      %v1329 = vadd.f32 %v1086, %v1328
      %v1330 = vpop.f32.mrf.mxu0
      %v1331 = vadd.f32 %v1082, %v1330
      %v1332 = vpop.f32.mrf.mxu0
      %v1333 = vadd.f32 %v1086, %v1332
      %1334 = vdwg.mxu0
      %1335 = vmatprep.subr.bf16.mxu0 0
      %1336 = vmatpush1.bf16.msra.mxu0 %v1197
      %1337 = vmatprep.subr.bf16.mxu0 0
      %1338 = vmatpush1.bf16.msra.mxu0 %v1194
      %1339 = vmatprep.subr.bf16.mxu0 0
      %1340 = vmatpush1.bf16.msra.mxu0 %v1191
      %1341 = vmatprep.subr.bf16.mxu0 0
      %1342 = vmatpush1.bf16.msra.mxu0 %v1188
      %1343 = vmatprep.subr.bf16.mxu0 0
      %1344 = vmatpush1.bf16.msra.mxu0 %v1185
      %1345 = vmatprep.subr.bf16.mxu0 0
      %1346 = vmatpush1.bf16.msra.mxu0 %v1182
      %1347 = vmatprep.subr.bf16.mxu0 0
      %1348 = vmatpush1.bf16.msra.mxu0 %v1179
      %1349 = vmatprep.subr.bf16.mxu0 0
      %1350 = vmatpush1.bf16.msra.mxu0 %v1176
      %1351 = vmatprep.subr.bf16.mxu0 0
      %1352 = vmatpush2.bf16.msra.mxu0 0
      %1353 = vmatprep.subr.bf16.mxu0 0
      %1354 = vmatpush2.bf16.msra.mxu0 0
      %1355 = vmatprep.subr.bf16.mxu0 0
      %1356 = vmatpush2.bf16.msra.mxu0 0
      %1357 = vmatprep.subr.bf16.mxu0 0
      %1358 = vmatpush2.bf16.msra.mxu0 0
      %1359 = vmatprep.subr.bf16.mxu0 0
      %1360 = vmatpush2.bf16.msra.mxu0 0
      %1361 = vmatprep.subr.bf16.mxu0 0
      %1362 = vmatpush2.bf16.msra.mxu0 0
      %1363 = vmatprep.subr.bf16.mxu0 0
      %1364 = vmatpush2.bf16.msra.mxu0 0
      %1365 = vmatprep.subr.bf16.mxu0 0
      %1366 = vmatpush2.bf16.msra.mxu0 0
      %1367 = vmatprep.mubr.bf16.mxu0 0
      %1368 = vmatmul.mubr.bf16.gmra.mxu0 %v1037
      %v1369 = vpop.f32.mrf.mxu0
      %v1370 = vadd.f32 %v1090, %v1369
      %v1371 = vpop.f32.mrf.mxu0
      %v1372 = vpop.f32.mrf.mxu0
      %v1373 = vadd.f32 %v1090, %v1372
      %v1374 = vpop.f32.mrf.mxu0
      %1375 = vmatprep.mubr.bf16.mxu0 0
      %1376 = vmatmul.mubr.bf16.gmra.mxu0 %v1038
      %v1377 = vpop.f32.mrf.mxu0
      %v1378 = vadd.f32 %v1090, %v1377
      %v1379 = vpop.f32.mrf.mxu0
      %v1380 = vpop.f32.mrf.mxu0
      %v1381 = vadd.f32 %v1090, %v1380
      %v1382 = vpop.f32.mrf.mxu0
      %1383 = vmatprep.mubr.bf16.mxu0 0
      %1384 = vmatmul.mubr.bf16.gmra.mxu0 %v1039
      %v1385 = vpop.f32.mrf.mxu0
      %v1386 = vadd.f32 %v1090, %v1385
      %v1387 = vpop.f32.mrf.mxu0
      %v1388 = vpop.f32.mrf.mxu0
      %v1389 = vadd.f32 %v1090, %v1388
      %v1390 = vpop.f32.mrf.mxu0
      %1391 = vmatprep.mubr.bf16.mxu0 0
      %1392 = vmatmul.mubr.bf16.gmra.mxu0 %v1040
      %v1393 = vpop.f32.mrf.mxu0
      %v1394 = vadd.f32 %v1090, %v1393
      %v1395 = vpop.f32.mrf.mxu0
      %v1396 = vpop.f32.mrf.mxu0
      %v1397 = vadd.f32 %v1090, %v1396
      %v1398 = vpop.f32.mrf.mxu0
      %1399 = vmatprep.mubr.bf16.mxu0 0
      %1400 = vmatmul.mubr.bf16.gmra.mxu0 %v1041
      %v1401 = vpop.f32.mrf.mxu0
      %v1402 = vadd.f32 %v1090, %v1401
      %v1403 = vpop.f32.mrf.mxu0
      %v1404 = vpop.f32.mrf.mxu0
      %v1405 = vadd.f32 %v1090, %v1404
      %v1406 = vpop.f32.mrf.mxu0
      %1407 = vmatprep.mubr.bf16.mxu0 0
      %1408 = vmatmul.mubr.bf16.gmra.mxu0 %v1042
      %v1409 = vpop.f32.mrf.mxu0
      %v1410 = vadd.f32 %v1090, %v1409
      %v1411 = vpop.f32.mrf.mxu0
      %v1412 = vpop.f32.mrf.mxu0
      %v1413 = vadd.f32 %v1090, %v1412
      %v1414 = vpop.f32.mrf.mxu0
      %1415 = vmatprep.mubr.bf16.mxu0 0
      %1416 = vmatmul.mubr.bf16.gmra.mxu0 %v1043
      %v1417 = vpop.f32.mrf.mxu0
      %v1418 = vadd.f32 %v1090, %v1417
      %v1419 = vpop.f32.mrf.mxu0
      %v1420 = vpop.f32.mrf.mxu0
      %v1421 = vadd.f32 %v1090, %v1420
      %v1422 = vpop.f32.mrf.mxu0
      %1423 = vmatprep.mubr.bf16.mxu0 0
      %1424 = vmatmul.mubr.bf16.gmra.mxu0 %v1044
      %v1425 = vpop.f32.mrf.mxu0
      %v1426 = vadd.f32 %v1090, %v1425
      %v1427 = vpop.f32.mrf.mxu0
      %v1428 = vpop.f32.mrf.mxu0
      %v1429 = vadd.f32 %v1090, %v1428
      %v1430 = vpop.f32.mrf.mxu0
      %1431 = vdwg.mxu0
      %v1432 = vpack.c.bf16 %v293, %v292
      %v1433 = vpack.c.bf16 %v295, %v294
      %v1434 = vpack.c.bf16 %v297, %v296
      %v1435 = vpack.c.bf16 %v299, %v298
      %v1436 = vpack.c.bf16 %v301, %v300
      %v1437 = vpack.c.bf16 %v303, %v302
      %v1438 = vpack.c.bf16 %v305, %v304
      %v1439 = vpack.c.bf16 %v307, %v306
      %v1440 = vld [vmem:[%s9] sm:$0xff]
      %v1441 = vld [vmem:[%s9 + $0x8] sm:$0xf]
      %v1442 = vld [vmem:[%s9 + $0xc] sm:$0xff]
      %v1443 = vld [vmem:[%s9 + $0x14] sm:$0xf]
      %v1444 = vld [vmem:[%s9 + $0x18] sm:$0xff]
      %v1445 = vld [vmem:[%s9 + $0x20] sm:$0xf]
      %v1446 = vld [vmem:[%s9 + $0x24] sm:$0xff]
      %v1447 = vld [vmem:[%s9 + $0x2c] sm:$0xf]
      %v1448 = vld [vmem:[#allocation16] sm:$0x7]
      %v1450 = vlaneseq
      %v1451 = vshrl.u32 %v1450, 7
      %v1452 = vsub.s32 0, %v1451
      %v1453 = vrot.slane %v1448, %v1452
      %v1454 = vlaneseq
      %v1455 = vshrl.u32 %v1454, 7
      %v1456 = vsub.s32 1, %v1455
      %v1457 = vrot.slane %v1448, %v1456
      %v1458 = vlaneseq
      %v1459 = vshrl.u32 %v1458, 7
      %v1460 = vsub.s32 2, %v1459
      %v1461 = vrot.slane %v1448, %v1460
      %v1473 = vunpack.c.l.b16 %v1440
      %v1474 = vunpack.c.h.b16 %v1440
      %v1475 = vunpack.c.l.b16 %v1441
      %v1476 = vunpack.c.l.b16 %v1442
      %v1477 = vunpack.c.h.b16 %v1442
      %v1478 = vunpack.c.l.b16 %v1443
      %v1479 = vunpack.c.l.b16 %v1444
      %v1480 = vunpack.c.h.b16 %v1444
      %v1481 = vunpack.c.l.b16 %v1445
      %v1482 = vunpack.c.l.b16 %v1446
      %v1483 = vunpack.c.h.b16 %v1446
      %v1484 = vunpack.c.l.b16 %v1447
      %v1485 = vpack.c.b16 %v1476, %v1473
      %v1486 = vpack.c.b16 %v1477, %v1474
      %v1487 = vpack.c.b16 %v1478, %v1475
      %v1488 = vpack.c.b16 %v1482, %v1479
      %v1489 = vpack.c.b16 %v1483, %v1480
      %v1490 = vpack.c.b16 %v1484, %v1481
      %vm1497 = vcmask 261120
      %v1499 = vsel %vm1497, %v1432, 0
      %v1502 = vsel %vm1497, %v1433, 0
      %v1505 = vsel %vm1497, %v1434, 0
      %v1508 = vsel %vm1497, %v1435, 0
      %v1511 = vsel %vm1497, %v1436, 0
      %v1514 = vsel %vm1497, %v1437, 0
      %v1517 = vsel %vm1497, %v1438, 0
      %v1520 = vsel %vm1497, %v1439, 0
      %1522 = vmatprep.subr.bf16.mxu0 0
      %1523 = vmatpush1.bf16.msra.mxu0 0
      %1524 = vmatprep.subr.bf16.mxu0 0
      %1525 = vmatpush1.bf16.msra.mxu0 0
      %1526 = vmatprep.subr.bf16.mxu0 0
      %1527 = vmatpush1.bf16.msra.mxu0 0
      %1528 = vmatprep.subr.bf16.mxu0 0
      %1529 = vmatpush1.bf16.msra.mxu0 0
      %1530 = vmatprep.subr.bf16.mxu0 0
      %1531 = vmatpush1.bf16.msra.mxu0 0
      %1532 = vmatprep.subr.bf16.mxu0 0
      %1533 = vmatpush1.bf16.msra.mxu0 0
      %1534 = vmatprep.subr.bf16.mxu0 %v1489
      %1535 = vmatpush1.bf16.msra.mxu0 %v1488
      %1536 = vmatprep.subr.bf16.mxu0 %v1486
      %1537 = vmatpush1.bf16.msra.mxu0 %v1485
      %1538 = vmatprep.subr.bf16.mxu0 0
      %1539 = vmatpush2.bf16.msra.mxu0 0
      %1540 = vmatprep.subr.bf16.mxu0 0
      %1541 = vmatpush2.bf16.msra.mxu0 0
      %1542 = vmatprep.subr.bf16.mxu0 0
      %1543 = vmatpush2.bf16.msra.mxu0 0
      %1544 = vmatprep.subr.bf16.mxu0 0
      %1545 = vmatpush2.bf16.msra.mxu0 0
      %1546 = vmatprep.subr.bf16.mxu0 0
      %1547 = vmatpush2.bf16.msra.mxu0 0
      %1548 = vmatprep.subr.bf16.mxu0 0
      %1549 = vmatpush2.bf16.msra.mxu0 0
      %1550 = vmatprep.subr.bf16.mxu0 0
      %1551 = vmatpush2.bf16.msra.mxu0 0
      %1552 = vmatprep.subr.bf16.mxu0 0
      %1553 = vmatpush2.bf16.msra.mxu0 0
      %1554 = vmatprep.mubr.bf16.mxu0 0
      %1555 = vmatmul.mubr.bf16.gmra.mxu0 %v1499
      %v1556 = vpop.f32.mrf.mxu0
      %v1557 = vadd.f32 %v1453, %v1556
      %v1558 = vpop.f32.mrf.mxu0
      %v1559 = vadd.f32 %v1457, %v1558
      %v1560 = vpop.f32.mrf.mxu0
      %v1561 = vadd.f32 %v1453, %v1560
      %v1562 = vpop.f32.mrf.mxu0
      %v1563 = vadd.f32 %v1457, %v1562
      %1564 = vmatprep.mubr.bf16.mxu0 0
      %1565 = vmatmul.mubr.bf16.gmra.mxu0 %v1502
      %v1566 = vpop.f32.mrf.mxu0
      %v1567 = vadd.f32 %v1453, %v1566
      %v1568 = vpop.f32.mrf.mxu0
      %v1569 = vadd.f32 %v1457, %v1568
      %v1570 = vpop.f32.mrf.mxu0
      %v1571 = vadd.f32 %v1453, %v1570
      %v1572 = vpop.f32.mrf.mxu0
      %v1573 = vadd.f32 %v1457, %v1572
      %1574 = vmatprep.mubr.bf16.mxu0 0
      %1575 = vmatmul.mubr.bf16.gmra.mxu0 %v1505
      %v1576 = vpop.f32.mrf.mxu0
      %v1577 = vadd.f32 %v1453, %v1576
      %v1578 = vpop.f32.mrf.mxu0
      %v1579 = vadd.f32 %v1457, %v1578
      %v1580 = vpop.f32.mrf.mxu0
      %v1581 = vadd.f32 %v1453, %v1580
      %v1582 = vpop.f32.mrf.mxu0
      %v1583 = vadd.f32 %v1457, %v1582
      %1584 = vmatprep.mubr.bf16.mxu0 0
      %1585 = vmatmul.mubr.bf16.gmra.mxu0 %v1508
      %v1586 = vpop.f32.mrf.mxu0
      %v1587 = vadd.f32 %v1453, %v1586
      %v1588 = vpop.f32.mrf.mxu0
      %v1589 = vadd.f32 %v1457, %v1588
      %v1590 = vpop.f32.mrf.mxu0
      %v1591 = vadd.f32 %v1453, %v1590
      %v1592 = vpop.f32.mrf.mxu0
      %v1593 = vadd.f32 %v1457, %v1592
      %1594 = vmatprep.mubr.bf16.mxu0 0
      %1595 = vmatmul.mubr.bf16.gmra.mxu0 %v1511
      %v1596 = vpop.f32.mrf.mxu0
      %v1597 = vadd.f32 %v1453, %v1596
      %v1598 = vpop.f32.mrf.mxu0
      %v1599 = vadd.f32 %v1457, %v1598
      %v1600 = vpop.f32.mrf.mxu0
      %v1601 = vadd.f32 %v1453, %v1600
      %v1602 = vpop.f32.mrf.mxu0
      %v1603 = vadd.f32 %v1457, %v1602
      %1604 = vmatprep.mubr.bf16.mxu0 0
      %1605 = vmatmul.mubr.bf16.gmra.mxu0 %v1514
      %v1606 = vpop.f32.mrf.mxu0
      %v1607 = vadd.f32 %v1453, %v1606
      %v1608 = vpop.f32.mrf.mxu0
      %v1609 = vadd.f32 %v1457, %v1608
      %v1610 = vpop.f32.mrf.mxu0
      %v1611 = vadd.f32 %v1453, %v1610
      %v1612 = vpop.f32.mrf.mxu0
      %v1613 = vadd.f32 %v1457, %v1612
      %1614 = vmatprep.mubr.bf16.mxu0 0
      %1615 = vmatmul.mubr.bf16.gmra.mxu0 %v1517
      %v1616 = vpop.f32.mrf.mxu0
      %v1617 = vadd.f32 %v1453, %v1616
      %v1618 = vpop.f32.mrf.mxu0
      %v1619 = vadd.f32 %v1457, %v1618
      %v1620 = vpop.f32.mrf.mxu0
      %v1621 = vadd.f32 %v1453, %v1620
      %v1622 = vpop.f32.mrf.mxu0
      %v1623 = vadd.f32 %v1457, %v1622
      %1624 = vmatprep.mubr.bf16.mxu0 0
      %1625 = vmatmul.mubr.bf16.gmra.mxu0 %v1520
      %v1626 = vpop.f32.mrf.mxu0
      %v1627 = vadd.f32 %v1453, %v1626
      %v1628 = vpop.f32.mrf.mxu0
      %v1629 = vadd.f32 %v1457, %v1628
      %v1630 = vpop.f32.mrf.mxu0
      %v1631 = vadd.f32 %v1453, %v1630
      %v1632 = vpop.f32.mrf.mxu0
      %v1633 = vadd.f32 %v1457, %v1632
      %1634 = vdwg.mxu0
      %1635 = vmatprep.subr.bf16.mxu0 0
      %1636 = vmatpush1.bf16.msra.mxu0 0
      %1637 = vmatprep.subr.bf16.mxu0 0
      %1638 = vmatpush1.bf16.msra.mxu0 0
      %1639 = vmatprep.subr.bf16.mxu0 0
      %1640 = vmatpush1.bf16.msra.mxu0 0
      %1641 = vmatprep.subr.bf16.mxu0 0
      %1642 = vmatpush1.bf16.msra.mxu0 0
      %1643 = vmatprep.subr.bf16.mxu0 0
      %1644 = vmatpush1.bf16.msra.mxu0 0
      %1645 = vmatprep.subr.bf16.mxu0 0
      %1646 = vmatpush1.bf16.msra.mxu0 0
      %1647 = vmatprep.subr.bf16.mxu0 0
      %1648 = vmatpush1.bf16.msra.mxu0 %v1490
      %1649 = vmatprep.subr.bf16.mxu0 0
      %1650 = vmatpush1.bf16.msra.mxu0 %v1487
      %1651 = vmatprep.subr.bf16.mxu0 0
      %1652 = vmatpush2.bf16.msra.mxu0 0
      %1653 = vmatprep.subr.bf16.mxu0 0
      %1654 = vmatpush2.bf16.msra.mxu0 0
      %1655 = vmatprep.subr.bf16.mxu0 0
      %1656 = vmatpush2.bf16.msra.mxu0 0
      %1657 = vmatprep.subr.bf16.mxu0 0
      %1658 = vmatpush2.bf16.msra.mxu0 0
      %1659 = vmatprep.subr.bf16.mxu0 0
      %1660 = vmatpush2.bf16.msra.mxu0 0
      %1661 = vmatprep.subr.bf16.mxu0 0
      %1662 = vmatpush2.bf16.msra.mxu0 0
      %1663 = vmatprep.subr.bf16.mxu0 0
      %1664 = vmatpush2.bf16.msra.mxu0 0
      %1665 = vmatprep.subr.bf16.mxu0 0
      %1666 = vmatpush2.bf16.msra.mxu0 0
      %1667 = vmatprep.mubr.bf16.mxu0 0
      %1668 = vmatmul.mubr.bf16.gmra.mxu0 %v1499
      %v1669 = vpop.f32.mrf.mxu0
      %v1670 = vadd.f32 %v1461, %v1669
      %v1671 = vpop.f32.mrf.mxu0
      %v1672 = vpop.f32.mrf.mxu0
      %v1673 = vadd.f32 %v1461, %v1672
      %v1674 = vpop.f32.mrf.mxu0
      %1675 = vmatprep.mubr.bf16.mxu0 0
      %1676 = vmatmul.mubr.bf16.gmra.mxu0 %v1502
      %v1677 = vpop.f32.mrf.mxu0
      %v1678 = vadd.f32 %v1461, %v1677
      %v1679 = vpop.f32.mrf.mxu0
      %v1680 = vpop.f32.mrf.mxu0
      %v1681 = vadd.f32 %v1461, %v1680
      %v1682 = vpop.f32.mrf.mxu0
      %1683 = vmatprep.mubr.bf16.mxu0 0
      %1684 = vmatmul.mubr.bf16.gmra.mxu0 %v1505
      %v1685 = vpop.f32.mrf.mxu0
      %v1686 = vadd.f32 %v1461, %v1685
      %v1687 = vpop.f32.mrf.mxu0
      %v1688 = vpop.f32.mrf.mxu0
      %v1689 = vadd.f32 %v1461, %v1688
      %v1690 = vpop.f32.mrf.mxu0
      %1691 = vmatprep.mubr.bf16.mxu0 0
      %1692 = vmatmul.mubr.bf16.gmra.mxu0 %v1508
      %v1693 = vpop.f32.mrf.mxu0
      %v1694 = vadd.f32 %v1461, %v1693
      %v1695 = vpop.f32.mrf.mxu0
      %v1696 = vpop.f32.mrf.mxu0
      %v1697 = vadd.f32 %v1461, %v1696
      %v1698 = vpop.f32.mrf.mxu0
      %1699 = vmatprep.mubr.bf16.mxu0 0
      %1700 = vmatmul.mubr.bf16.gmra.mxu0 %v1511
      %v1701 = vpop.f32.mrf.mxu0
      %v1702 = vadd.f32 %v1461, %v1701
      %v1703 = vpop.f32.mrf.mxu0
      %v1704 = vpop.f32.mrf.mxu0
      %v1705 = vadd.f32 %v1461, %v1704
      %v1706 = vpop.f32.mrf.mxu0
      %1707 = vmatprep.mubr.bf16.mxu0 0
      %1708 = vmatmul.mubr.bf16.gmra.mxu0 %v1514
      %v1709 = vpop.f32.mrf.mxu0
      %v1710 = vadd.f32 %v1461, %v1709
      %v1711 = vpop.f32.mrf.mxu0
      %v1712 = vpop.f32.mrf.mxu0
      %v1713 = vadd.f32 %v1461, %v1712
      %v1714 = vpop.f32.mrf.mxu0
      %1715 = vmatprep.mubr.bf16.mxu0 0
      %1716 = vmatmul.mubr.bf16.gmra.mxu0 %v1517
      %v1717 = vpop.f32.mrf.mxu0
      %v1718 = vadd.f32 %v1461, %v1717
      %v1719 = vpop.f32.mrf.mxu0
      %v1720 = vpop.f32.mrf.mxu0
      %v1721 = vadd.f32 %v1461, %v1720
      %v1722 = vpop.f32.mrf.mxu0
      %1723 = vmatprep.mubr.bf16.mxu0 0
      %1724 = vmatmul.mubr.bf16.gmra.mxu0 %v1520
      %v1725 = vpop.f32.mrf.mxu0
      %v1726 = vadd.f32 %v1461, %v1725
      %v1727 = vpop.f32.mrf.mxu0
      %v1728 = vpop.f32.mrf.mxu0
      %v1729 = vadd.f32 %v1461, %v1728
      %v1730 = vpop.f32.mrf.mxu0
      %1731 = vdwg.mxu0
      %v1732 = vmul.f32 %v1557, %v1257
      %v1733 = vmul.f32 %v1559, %v1259
      %v1734 = vmul.f32 %v1670, %v1370
      %v1735 = vmul.f32 %v1561, %v1261
      %v1736 = vmul.f32 %v1563, %v1263
      %v1737 = vmul.f32 %v1673, %v1373
      %v1738 = vmul.f32 %v1567, %v1267
      %v1739 = vmul.f32 %v1569, %v1269
      %v1740 = vmul.f32 %v1678, %v1378
      %v1741 = vmul.f32 %v1571, %v1271
      %v1742 = vmul.f32 %v1573, %v1273
      %v1743 = vmul.f32 %v1681, %v1381
      %v1744 = vmul.f32 %v1577, %v1277
      %v1745 = vmul.f32 %v1579, %v1279
      %v1746 = vmul.f32 %v1686, %v1386
      %v1747 = vmul.f32 %v1581, %v1281
      %v1748 = vmul.f32 %v1583, %v1283
      %v1749 = vmul.f32 %v1689, %v1389
      %v1750 = vmul.f32 %v1587, %v1287
      %v1751 = vmul.f32 %v1589, %v1289
      %v1752 = vmul.f32 %v1694, %v1394
      %v1753 = vmul.f32 %v1591, %v1291
      %v1754 = vmul.f32 %v1593, %v1293
      %v1755 = vmul.f32 %v1697, %v1397
      %v1756 = vmul.f32 %v1597, %v1297
      %v1757 = vmul.f32 %v1599, %v1299
      %v1758 = vmul.f32 %v1702, %v1402
      %v1759 = vmul.f32 %v1601, %v1301
      %v1760 = vmul.f32 %v1603, %v1303
      %v1761 = vmul.f32 %v1705, %v1405
      %v1762 = vmul.f32 %v1607, %v1307
      %v1763 = vmul.f32 %v1609, %v1309
      %v1764 = vmul.f32 %v1710, %v1410
      %v1765 = vmul.f32 %v1611, %v1311
      %v1766 = vmul.f32 %v1613, %v1313
      %v1767 = vmul.f32 %v1713, %v1413
      %v1768 = vmul.f32 %v1617, %v1317
      %v1769 = vmul.f32 %v1619, %v1319
      %v1770 = vmul.f32 %v1718, %v1418
      %v1771 = vmul.f32 %v1621, %v1321
      %v1772 = vmul.f32 %v1623, %v1323
      %v1773 = vmul.f32 %v1721, %v1421
      %v1774 = vmul.f32 %v1627, %v1327
      %v1775 = vmul.f32 %v1629, %v1329
      %v1776 = vmul.f32 %v1726, %v1426
      %v1777 = vmul.f32 %v1631, %v1331
      %v1778 = vmul.f32 %v1633, %v1333
      %v1779 = vmul.f32 %v1729, %v1429
      %v1780 = vmul.f32 %v1732, %v560
      %v1781 = vmul.f32 %v1735, %v564
      %v1782 = vmul.f32 %v1738, %v570
      %v1783 = vmul.f32 %v1741, %v574
      %v1784 = vmul.f32 %v1744, %v580
      %v1785 = vmul.f32 %v1747, %v584
      %v1786 = vmul.f32 %v1750, %v590
      %v1787 = vmul.f32 %v1753, %v594
      %v1788 = vmul.f32 %v1756, %v600
      %v1789 = vmul.f32 %v1759, %v604
      %v1790 = vmul.f32 %v1762, %v610
      %v1791 = vmul.f32 %v1765, %v614
      %v1792 = vmul.f32 %v1768, %v620
      %v1793 = vmul.f32 %v1771, %v624
      %v1794 = vmul.f32 %v1774, %v630
      %v1795 = vmul.f32 %v1777, %v634
      %1797 = vset.pattern.permute.xlu0 20
      %1798 = vperm.xlu0 %1797, %v292
      %v1799 = vpop.permute.xlu0 %1798
      %1802 = vset.pattern.permute.xlu0 20
      %1803 = vperm.xlu0 %1802, %v293
      %v1804 = vpop.permute.xlu0 %1803
      %1807 = vset.pattern.permute.xlu0 20
      %1808 = vperm.xlu0 %1807, %v294
      %v1809 = vpop.permute.xlu0 %1808
      %1812 = vset.pattern.permute.xlu0 20
      %1813 = vperm.xlu0 %1812, %v295
      %v1814 = vpop.permute.xlu0 %1813
      %1817 = vset.pattern.permute.xlu0 20
      %1818 = vperm.xlu0 %1817, %v296
      %v1819 = vpop.permute.xlu0 %1818
      %1822 = vset.pattern.permute.xlu0 20
      %1823 = vperm.xlu0 %1822, %v297
      %v1824 = vpop.permute.xlu0 %1823
      %1827 = vset.pattern.permute.xlu0 20
      %1828 = vperm.xlu0 %1827, %v298
      %v1829 = vpop.permute.xlu0 %1828
      %1832 = vset.pattern.permute.xlu0 20
      %1833 = vperm.xlu0 %1832, %v299
      %v1834 = vpop.permute.xlu0 %1833
      %1837 = vset.pattern.permute.xlu0 20
      %1838 = vperm.xlu0 %1837, %v300
      %v1839 = vpop.permute.xlu0 %1838
      %1842 = vset.pattern.permute.xlu0 20
      %1843 = vperm.xlu0 %1842, %v301
      %v1844 = vpop.permute.xlu0 %1843
      %1847 = vset.pattern.permute.xlu0 20
      %1848 = vperm.xlu0 %1847, %v302
      %v1849 = vpop.permute.xlu0 %1848
      %1852 = vset.pattern.permute.xlu0 20
      %1853 = vperm.xlu0 %1852, %v303
      %v1854 = vpop.permute.xlu0 %1853
      %1857 = vset.pattern.permute.xlu0 20
      %1858 = vperm.xlu0 %1857, %v304
      %v1859 = vpop.permute.xlu0 %1858
      %1862 = vset.pattern.permute.xlu0 20
      %1863 = vperm.xlu0 %1862, %v305
      %v1864 = vpop.permute.xlu0 %1863
      %1867 = vset.pattern.permute.xlu0 20
      %1868 = vperm.xlu0 %1867, %v306
      %v1869 = vpop.permute.xlu0 %1868
      %1872 = vset.pattern.permute.xlu0 20
      %1873 = vperm.xlu0 %1872, %v307
      %v1874 = vpop.permute.xlu0 %1873
      %v1876 = vmul.f32 %v1799, %v1734
      %v1877 = vmul.f32 %v1804, %v1737
      %v1878 = vmul.f32 %v1809, %v1740
      %v1879 = vmul.f32 %v1814, %v1743
      %v1880 = vmul.f32 %v1819, %v1746
      %v1881 = vmul.f32 %v1824, %v1749
      %v1882 = vmul.f32 %v1829, %v1752
      %v1883 = vmul.f32 %v1834, %v1755
      %v1884 = vmul.f32 %v1839, %v1758
      %v1885 = vmul.f32 %v1844, %v1761
      %v1886 = vmul.f32 %v1849, %v1764
      %v1887 = vmul.f32 %v1854, %v1767
      %v1888 = vmul.f32 %v1859, %v1770
      %v1889 = vmul.f32 %v1864, %v1773
      %v1890 = vmul.f32 %v1869, %v1776
      %v1891 = vmul.f32 %v1874, %v1779
      %v1892 = vadd.f32 %v1780, %v1876
      %v1893 = vadd.f32 %v1781, %v1877
      %v1894 = vadd.f32 %v1782, %v1878
      %v1895 = vadd.f32 %v1783, %v1879
      %v1896 = vadd.f32 %v1784, %v1880
      %v1897 = vadd.f32 %v1785, %v1881
      %v1898 = vadd.f32 %v1786, %v1882
      %v1899 = vadd.f32 %v1787, %v1883
      %v1900 = vadd.f32 %v1788, %v1884
      %v1901 = vadd.f32 %v1789, %v1885
      %v1902 = vadd.f32 %v1790, %v1886
      %v1903 = vadd.f32 %v1791, %v1887
      %v1904 = vadd.f32 %v1792, %v1888
      %v1905 = vadd.f32 %v1793, %v1889
      %v1906 = vadd.f32 %v1794, %v1890
      %v1907 = vadd.f32 %v1795, %v1891
      %v1908 = vmul.f32 %v1732, %v671
      %v1909 = vmul.f32 %v1735, %v675
      %v1910 = vmul.f32 %v1738, %v681
      %v1911 = vmul.f32 %v1741, %v685
      %v1912 = vmul.f32 %v1744, %v691
      %v1913 = vmul.f32 %v1747, %v695
      %v1914 = vmul.f32 %v1750, %v701
      %v1915 = vmul.f32 %v1753, %v705
      %v1916 = vmul.f32 %v1756, %v711
      %v1917 = vmul.f32 %v1759, %v715
      %v1918 = vmul.f32 %v1762, %v721
      %v1919 = vmul.f32 %v1765, %v725
      %v1920 = vmul.f32 %v1768, %v731
      %v1921 = vmul.f32 %v1771, %v735
      %v1922 = vmul.f32 %v1774, %v741
      %v1923 = vmul.f32 %v1777, %v745
      %1924 = vset.pattern.permute.xlu0 21
      %1925 = vperm.xlu0 %1924, %v292
      %v1926 = vpop.permute.xlu0 %1925
      %1928 = vset.pattern.permute.xlu0 21
      %1929 = vperm.xlu0 %1928, %v293
      %v1930 = vpop.permute.xlu0 %1929
      %1932 = vset.pattern.permute.xlu0 21
      %1933 = vperm.xlu0 %1932, %v294
      %v1934 = vpop.permute.xlu0 %1933
      %1936 = vset.pattern.permute.xlu0 21
      %1937 = vperm.xlu0 %1936, %v295
      %v1938 = vpop.permute.xlu0 %1937
      %1940 = vset.pattern.permute.xlu0 21
      %1941 = vperm.xlu0 %1940, %v296
      %v1942 = vpop.permute.xlu0 %1941
      %1944 = vset.pattern.permute.xlu0 21
      %1945 = vperm.xlu0 %1944, %v297
      %v1946 = vpop.permute.xlu0 %1945
      %1948 = vset.pattern.permute.xlu0 21
      %1949 = vperm.xlu0 %1948, %v298
      %v1950 = vpop.permute.xlu0 %1949
      %1952 = vset.pattern.permute.xlu0 21
      %1953 = vperm.xlu0 %1952, %v299
      %v1954 = vpop.permute.xlu0 %1953
      %1956 = vset.pattern.permute.xlu0 21
      %1957 = vperm.xlu0 %1956, %v300
      %v1958 = vpop.permute.xlu0 %1957
      %1960 = vset.pattern.permute.xlu0 21
      %1961 = vperm.xlu0 %1960, %v301
      %v1962 = vpop.permute.xlu0 %1961
      %1964 = vset.pattern.permute.xlu0 21
      %1965 = vperm.xlu0 %1964, %v302
      %v1966 = vpop.permute.xlu0 %1965
      %1968 = vset.pattern.permute.xlu0 21
      %1969 = vperm.xlu0 %1968, %v303
      %v1970 = vpop.permute.xlu0 %1969
      %1972 = vset.pattern.permute.xlu0 21
      %1973 = vperm.xlu0 %1972, %v304
      %v1974 = vpop.permute.xlu0 %1973
      %1976 = vset.pattern.permute.xlu0 21
      %1977 = vperm.xlu0 %1976, %v305
      %v1978 = vpop.permute.xlu0 %1977
      %1980 = vset.pattern.permute.xlu0 21
      %1981 = vperm.xlu0 %1980, %v306
      %v1982 = vpop.permute.xlu0 %1981
      %1984 = vset.pattern.permute.xlu0 21
      %1985 = vperm.xlu0 %1984, %v307
      %v1986 = vpop.permute.xlu0 %1985
      %v1988 = vmul.f32 %v1926, %v1734
      %v1989 = vmul.f32 %v1930, %v1737
      %v1990 = vmul.f32 %v1934, %v1740
      %v1991 = vmul.f32 %v1938, %v1743
      %v1992 = vmul.f32 %v1942, %v1746
      %v1993 = vmul.f32 %v1946, %v1749
      %v1994 = vmul.f32 %v1950, %v1752
      %v1995 = vmul.f32 %v1954, %v1755
      %v1996 = vmul.f32 %v1958, %v1758
      %v1997 = vmul.f32 %v1962, %v1761
      %v1998 = vmul.f32 %v1966, %v1764
      %v1999 = vmul.f32 %v1970, %v1767
      %v2000 = vmul.f32 %v1974, %v1770
      %v2001 = vmul.f32 %v1978, %v1773
      %v2002 = vmul.f32 %v1982, %v1776
      %v2003 = vmul.f32 %v1986, %v1779
      %v2004 = vadd.f32 %v1908, %v1988
      %v2005 = vadd.f32 %v1909, %v1989
      %v2006 = vadd.f32 %v1910, %v1990
      %v2007 = vadd.f32 %v1911, %v1991
      %v2008 = vadd.f32 %v1912, %v1992
      %v2009 = vadd.f32 %v1913, %v1993
      %v2010 = vadd.f32 %v1914, %v1994
      %v2011 = vadd.f32 %v1915, %v1995
      %v2012 = vadd.f32 %v1916, %v1996
      %v2013 = vadd.f32 %v1917, %v1997
      %v2014 = vadd.f32 %v1918, %v1998
      %v2015 = vadd.f32 %v1919, %v1999
      %v2016 = vadd.f32 %v1920, %v2000
      %v2017 = vadd.f32 %v1921, %v2001
      %v2018 = vadd.f32 %v1922, %v2002
      %v2019 = vadd.f32 %v1923, %v2003
      %v2020 = vmul.f32 %v1732, %v673
      %v2021 = vmul.f32 %v1735, %v677
      %v2022 = vmul.f32 %v1738, %v683
      %v2023 = vmul.f32 %v1741, %v687
      %v2024 = vmul.f32 %v1744, %v693
      %v2025 = vmul.f32 %v1747, %v697
      %v2026 = vmul.f32 %v1750, %v703
      %v2027 = vmul.f32 %v1753, %v707
      %v2028 = vmul.f32 %v1756, %v713
      %v2029 = vmul.f32 %v1759, %v717
      %v2030 = vmul.f32 %v1762, %v723
      %v2031 = vmul.f32 %v1765, %v727
      %v2032 = vmul.f32 %v1768, %v733
      %v2033 = vmul.f32 %v1771, %v737
      %v2034 = vmul.f32 %v1774, %v743
      %v2035 = vmul.f32 %v1777, %v747
      %2036 = vset.pattern.permute.xlu0 22
      %2037 = vperm.xlu0 %2036, %v292
      %v2038 = vpop.permute.xlu0 %2037
      %2040 = vset.pattern.permute.xlu0 22
      %2041 = vperm.xlu0 %2040, %v293
      %v2042 = vpop.permute.xlu0 %2041
      %2044 = vset.pattern.permute.xlu0 22
      %2045 = vperm.xlu0 %2044, %v294
      %v2046 = vpop.permute.xlu0 %2045
      %2048 = vset.pattern.permute.xlu0 22
      %2049 = vperm.xlu0 %2048, %v295
      %v2050 = vpop.permute.xlu0 %2049
      %2052 = vset.pattern.permute.xlu0 22
      %2053 = vperm.xlu0 %2052, %v296
      %v2054 = vpop.permute.xlu0 %2053
      %2056 = vset.pattern.permute.xlu0 22
      %2057 = vperm.xlu0 %2056, %v297
      %v2058 = vpop.permute.xlu0 %2057
      %2060 = vset.pattern.permute.xlu0 22
      %2061 = vperm.xlu0 %2060, %v298
      %v2062 = vpop.permute.xlu0 %2061
      %2064 = vset.pattern.permute.xlu0 22
      %2065 = vperm.xlu0 %2064, %v299
      %v2066 = vpop.permute.xlu0 %2065
      %2068 = vset.pattern.permute.xlu0 22
      %2069 = vperm.xlu0 %2068, %v300
      %v2070 = vpop.permute.xlu0 %2069
      %2072 = vset.pattern.permute.xlu0 22
      %2073 = vperm.xlu0 %2072, %v301
      %v2074 = vpop.permute.xlu0 %2073
      %2076 = vset.pattern.permute.xlu0 22
      %2077 = vperm.xlu0 %2076, %v302
      %v2078 = vpop.permute.xlu0 %2077
      %2080 = vset.pattern.permute.xlu0 22
      %2081 = vperm.xlu0 %2080, %v303
      %v2082 = vpop.permute.xlu0 %2081
      %2084 = vset.pattern.permute.xlu0 22
      %2085 = vperm.xlu0 %2084, %v304
      %v2086 = vpop.permute.xlu0 %2085
      %2088 = vset.pattern.permute.xlu0 22
      %2089 = vperm.xlu0 %2088, %v305
      %v2090 = vpop.permute.xlu0 %2089
      %2092 = vset.pattern.permute.xlu0 22
      %2093 = vperm.xlu0 %2092, %v306
      %v2094 = vpop.permute.xlu0 %2093
      %2096 = vset.pattern.permute.xlu0 22
      %2097 = vperm.xlu0 %2096, %v307
      %v2098 = vpop.permute.xlu0 %2097
      %v2100 = vmul.f32 %v2038, %v1734
      %v2101 = vmul.f32 %v2042, %v1737
      %v2102 = vmul.f32 %v2046, %v1740
      %v2103 = vmul.f32 %v2050, %v1743
      %v2104 = vmul.f32 %v2054, %v1746
      %v2105 = vmul.f32 %v2058, %v1749
      %v2106 = vmul.f32 %v2062, %v1752
      %v2107 = vmul.f32 %v2066, %v1755
      %v2108 = vmul.f32 %v2070, %v1758
      %v2109 = vmul.f32 %v2074, %v1761
      %v2110 = vmul.f32 %v2078, %v1764
      %v2111 = vmul.f32 %v2082, %v1767
      %v2112 = vmul.f32 %v2086, %v1770
      %v2113 = vmul.f32 %v2090, %v1773
      %v2114 = vmul.f32 %v2094, %v1776
      %v2115 = vmul.f32 %v2098, %v1779
      %v2116 = vadd.f32 %v2020, %v2100
      %v2117 = vadd.f32 %v2021, %v2101
      %v2118 = vadd.f32 %v2022, %v2102
      %v2119 = vadd.f32 %v2023, %v2103
      %v2120 = vadd.f32 %v2024, %v2104
      %v2121 = vadd.f32 %v2025, %v2105
      %v2122 = vadd.f32 %v2026, %v2106
      %v2123 = vadd.f32 %v2027, %v2107
      %v2124 = vadd.f32 %v2028, %v2108
      %v2125 = vadd.f32 %v2029, %v2109
      %v2126 = vadd.f32 %v2030, %v2110
      %v2127 = vadd.f32 %v2031, %v2111
      %v2128 = vadd.f32 %v2032, %v2112
      %v2129 = vadd.f32 %v2033, %v2113
      %v2130 = vadd.f32 %v2034, %v2114
      %v2131 = vadd.f32 %v2035, %v2115
      %v2132 = vld [vmem:[#allocation2] sm:$0xff]
      %v2133 = vld [vmem:[#allocation2 + $0x8] sm:$0xff]
      %v2134 = vld [vmem:[#allocation2 + $0x10] sm:$0xff]
      %v2135 = vld [vmem:[#allocation2 + $0x18] sm:$0xff]
      %v2136 = vld [vmem:[#allocation2 + $0x20] sm:$0xff]
      %v2137 = vld [vmem:[#allocation2 + $0x28] sm:$0xff]
      %v2138 = vld [vmem:[#allocation2 + $0x30] sm:$0xff]
      %v2139 = vld [vmem:[#allocation2 + $0x38] sm:$0xff]
      %v2140 = vld [vmem:[#allocation2 + $0x40] sm:$0xff]
      %v2141 = vld [vmem:[#allocation2 + $0x48] sm:$0xff]
      %v2142 = vld [vmem:[#allocation2 + $0x50] sm:$0xff]
      %v2143 = vld [vmem:[#allocation2 + $0x58] sm:$0xff]
      %v2144 = vld [vmem:[#allocation2 + $0x60] sm:$0xff]
      %v2145 = vld [vmem:[#allocation2 + $0x68] sm:$0xff]
      %v2146 = vld [vmem:[#allocation2 + $0x70] sm:$0xff]
      %v2147 = vld [vmem:[#allocation2 + $0x78] sm:$0xff]
      %v2148 = vld [vmem:[#allocation2 + $0x80] sm:$0xff]
      %v2149 = vld [vmem:[#allocation2 + $0x88] sm:$0xff]
      %v2150 = vld [vmem:[#allocation2 + $0x90] sm:$0xff]
      %v2151 = vld [vmem:[#allocation2 + $0x98] sm:$0xff]
      %v2152 = vld [vmem:[#allocation2 + $0xa0] sm:$0xff]
      %v2153 = vld [vmem:[#allocation2 + $0xa8] sm:$0xff]
      %v2154 = vld [vmem:[#allocation2 + $0xb0] sm:$0xff]
      %v2155 = vld [vmem:[#allocation2 + $0xb8] sm:$0xff]
      %v2156 = vld [vmem:[#allocation2 + $0xc0] sm:$0xff]
      %v2157 = vld [vmem:[#allocation2 + $0xc8] sm:$0xff]
      %v2158 = vld [vmem:[#allocation2 + $0xd0] sm:$0xff]
      %v2159 = vld [vmem:[#allocation2 + $0xd8] sm:$0xff]
      %v2160 = vld [vmem:[#allocation2 + $0xe0] sm:$0xff]
      %v2161 = vld [vmem:[#allocation2 + $0xe8] sm:$0xff]
      %v2162 = vld [vmem:[#allocation2 + $0xf0] sm:$0xff]
      %v2163 = vld [vmem:[#allocation2 + $0xf8] sm:$0xff]
      %v2164 = vld [vmem:[#allocation2 + $0x100] sm:$0xff]
      %v2165 = vld [vmem:[#allocation2 + $0x108] sm:$0xff]
      %v2166 = vld [vmem:[#allocation2 + $0x110] sm:$0xff]
      %v2167 = vld [vmem:[#allocation2 + $0x118] sm:$0xff]
      %v2168 = vld [vmem:[#allocation2 + $0x120] sm:$0xff]
      %v2169 = vld [vmem:[#allocation2 + $0x128] sm:$0xff]
      %v2170 = vld [vmem:[#allocation2 + $0x130] sm:$0xff]
      %v2171 = vld [vmem:[#allocation2 + $0x138] sm:$0xff]
      %v2172 = vld [vmem:[#allocation2 + $0x140] sm:$0xff]
      %v2173 = vld [vmem:[#allocation2 + $0x148] sm:$0xff]
      %v2174 = vld [vmem:[#allocation2 + $0x150] sm:$0xff]
      %v2175 = vld [vmem:[#allocation2 + $0x158] sm:$0xff]
      %v2176 = vld [vmem:[#allocation2 + $0x160] sm:$0xff]
      %v2177 = vld [vmem:[#allocation2 + $0x168] sm:$0xff]
      %v2178 = vld [vmem:[#allocation2 + $0x170] sm:$0xff]
      %v2179 = vld [vmem:[#allocation2 + $0x178] sm:$0xff]
      %v2180 = vld [vmem:[#allocation2 + $0x180] sm:$0xff]
      %v2181 = vld [vmem:[#allocation2 + $0x188] sm:$0xff]
      %v2182 = vld [vmem:[#allocation2 + $0x190] sm:$0xff]
      %v2183 = vld [vmem:[#allocation2 + $0x198] sm:$0xff]
      %v2184 = vld [vmem:[#allocation2 + $0x1a0] sm:$0xff]
      %v2185 = vld [vmem:[#allocation2 + $0x1a8] sm:$0xff]
      %v2186 = vld [vmem:[#allocation2 + $0x1b0] sm:$0xff]
      %v2187 = vld [vmem:[#allocation2 + $0x1b8] sm:$0xff]
      %v2188 = vld [vmem:[#allocation2 + $0x1c0] sm:$0xff]
      %v2189 = vld [vmem:[#allocation2 + $0x1c8] sm:$0xff]
      %v2190 = vld [vmem:[#allocation2 + $0x1d0] sm:$0xff]
      %v2191 = vld [vmem:[#allocation2 + $0x1d8] sm:$0xff]
      %v2192 = vld [vmem:[#allocation2 + $0x1e0] sm:$0xff]
      %v2193 = vld [vmem:[#allocation2 + $0x1e8] sm:$0xff]
      %v2194 = vld [vmem:[#allocation2 + $0x1f0] sm:$0xff]
      %v2195 = vld [vmem:[#allocation2 + $0x1f8] sm:$0xff]
      %v2196 = vpack.c.bf16 %v1736, %v1733
      %v2197 = vpack.c.bf16 %v1893, %v1892
      %v2198 = vpack.c.bf16 %v2005, %v2004
      %v2199 = vpack.c.bf16 %v2117, %v2116
      %v2200 = vpack.c.bf16 %v1742, %v1739
      %v2201 = vpack.c.bf16 %v1895, %v1894
      %v2202 = vpack.c.bf16 %v2007, %v2006
      %v2203 = vpack.c.bf16 %v2119, %v2118
      %v2204 = vpack.c.bf16 %v1748, %v1745
      %v2205 = vpack.c.bf16 %v1897, %v1896
      %v2206 = vpack.c.bf16 %v2009, %v2008
      %v2207 = vpack.c.bf16 %v2121, %v2120
      %v2208 = vpack.c.bf16 %v1754, %v1751
      %v2209 = vpack.c.bf16 %v1899, %v1898
      %v2210 = vpack.c.bf16 %v2011, %v2010
      %v2211 = vpack.c.bf16 %v2123, %v2122
      %v2212 = vpack.c.bf16 %v1760, %v1757
      %v2213 = vpack.c.bf16 %v1901, %v1900
      %v2214 = vpack.c.bf16 %v2013, %v2012
      %v2215 = vpack.c.bf16 %v2125, %v2124
      %v2216 = vpack.c.bf16 %v1766, %v1763
      %v2217 = vpack.c.bf16 %v1903, %v1902
      %v2218 = vpack.c.bf16 %v2015, %v2014
      %v2219 = vpack.c.bf16 %v2127, %v2126
      %v2220 = vpack.c.bf16 %v1772, %v1769
      %v2221 = vpack.c.bf16 %v1905, %v1904
      %v2222 = vpack.c.bf16 %v2017, %v2016
      %v2223 = vpack.c.bf16 %v2129, %v2128
      %v2224 = vpack.c.bf16 %v1778, %v1775
      %v2225 = vpack.c.bf16 %v1907, %v1906
      %v2226 = vpack.c.bf16 %v2019, %v2018
      %v2227 = vpack.c.bf16 %v2131, %v2130
      %2228 = vmatprep.subr.bf16.mxu0 %v2225
      %2229 = vmatpush1.bf16.msra.mxu0 %v2224
      %2230 = vmatprep.subr.bf16.mxu0 %v2221
      %2231 = vmatpush1.bf16.msra.mxu0 %v2220
      %2232 = vmatprep.subr.bf16.mxu0 %v2217
      %2233 = vmatpush1.bf16.msra.mxu0 %v2216
      %2234 = vmatprep.subr.bf16.mxu0 %v2213
      %2235 = vmatpush1.bf16.msra.mxu0 %v2212
      %2236 = vmatprep.subr.bf16.mxu0 %v2209
      %2237 = vmatpush1.bf16.msra.mxu0 %v2208
      %2238 = vmatprep.subr.bf16.mxu0 %v2205
      %2239 = vmatpush1.bf16.msra.mxu0 %v2204
      %2240 = vmatprep.subr.bf16.mxu0 %v2201
      %2241 = vmatpush1.bf16.msra.mxu0 %v2200
      %2242 = vmatprep.subr.bf16.mxu0 %v2197
      %2243 = vmatpush1.bf16.msra.mxu0 %v2196
      %2244 = vmatprep.subr.bf16.mxu0 0
      %2245 = vmatpush2.bf16.msra.mxu0 0
      %2246 = vmatprep.subr.bf16.mxu0 0
      %2247 = vmatpush2.bf16.msra.mxu0 0
      %2248 = vmatprep.subr.bf16.mxu0 0
      %2249 = vmatpush2.bf16.msra.mxu0 0
      %2250 = vmatprep.subr.bf16.mxu0 0
      %2251 = vmatpush2.bf16.msra.mxu0 0
      %2252 = vmatprep.subr.bf16.mxu0 0
      %2253 = vmatpush2.bf16.msra.mxu0 0
      %2254 = vmatprep.subr.bf16.mxu0 0
      %2255 = vmatpush2.bf16.msra.mxu0 0
      %2256 = vmatprep.subr.bf16.mxu0 0
      %2257 = vmatpush2.bf16.msra.mxu0 0
      %2258 = vmatprep.subr.bf16.mxu0 0
      %2259 = vmatpush2.bf16.msra.mxu0 0
      %2260 = vmatprep.mubr.bf16.mxu0 0
      %2261 = vmatmul.mubr.bf16.gmra.mxu0 %v443
      %v2262 = vpop.f32.mrf.mxu0
      %v2263 = vadd.f32 0.0, %v2262
      %v2264 = vpop.f32.mrf.mxu0
      %v2265 = vadd.f32 0.0, %v2264
      %v2266 = vpop.f32.mrf.mxu0
      %v2267 = vadd.f32 0.0, %v2266
      %v2268 = vpop.f32.mrf.mxu0
      %v2269 = vadd.f32 0.0, %v2268
      %2270 = vmatprep.mubr.bf16.mxu0 0
      %2271 = vmatmul.mubr.bf16.gmra.mxu0 %v444
      %v2272 = vpop.f32.mrf.mxu0
      %v2273 = vadd.f32 0.0, %v2272
      %v2274 = vpop.f32.mrf.mxu0
      %v2275 = vadd.f32 0.0, %v2274
      %v2276 = vpop.f32.mrf.mxu0
      %v2277 = vadd.f32 0.0, %v2276
      %v2278 = vpop.f32.mrf.mxu0
      %v2279 = vadd.f32 0.0, %v2278
      %2280 = vmatprep.mubr.bf16.mxu0 0
      %2281 = vmatmul.mubr.bf16.gmra.mxu0 %v445
      %v2282 = vpop.f32.mrf.mxu0
      %v2283 = vadd.f32 0.0, %v2282
      %v2284 = vpop.f32.mrf.mxu0
      %v2285 = vadd.f32 0.0, %v2284
      %v2286 = vpop.f32.mrf.mxu0
      %v2287 = vadd.f32 0.0, %v2286
      %v2288 = vpop.f32.mrf.mxu0
      %v2289 = vadd.f32 0.0, %v2288
      %2290 = vmatprep.mubr.bf16.mxu0 0
      %2291 = vmatmul.mubr.bf16.gmra.mxu0 %v446
      %v2292 = vpop.f32.mrf.mxu0
      %v2293 = vadd.f32 0.0, %v2292
      %v2294 = vpop.f32.mrf.mxu0
      %v2295 = vadd.f32 0.0, %v2294
      %v2296 = vpop.f32.mrf.mxu0
      %v2297 = vadd.f32 0.0, %v2296
      %v2298 = vpop.f32.mrf.mxu0
      %v2299 = vadd.f32 0.0, %v2298
      %2300 = vmatprep.mubr.bf16.mxu0 0
      %2301 = vmatmul.mubr.bf16.gmra.mxu0 %v447
      %v2302 = vpop.f32.mrf.mxu0
      %v2303 = vadd.f32 0.0, %v2302
      %v2304 = vpop.f32.mrf.mxu0
      %v2305 = vadd.f32 0.0, %v2304
      %v2306 = vpop.f32.mrf.mxu0
      %v2307 = vadd.f32 0.0, %v2306
      %v2308 = vpop.f32.mrf.mxu0
      %v2309 = vadd.f32 0.0, %v2308
      %2310 = vmatprep.mubr.bf16.mxu0 0
      %2311 = vmatmul.mubr.bf16.gmra.mxu0 %v448
      %v2312 = vpop.f32.mrf.mxu0
      %v2313 = vadd.f32 0.0, %v2312
      %v2314 = vpop.f32.mrf.mxu0
      %v2315 = vadd.f32 0.0, %v2314
      %v2316 = vpop.f32.mrf.mxu0
      %v2317 = vadd.f32 0.0, %v2316
      %v2318 = vpop.f32.mrf.mxu0
      %v2319 = vadd.f32 0.0, %v2318
      %2320 = vmatprep.mubr.bf16.mxu0 0
      %2321 = vmatmul.mubr.bf16.gmra.mxu0 %v449
      %v2322 = vpop.f32.mrf.mxu0
      %v2323 = vadd.f32 0.0, %v2322
      %v2324 = vpop.f32.mrf.mxu0
      %v2325 = vadd.f32 0.0, %v2324
      %v2326 = vpop.f32.mrf.mxu0
      %v2327 = vadd.f32 0.0, %v2326
      %v2328 = vpop.f32.mrf.mxu0
      %v2329 = vadd.f32 0.0, %v2328
      %2330 = vmatprep.mubr.bf16.mxu0 0
      %2331 = vmatmul.mubr.bf16.gmra.mxu0 %v450
      %v2332 = vpop.f32.mrf.mxu0
      %v2333 = vadd.f32 0.0, %v2332
      %v2334 = vpop.f32.mrf.mxu0
      %v2335 = vadd.f32 0.0, %v2334
      %v2336 = vpop.f32.mrf.mxu0
      %v2337 = vadd.f32 0.0, %v2336
      %v2338 = vpop.f32.mrf.mxu0
      %v2339 = vadd.f32 0.0, %v2338
      %2340 = vdwg.mxu0
      %2341 = vmatprep.subr.bf16.mxu0 %v2227
      %2342 = vmatpush1.bf16.msra.mxu0 %v2226
      %2343 = vmatprep.subr.bf16.mxu0 %v2223
      %2344 = vmatpush1.bf16.msra.mxu0 %v2222
      %2345 = vmatprep.subr.bf16.mxu0 %v2219
      %2346 = vmatpush1.bf16.msra.mxu0 %v2218
      %2347 = vmatprep.subr.bf16.mxu0 %v2215
      %2348 = vmatpush1.bf16.msra.mxu0 %v2214
      %2349 = vmatprep.subr.bf16.mxu0 %v2211
      %2350 = vmatpush1.bf16.msra.mxu0 %v2210
      %2351 = vmatprep.subr.bf16.mxu0 %v2207
      %2352 = vmatpush1.bf16.msra.mxu0 %v2206
      %2353 = vmatprep.subr.bf16.mxu0 %v2203
      %2354 = vmatpush1.bf16.msra.mxu0 %v2202
      %2355 = vmatprep.subr.bf16.mxu0 %v2199
      %2356 = vmatpush1.bf16.msra.mxu0 %v2198
      %2357 = vmatprep.subr.bf16.mxu0 0
      %2358 = vmatpush2.bf16.msra.mxu0 0
      %2359 = vmatprep.subr.bf16.mxu0 0
      %2360 = vmatpush2.bf16.msra.mxu0 0
      %2361 = vmatprep.subr.bf16.mxu0 0
      %2362 = vmatpush2.bf16.msra.mxu0 0
      %2363 = vmatprep.subr.bf16.mxu0 0
      %2364 = vmatpush2.bf16.msra.mxu0 0
      %2365 = vmatprep.subr.bf16.mxu0 0
      %2366 = vmatpush2.bf16.msra.mxu0 0
      %2367 = vmatprep.subr.bf16.mxu0 0
      %2368 = vmatpush2.bf16.msra.mxu0 0
      %2369 = vmatprep.subr.bf16.mxu0 0
      %2370 = vmatpush2.bf16.msra.mxu0 0
      %2371 = vmatprep.subr.bf16.mxu0 0
      %2372 = vmatpush2.bf16.msra.mxu0 0
      %2373 = vmatprep.mubr.bf16.mxu0 0
      %2374 = vmatmul.mubr.bf16.gmra.mxu0 %v443
      %v2375 = vpop.f32.mrf.mxu0
      %v2376 = vadd.f32 0.0, %v2375
      %v2377 = vpop.f32.mrf.mxu0
      %v2378 = vadd.f32 0.0, %v2377
      %v2379 = vpop.f32.mrf.mxu0
      %v2380 = vadd.f32 0.0, %v2379
      %v2381 = vpop.f32.mrf.mxu0
      %v2382 = vadd.f32 0.0, %v2381
      %2383 = vmatprep.mubr.bf16.mxu0 0
      %2384 = vmatmul.mubr.bf16.gmra.mxu0 %v444
      %v2385 = vpop.f32.mrf.mxu0
      %v2386 = vadd.f32 0.0, %v2385
      %v2387 = vpop.f32.mrf.mxu0
      %v2388 = vadd.f32 0.0, %v2387
      %v2389 = vpop.f32.mrf.mxu0
      %v2390 = vadd.f32 0.0, %v2389
      %v2391 = vpop.f32.mrf.mxu0
      %v2392 = vadd.f32 0.0, %v2391
      %2393 = vmatprep.mubr.bf16.mxu0 0
      %2394 = vmatmul.mubr.bf16.gmra.mxu0 %v445
      %v2395 = vpop.f32.mrf.mxu0
      %v2396 = vadd.f32 0.0, %v2395
      %v2397 = vpop.f32.mrf.mxu0
      %v2398 = vadd.f32 0.0, %v2397
      %v2399 = vpop.f32.mrf.mxu0
      %v2400 = vadd.f32 0.0, %v2399
      %v2401 = vpop.f32.mrf.mxu0
      %v2402 = vadd.f32 0.0, %v2401
      %2403 = vmatprep.mubr.bf16.mxu0 0
      %2404 = vmatmul.mubr.bf16.gmra.mxu0 %v446
      %v2405 = vpop.f32.mrf.mxu0
      %v2406 = vadd.f32 0.0, %v2405
      %v2407 = vpop.f32.mrf.mxu0
      %v2408 = vadd.f32 0.0, %v2407
      %v2409 = vpop.f32.mrf.mxu0
      %v2410 = vadd.f32 0.0, %v2409
      %v2411 = vpop.f32.mrf.mxu0
      %v2412 = vadd.f32 0.0, %v2411
      %2413 = vmatprep.mubr.bf16.mxu0 0
      %2414 = vmatmul.mubr.bf16.gmra.mxu0 %v447
      %v2415 = vpop.f32.mrf.mxu0
      %v2416 = vadd.f32 0.0, %v2415
      %v2417 = vpop.f32.mrf.mxu0
      %v2418 = vadd.f32 0.0, %v2417
      %v2419 = vpop.f32.mrf.mxu0
      %v2420 = vadd.f32 0.0, %v2419
      %v2421 = vpop.f32.mrf.mxu0
      %v2422 = vadd.f32 0.0, %v2421
      %2423 = vmatprep.mubr.bf16.mxu0 0
      %2424 = vmatmul.mubr.bf16.gmra.mxu0 %v448
      %v2425 = vpop.f32.mrf.mxu0
      %v2426 = vadd.f32 0.0, %v2425
      %v2427 = vpop.f32.mrf.mxu0
      %v2428 = vadd.f32 0.0, %v2427
      %v2429 = vpop.f32.mrf.mxu0
      %v2430 = vadd.f32 0.0, %v2429
      %v2431 = vpop.f32.mrf.mxu0
      %v2432 = vadd.f32 0.0, %v2431
      %2433 = vmatprep.mubr.bf16.mxu0 0
      %2434 = vmatmul.mubr.bf16.gmra.mxu0 %v449
      %v2435 = vpop.f32.mrf.mxu0
      %v2436 = vadd.f32 0.0, %v2435
      %v2437 = vpop.f32.mrf.mxu0
      %v2438 = vadd.f32 0.0, %v2437
      %v2439 = vpop.f32.mrf.mxu0
      %v2440 = vadd.f32 0.0, %v2439
      %v2441 = vpop.f32.mrf.mxu0
      %v2442 = vadd.f32 0.0, %v2441
      %2443 = vmatprep.mubr.bf16.mxu0 0
      %2444 = vmatmul.mubr.bf16.gmra.mxu0 %v450
      %v2445 = vpop.f32.mrf.mxu0
      %v2446 = vadd.f32 0.0, %v2445
      %v2447 = vpop.f32.mrf.mxu0
      %v2448 = vadd.f32 0.0, %v2447
      %v2449 = vpop.f32.mrf.mxu0
      %v2450 = vadd.f32 0.0, %v2449
      %v2451 = vpop.f32.mrf.mxu0
      %v2452 = vadd.f32 0.0, %v2451
      %2453 = vdwg.mxu0
      %v2454 = vadd.f32 %v2132, %v2263
      %v2455 = vadd.f32 %v2133, %v2265
      %v2456 = vadd.f32 %v2134, %v2376
      %v2457 = vadd.f32 %v2135, %v2378
      %v2458 = vadd.f32 %v2136, %v2267
      %v2459 = vadd.f32 %v2137, %v2269
      %v2460 = vadd.f32 %v2138, %v2380
      %v2461 = vadd.f32 %v2139, %v2382
      %v2462 = vadd.f32 %v2140, %v2273
      %v2463 = vadd.f32 %v2141, %v2275
      %v2464 = vadd.f32 %v2142, %v2386
      %v2465 = vadd.f32 %v2143, %v2388
      %v2466 = vadd.f32 %v2144, %v2277
      %v2467 = vadd.f32 %v2145, %v2279
      %v2468 = vadd.f32 %v2146, %v2390
      %v2469 = vadd.f32 %v2147, %v2392
      %v2470 = vadd.f32 %v2148, %v2283
      %v2471 = vadd.f32 %v2149, %v2285
      %v2472 = vadd.f32 %v2150, %v2396
      %v2473 = vadd.f32 %v2151, %v2398
      %v2474 = vadd.f32 %v2152, %v2287
      %v2475 = vadd.f32 %v2153, %v2289
      %v2476 = vadd.f32 %v2154, %v2400
      %v2477 = vadd.f32 %v2155, %v2402
      %v2478 = vadd.f32 %v2156, %v2293
      %v2479 = vadd.f32 %v2157, %v2295
      %v2480 = vadd.f32 %v2158, %v2406
      %v2481 = vadd.f32 %v2159, %v2408
      %v2482 = vadd.f32 %v2160, %v2297
      %v2483 = vadd.f32 %v2161, %v2299
      %v2484 = vadd.f32 %v2162, %v2410
      %v2485 = vadd.f32 %v2163, %v2412
      %v2486 = vadd.f32 %v2164, %v2303
      %v2487 = vadd.f32 %v2165, %v2305
      %v2488 = vadd.f32 %v2166, %v2416
      %v2489 = vadd.f32 %v2167, %v2418
      %v2490 = vadd.f32 %v2168, %v2307
      %v2491 = vadd.f32 %v2169, %v2309
      %v2492 = vadd.f32 %v2170, %v2420
      %v2493 = vadd.f32 %v2171, %v2422
      %v2494 = vadd.f32 %v2172, %v2313
      %v2495 = vadd.f32 %v2173, %v2315
      %v2496 = vadd.f32 %v2174, %v2426
      %v2497 = vadd.f32 %v2175, %v2428
      %v2498 = vadd.f32 %v2176, %v2317
      %v2499 = vadd.f32 %v2177, %v2319
      %v2500 = vadd.f32 %v2178, %v2430
      %v2501 = vadd.f32 %v2179, %v2432
      %v2502 = vadd.f32 %v2180, %v2323
      %v2503 = vadd.f32 %v2181, %v2325
      %v2504 = vadd.f32 %v2182, %v2436
      %v2505 = vadd.f32 %v2183, %v2438
      %v2506 = vadd.f32 %v2184, %v2327
      %v2507 = vadd.f32 %v2185, %v2329
      %v2508 = vadd.f32 %v2186, %v2440
      %v2509 = vadd.f32 %v2187, %v2442
      %v2510 = vadd.f32 %v2188, %v2333
      %v2511 = vadd.f32 %v2189, %v2335
      %v2512 = vadd.f32 %v2190, %v2446
      %v2513 = vadd.f32 %v2191, %v2448
      %v2514 = vadd.f32 %v2192, %v2337
      %v2515 = vadd.f32 %v2193, %v2339
      %v2516 = vadd.f32 %v2194, %v2450
      %v2517 = vadd.f32 %v2195, %v2452
      %2518 = vst [vmem:[#allocation2] sm:$0xff] %v2454
      %2519 = vst [vmem:[#allocation2 + $0x8] sm:$0xff] %v2455
      %2520 = vst [vmem:[#allocation2 + $0x10] sm:$0xff] %v2456
      %2521 = vst [vmem:[#allocation2 + $0x18] sm:$0xff] %v2457
      %2522 = vst [vmem:[#allocation2 + $0x20] sm:$0xff] %v2458
      %2523 = vst [vmem:[#allocation2 + $0x28] sm:$0xff] %v2459
      %2524 = vst [vmem:[#allocation2 + $0x30] sm:$0xff] %v2460
      %2525 = vst [vmem:[#allocation2 + $0x38] sm:$0xff] %v2461
      %2526 = vst [vmem:[#allocation2 + $0x40] sm:$0xff] %v2462
      %2527 = vst [vmem:[#allocation2 + $0x48] sm:$0xff] %v2463
      %2528 = vst [vmem:[#allocation2 + $0x50] sm:$0xff] %v2464
      %2529 = vst [vmem:[#allocation2 + $0x58] sm:$0xff] %v2465
      %2530 = vst [vmem:[#allocation2 + $0x60] sm:$0xff] %v2466
      %2531 = vst [vmem:[#allocation2 + $0x68] sm:$0xff] %v2467
      %2532 = vst [vmem:[#allocation2 + $0x70] sm:$0xff] %v2468
      %2533 = vst [vmem:[#allocation2 + $0x78] sm:$0xff] %v2469
      %2534 = vst [vmem:[#allocation2 + $0x80] sm:$0xff] %v2470
      %2535 = vst [vmem:[#allocation2 + $0x88] sm:$0xff] %v2471
      %2536 = vst [vmem:[#allocation2 + $0x90] sm:$0xff] %v2472
      %2537 = vst [vmem:[#allocation2 + $0x98] sm:$0xff] %v2473
      %2538 = vst [vmem:[#allocation2 + $0xa0] sm:$0xff] %v2474
      %2539 = vst [vmem:[#allocation2 + $0xa8] sm:$0xff] %v2475
      %2540 = vst [vmem:[#allocation2 + $0xb0] sm:$0xff] %v2476
      %2541 = vst [vmem:[#allocation2 + $0xb8] sm:$0xff] %v2477
      %2542 = vst [vmem:[#allocation2 + $0xc0] sm:$0xff] %v2478
      %2543 = vst [vmem:[#allocation2 + $0xc8] sm:$0xff] %v2479
      %2544 = vst [vmem:[#allocation2 + $0xd0] sm:$0xff] %v2480
      %2545 = vst [vmem:[#allocation2 + $0xd8] sm:$0xff] %v2481
      %2546 = vst [vmem:[#allocation2 + $0xe0] sm:$0xff] %v2482
      %2547 = vst [vmem:[#allocation2 + $0xe8] sm:$0xff] %v2483
      %2548 = vst [vmem:[#allocation2 + $0xf0] sm:$0xff] %v2484
      %2549 = vst [vmem:[#allocation2 + $0xf8] sm:$0xff] %v2485
      %2550 = vst [vmem:[#allocation2 + $0x100] sm:$0xff] %v2486
      %2551 = vst [vmem:[#allocation2 + $0x108] sm:$0xff] %v2487
      %2552 = vst [vmem:[#allocation2 + $0x110] sm:$0xff] %v2488
      %2553 = vst [vmem:[#allocation2 + $0x118] sm:$0xff] %v2489
      %2554 = vst [vmem:[#allocation2 + $0x120] sm:$0xff] %v2490
      %2555 = vst [vmem:[#allocation2 + $0x128] sm:$0xff] %v2491
      %2556 = vst [vmem:[#allocation2 + $0x130] sm:$0xff] %v2492
      %2557 = vst [vmem:[#allocation2 + $0x138] sm:$0xff] %v2493
      %2558 = vst [vmem:[#allocation2 + $0x140] sm:$0xff] %v2494
      %2559 = vst [vmem:[#allocation2 + $0x148] sm:$0xff] %v2495
      %2560 = vst [vmem:[#allocation2 + $0x150] sm:$0xff] %v2496
      %2561 = vst [vmem:[#allocation2 + $0x158] sm:$0xff] %v2497
      %2562 = vst [vmem:[#allocation2 + $0x160] sm:$0xff] %v2498
      %2563 = vst [vmem:[#allocation2 + $0x168] sm:$0xff] %v2499
      %2564 = vst [vmem:[#allocation2 + $0x170] sm:$0xff] %v2500
      %2565 = vst [vmem:[#allocation2 + $0x178] sm:$0xff] %v2501
      %2566 = vst [vmem:[#allocation2 + $0x180] sm:$0xff] %v2502
      %2567 = vst [vmem:[#allocation2 + $0x188] sm:$0xff] %v2503
      %2568 = vst [vmem:[#allocation2 + $0x190] sm:$0xff] %v2504
      %2569 = vst [vmem:[#allocation2 + $0x198] sm:$0xff] %v2505
      %2570 = vst [vmem:[#allocation2 + $0x1a0] sm:$0xff] %v2506
      %2571 = vst [vmem:[#allocation2 + $0x1a8] sm:$0xff] %v2507
      %2572 = vst [vmem:[#allocation2 + $0x1b0] sm:$0xff] %v2508
      %2573 = vst [vmem:[#allocation2 + $0x1b8] sm:$0xff] %v2509
      %2574 = vst [vmem:[#allocation2 + $0x1c0] sm:$0xff] %v2510
      %2575 = vst [vmem:[#allocation2 + $0x1c8] sm:$0xff] %v2511
      %2576 = vst [vmem:[#allocation2 + $0x1d0] sm:$0xff] %v2512
      %2577 = vst [vmem:[#allocation2 + $0x1d8] sm:$0xff] %v2513
      %2578 = vst [vmem:[#allocation2 + $0x1e0] sm:$0xff] %v2514
      %2579 = vst [vmem:[#allocation2 + $0x1e8] sm:$0xff] %v2515
      %2580 = vst [vmem:[#allocation2 + $0x1f0] sm:$0xff] %v2516
      %2581 = vst [vmem:[#allocation2 + $0x1f8] sm:$0xff] %v2517
    $region125: #{tpu_custom_call.1} parent=1 // pred_fallthru
      _
    // Predicated region
    $region126: #{tpu_custom_call.1} parent=1 // pred_check
      %p2582 = pneg %p218
    $region127: #{tpu_custom_call.1} parent=1 // pred_check_branch
      %2584 = sbr.rel (%p2582) target = $region129
    $region128: #{tpu_custom_call.1} parent=1 // pred_region
      %v2585 = vld [vmem:[#allocation2] sm:$0xff]
      %v2586 = vld [vmem:[#allocation2 + $0x8] sm:$0xff]
      %v2587 = vld [vmem:[#allocation2 + $0x10] sm:$0xff]
      %v2588 = vld [vmem:[#allocation2 + $0x18] sm:$0xff]
      %v2589 = vld [vmem:[#allocation2 + $0x20] sm:$0xff]
      %v2590 = vld [vmem:[#allocation2 + $0x28] sm:$0xff]
      %v2591 = vld [vmem:[#allocation2 + $0x30] sm:$0xff]
      %v2592 = vld [vmem:[#allocation2 + $0x38] sm:$0xff]
      %v2593 = vld [vmem:[#allocation2 + $0x40] sm:$0xff]
      %v2594 = vld [vmem:[#allocation2 + $0x48] sm:$0xff]
      %v2595 = vld [vmem:[#allocation2 + $0x50] sm:$0xff]
      %v2596 = vld [vmem:[#allocation2 + $0x58] sm:$0xff]
      %v2597 = vld [vmem:[#allocation2 + $0x60] sm:$0xff]
      %v2598 = vld [vmem:[#allocation2 + $0x68] sm:$0xff]
      %v2599 = vld [vmem:[#allocation2 + $0x70] sm:$0xff]
      %v2600 = vld [vmem:[#allocation2 + $0x78] sm:$0xff]
      %v2601 = vld [vmem:[#allocation2 + $0x80] sm:$0xff]
      %v2602 = vld [vmem:[#allocation2 + $0x88] sm:$0xff]
      %v2603 = vld [vmem:[#allocation2 + $0x90] sm:$0xff]
      %v2604 = vld [vmem:[#allocation2 + $0x98] sm:$0xff]
      %v2605 = vld [vmem:[#allocation2 + $0xa0] sm:$0xff]
      %v2606 = vld [vmem:[#allocation2 + $0xa8] sm:$0xff]
      %v2607 = vld [vmem:[#allocation2 + $0xb0] sm:$0xff]
      %v2608 = vld [vmem:[#allocation2 + $0xb8] sm:$0xff]
      %v2609 = vld [vmem:[#allocation2 + $0xc0] sm:$0xff]
      %v2610 = vld [vmem:[#allocation2 + $0xc8] sm:$0xff]
      %v2611 = vld [vmem:[#allocation2 + $0xd0] sm:$0xff]
      %v2612 = vld [vmem:[#allocation2 + $0xd8] sm:$0xff]
      %v2613 = vld [vmem:[#allocation2 + $0xe0] sm:$0xff]
      %v2614 = vld [vmem:[#allocation2 + $0xe8] sm:$0xff]
      %v2615 = vld [vmem:[#allocation2 + $0xf0] sm:$0xff]
      %v2616 = vld [vmem:[#allocation2 + $0xf8] sm:$0xff]
      %v2617 = vld [vmem:[#allocation2 + $0x100] sm:$0xff]
      %v2618 = vld [vmem:[#allocation2 + $0x108] sm:$0xff]
      %v2619 = vld [vmem:[#allocation2 + $0x110] sm:$0xff]
      %v2620 = vld [vmem:[#allocation2 + $0x118] sm:$0xff]
      %v2621 = vld [vmem:[#allocation2 + $0x120] sm:$0xff]
      %v2622 = vld [vmem:[#allocation2 + $0x128] sm:$0xff]
      %v2623 = vld [vmem:[#allocation2 + $0x130] sm:$0xff]
      %v2624 = vld [vmem:[#allocation2 + $0x138] sm:$0xff]
      %v2625 = vld [vmem:[#allocation2 + $0x140] sm:$0xff]
      %v2626 = vld [vmem:[#allocation2 + $0x148] sm:$0xff]
      %v2627 = vld [vmem:[#allocation2 + $0x150] sm:$0xff]
      %v2628 = vld [vmem:[#allocation2 + $0x158] sm:$0xff]
      %v2629 = vld [vmem:[#allocation2 + $0x160] sm:$0xff]
      %v2630 = vld [vmem:[#allocation2 + $0x168] sm:$0xff]
      %v2631 = vld [vmem:[#allocation2 + $0x170] sm:$0xff]
      %v2632 = vld [vmem:[#allocation2 + $0x178] sm:$0xff]
      %v2633 = vld [vmem:[#allocation2 + $0x180] sm:$0xff]
      %v2634 = vld [vmem:[#allocation2 + $0x188] sm:$0xff]
      %v2635 = vld [vmem:[#allocation2 + $0x190] sm:$0xff]
      %v2636 = vld [vmem:[#allocation2 + $0x198] sm:$0xff]
      %v2637 = vld [vmem:[#allocation2 + $0x1a0] sm:$0xff]
      %v2638 = vld [vmem:[#allocation2 + $0x1a8] sm:$0xff]
      %v2639 = vld [vmem:[#allocation2 + $0x1b0] sm:$0xff]
      %v2640 = vld [vmem:[#allocation2 + $0x1b8] sm:$0xff]
      %v2641 = vld [vmem:[#allocation2 + $0x1c0] sm:$0xff]
      %v2642 = vld [vmem:[#allocation2 + $0x1c8] sm:$0xff]
      %v2643 = vld [vmem:[#allocation2 + $0x1d0] sm:$0xff]
      %v2644 = vld [vmem:[#allocation2 + $0x1d8] sm:$0xff]
      %v2645 = vld [vmem:[#allocation2 + $0x1e0] sm:$0xff]
      %v2646 = vld [vmem:[#allocation2 + $0x1e8] sm:$0xff]
      %v2647 = vld [vmem:[#allocation2 + $0x1f0] sm:$0xff]
      %v2648 = vld [vmem:[#allocation2 + $0x1f8] sm:$0xff]
      %v2649 = vld [vmem:[%s3] sm:$0xff]
      %v2650 = vld [vmem:[%s3 + $0x8] sm:$0xff]
      %v2651 = vld [vmem:[%s3 + $0x10] sm:$0xff]
      %v2652 = vld [vmem:[%s3 + $0x18] sm:$0xff]
      %v2653 = vld [vmem:[%s3 + $0x20] sm:$0xff]
      %v2654 = vld [vmem:[%s3 + $0x28] sm:$0xff]
      %v2655 = vld [vmem:[%s3 + $0x30] sm:$0xff]
      %v2656 = vld [vmem:[%s3 + $0x38] sm:$0xff]
      %v2657 = vld [vmem:[%s3 + $0x40] sm:$0xff]
      %v2658 = vld [vmem:[%s3 + $0x48] sm:$0xff]
      %v2659 = vld [vmem:[%s3 + $0x50] sm:$0xff]
      %v2660 = vld [vmem:[%s3 + $0x58] sm:$0xff]
      %v2661 = vld [vmem:[%s3 + $0x60] sm:$0xff]
      %v2662 = vld [vmem:[%s3 + $0x68] sm:$0xff]
      %v2663 = vld [vmem:[%s3 + $0x70] sm:$0xff]
      %v2664 = vld [vmem:[%s3 + $0x78] sm:$0xff]
      %v2665 = vadd.f32 %v2649, %v2585
      %v2666 = vadd.f32 %v2650, %v2589
      %v2667 = vadd.f32 %v2651, %v2593
      %v2668 = vadd.f32 %v2652, %v2597
      %v2669 = vadd.f32 %v2653, %v2601
      %v2670 = vadd.f32 %v2654, %v2605
      %v2671 = vadd.f32 %v2655, %v2609
      %v2672 = vadd.f32 %v2656, %v2613
      %v2673 = vadd.f32 %v2657, %v2617
      %v2674 = vadd.f32 %v2658, %v2621
      %v2675 = vadd.f32 %v2659, %v2625
      %v2676 = vadd.f32 %v2660, %v2629
      %v2677 = vadd.f32 %v2661, %v2633
      %v2678 = vadd.f32 %v2662, %v2637
      %v2679 = vadd.f32 %v2663, %v2641
      %v2680 = vadd.f32 %v2664, %v2645
      %v2681 = vld [vmem:[#allocation8] sm:$0xff]
      %v2682 = vld [vmem:[#allocation8 + $0x8] sm:$0xff]
      %v2683 = vld [vmem:[#allocation8 + $0x10] sm:$0xff]
      %v2684 = vld [vmem:[#allocation8 + $0x18] sm:$0xff]
      %v2685 = vld [vmem:[#allocation8 + $0x20] sm:$0xff]
      %v2686 = vld [vmem:[#allocation8 + $0x28] sm:$0xff]
      %v2687 = vld [vmem:[#allocation8 + $0x30] sm:$0xff]
      %v2688 = vld [vmem:[#allocation8 + $0x38] sm:$0xff]
      %v2689 = vld [vmem:[#allocation8 + $0x40] sm:$0xff]
      %v2690 = vld [vmem:[#allocation8 + $0x48] sm:$0xff]
      %v2691 = vld [vmem:[#allocation8 + $0x50] sm:$0xff]
      %v2692 = vld [vmem:[#allocation8 + $0x58] sm:$0xff]
      %v2693 = vld [vmem:[#allocation8 + $0x60] sm:$0xff]
      %v2694 = vld [vmem:[#allocation8 + $0x68] sm:$0xff]
      %v2695 = vld [vmem:[#allocation8 + $0x70] sm:$0xff]
      %v2696 = vld [vmem:[#allocation8 + $0x78] sm:$0xff]
      %v2697 = vadd.f32 %v2681, %v2586
      %v2698 = vadd.f32 %v2682, %v2590
      %v2699 = vadd.f32 %v2683, %v2594
      %v2700 = vadd.f32 %v2684, %v2598
      %v2701 = vadd.f32 %v2685, %v2602
      %v2702 = vadd.f32 %v2686, %v2606
      %v2703 = vadd.f32 %v2687, %v2610
      %v2704 = vadd.f32 %v2688, %v2614
      %v2705 = vadd.f32 %v2689, %v2618
      %v2706 = vadd.f32 %v2690, %v2622
      %v2707 = vadd.f32 %v2691, %v2626
      %v2708 = vadd.f32 %v2692, %v2630
      %v2709 = vadd.f32 %v2693, %v2634
      %v2710 = vadd.f32 %v2694, %v2638
      %v2711 = vadd.f32 %v2695, %v2642
      %v2712 = vadd.f32 %v2696, %v2646
      %s2713 = scalar_lea.vmem [#allocation8], 128
      %v2714 = vld [vmem:[%s2713] sm:$0xff]
      %v2715 = vld [vmem:[%s2713 + $0x8] sm:$0xff]
      %v2716 = vld [vmem:[%s2713 + $0x10] sm:$0xff]
      %v2717 = vld [vmem:[%s2713 + $0x18] sm:$0xff]
      %v2718 = vld [vmem:[%s2713 + $0x20] sm:$0xff]
      %v2719 = vld [vmem:[%s2713 + $0x28] sm:$0xff]
      %v2720 = vld [vmem:[%s2713 + $0x30] sm:$0xff]
      %v2721 = vld [vmem:[%s2713 + $0x38] sm:$0xff]
      %v2722 = vld [vmem:[%s2713 + $0x40] sm:$0xff]
      %v2723 = vld [vmem:[%s2713 + $0x48] sm:$0xff]
      %v2724 = vld [vmem:[%s2713 + $0x50] sm:$0xff]
      %v2725 = vld [vmem:[%s2713 + $0x58] sm:$0xff]
      %v2726 = vld [vmem:[%s2713 + $0x60] sm:$0xff]
      %v2727 = vld [vmem:[%s2713 + $0x68] sm:$0xff]
      %v2728 = vld [vmem:[%s2713 + $0x70] sm:$0xff]
      %v2729 = vld [vmem:[%s2713 + $0x78] sm:$0xff]
      %v2730 = vadd.f32 %v2714, %v2587
      %v2731 = vadd.f32 %v2715, %v2591
      %v2732 = vadd.f32 %v2716, %v2595
      %v2733 = vadd.f32 %v2717, %v2599
      %v2734 = vadd.f32 %v2718, %v2603
      %v2735 = vadd.f32 %v2719, %v2607
      %v2736 = vadd.f32 %v2720, %v2611
      %v2737 = vadd.f32 %v2721, %v2615
      %v2738 = vadd.f32 %v2722, %v2619
      %v2739 = vadd.f32 %v2723, %v2623
      %v2740 = vadd.f32 %v2724, %v2627
      %v2741 = vadd.f32 %v2725, %v2631
      %v2742 = vadd.f32 %v2726, %v2635
      %v2743 = vadd.f32 %v2727, %v2639
      %v2744 = vadd.f32 %v2728, %v2643
      %v2745 = vadd.f32 %v2729, %v2647
      %s2746 = scalar_lea.vmem [#allocation8], 256
      %v2747 = vld [vmem:[%s2746] sm:$0xff]
      %v2748 = vld [vmem:[%s2746 + $0x8] sm:$0xff]
      %v2749 = vld [vmem:[%s2746 + $0x10] sm:$0xff]
      %v2750 = vld [vmem:[%s2746 + $0x18] sm:$0xff]
      %v2751 = vld [vmem:[%s2746 + $0x20] sm:$0xff]
      %v2752 = vld [vmem:[%s2746 + $0x28] sm:$0xff]
      %v2753 = vld [vmem:[%s2746 + $0x30] sm:$0xff]
      %v2754 = vld [vmem:[%s2746 + $0x38] sm:$0xff]
      %v2755 = vld [vmem:[%s2746 + $0x40] sm:$0xff]
      %v2756 = vld [vmem:[%s2746 + $0x48] sm:$0xff]
      %v2757 = vld [vmem:[%s2746 + $0x50] sm:$0xff]
      %v2758 = vld [vmem:[%s2746 + $0x58] sm:$0xff]
      %v2759 = vld [vmem:[%s2746 + $0x60] sm:$0xff]
      %v2760 = vld [vmem:[%s2746 + $0x68] sm:$0xff]
      %v2761 = vld [vmem:[%s2746 + $0x70] sm:$0xff]
      %v2762 = vld [vmem:[%s2746 + $0x78] sm:$0xff]
      %v2763 = vadd.f32 %v2747, %v2588
      %v2764 = vadd.f32 %v2748, %v2592
      %v2765 = vadd.f32 %v2749, %v2596
      %v2766 = vadd.f32 %v2750, %v2600
      %v2767 = vadd.f32 %v2751, %v2604
      %v2768 = vadd.f32 %v2752, %v2608
      %v2769 = vadd.f32 %v2753, %v2612
      %v2770 = vadd.f32 %v2754, %v2616
      %v2771 = vadd.f32 %v2755, %v2620
      %v2772 = vadd.f32 %v2756, %v2624
      %v2773 = vadd.f32 %v2757, %v2628
      %v2774 = vadd.f32 %v2758, %v2632
      %v2775 = vadd.f32 %v2759, %v2636
      %v2776 = vadd.f32 %v2760, %v2640
      %v2777 = vadd.f32 %v2761, %v2644
      %v2778 = vadd.f32 %v2762, %v2648
      %v2779 = vpack.c.bf16 %v2698, %v2697
      %v2780 = vpack.c.bf16 %v2700, %v2699
      %v2781 = vpack.c.bf16 %v2702, %v2701
      %v2782 = vpack.c.bf16 %v2704, %v2703
      %v2783 = vpack.c.bf16 %v2706, %v2705
      %v2784 = vpack.c.bf16 %v2708, %v2707
      %v2785 = vpack.c.bf16 %v2710, %v2709
      %v2786 = vpack.c.bf16 %v2712, %v2711
      %v2787 = vpack.c.bf16 %v2731, %v2730
      %v2788 = vpack.c.bf16 %v2733, %v2732
      %v2789 = vpack.c.bf16 %v2735, %v2734
      %v2790 = vpack.c.bf16 %v2737, %v2736
      %v2791 = vpack.c.bf16 %v2739, %v2738
      %v2792 = vpack.c.bf16 %v2741, %v2740
      %v2793 = vpack.c.bf16 %v2743, %v2742
      %v2794 = vpack.c.bf16 %v2745, %v2744
      %v2795 = vpack.c.bf16 %v2764, %v2763
      %v2796 = vpack.c.bf16 %v2766, %v2765
      %v2797 = vpack.c.bf16 %v2768, %v2767
      %v2798 = vpack.c.bf16 %v2770, %v2769
      %v2799 = vpack.c.bf16 %v2772, %v2771
      %v2800 = vpack.c.bf16 %v2774, %v2773
      %v2801 = vpack.c.bf16 %v2776, %v2775
      %v2802 = vpack.c.bf16 %v2778, %v2777
      %v2803 = vld [vmem:[#allocation17] sm:$0xf]
      %v2804 = vld [vmem:[#allocation17 + $0x4] sm:$0xf]
      %v2805 = vld [vmem:[#allocation17 + $0x8] sm:$0xf]
      %v2806 = vld [vmem:[#allocation17 + $0xc] sm:$0xf]
      %v2807 = vld [vmem:[#allocation17 + $0x10] sm:$0xf]
      %v2808 = vld [vmem:[#allocation17 + $0x14] sm:$0xf]
      %v2809 = vld [vmem:[#allocation17 + $0x18] sm:$0xf]
      %v2810 = vld [vmem:[#allocation17 + $0x1c] sm:$0xf]
      %v2811 = vld [vmem:[#allocation17 + $0x20] sm:$0xf]
      %v2812 = vld [vmem:[#allocation17 + $0x24] sm:$0xf]
      %v2813 = vld [vmem:[#allocation17 + $0x28] sm:$0xf]
      %v2814 = vld [vmem:[#allocation17 + $0x2c] sm:$0xf]
      %v2815 = vld [vmem:[#allocation17 + $0x30] sm:$0xf]
      %v2816 = vld [vmem:[#allocation17 + $0x34] sm:$0xf]
      %v2817 = vld [vmem:[#allocation17 + $0x38] sm:$0xf]
      %v2818 = vld [vmem:[#allocation17 + $0x3c] sm:$0xf]
      %v2835 = vunpack.c.l.b16 %v2803
      %v2836 = vunpack.c.l.b16 %v2804
      %v2837 = vunpack.c.l.b16 %v2805
      %v2838 = vunpack.c.l.b16 %v2806
      %v2839 = vunpack.c.l.b16 %v2807
      %v2840 = vunpack.c.l.b16 %v2808
      %v2841 = vunpack.c.l.b16 %v2809
      %v2842 = vunpack.c.l.b16 %v2810
      %v2843 = vunpack.c.l.b16 %v2811
      %v2844 = vunpack.c.l.b16 %v2812
      %v2845 = vunpack.c.l.b16 %v2813
      %v2846 = vunpack.c.l.b16 %v2814
      %v2847 = vunpack.c.l.b16 %v2815
      %v2848 = vunpack.c.l.b16 %v2816
      %v2849 = vunpack.c.l.b16 %v2817
      %v2850 = vunpack.c.l.b16 %v2818
      %v2851 = vpack.c.b16 %v2836, %v2835
      %v2852 = vpack.c.b16 %v2838, %v2837
      %v2853 = vpack.c.b16 %v2840, %v2839
      %v2854 = vpack.c.b16 %v2842, %v2841
      %v2855 = vpack.c.b16 %v2844, %v2843
      %v2856 = vpack.c.b16 %v2846, %v2845
      %v2857 = vpack.c.b16 %v2848, %v2847
      %v2858 = vpack.c.b16 %v2850, %v2849
      %2867 = vmatprep.subr.bf16.mxu0 0
      %2868 = vmatpush1.bf16.msra.mxu0 %v2858
      %2869 = vmatprep.subr.bf16.mxu0 0
      %2870 = vmatpush1.bf16.msra.mxu0 %v2857
      %2871 = vmatprep.subr.bf16.mxu0 0
      %2872 = vmatpush1.bf16.msra.mxu0 %v2856
      %2873 = vmatprep.subr.bf16.mxu0 0
      %2874 = vmatpush1.bf16.msra.mxu0 %v2855
      %2875 = vmatprep.subr.bf16.mxu0 0
      %2876 = vmatpush1.bf16.msra.mxu0 %v2854
      %2877 = vmatprep.subr.bf16.mxu0 0
      %2878 = vmatpush1.bf16.msra.mxu0 %v2853
      %2879 = vmatprep.subr.bf16.mxu0 0
      %2880 = vmatpush1.bf16.msra.mxu0 %v2852
      %2881 = vmatprep.subr.bf16.mxu0 0
      %2882 = vmatpush1.bf16.msra.mxu0 %v2851
      %2883 = vmatprep.subr.bf16.mxu0 0
      %2884 = vmatpush2.bf16.msra.mxu0 0
      %2885 = vmatprep.subr.bf16.mxu0 0
      %2886 = vmatpush2.bf16.msra.mxu0 0
      %2887 = vmatprep.subr.bf16.mxu0 0
      %2888 = vmatpush2.bf16.msra.mxu0 0
      %2889 = vmatprep.subr.bf16.mxu0 0
      %2890 = vmatpush2.bf16.msra.mxu0 0
      %2891 = vmatprep.subr.bf16.mxu0 0
      %2892 = vmatpush2.bf16.msra.mxu0 0
      %2893 = vmatprep.subr.bf16.mxu0 0
      %2894 = vmatpush2.bf16.msra.mxu0 0
      %2895 = vmatprep.subr.bf16.mxu0 0
      %2896 = vmatpush2.bf16.msra.mxu0 0
      %2897 = vmatprep.subr.bf16.mxu0 0
      %2898 = vmatpush2.bf16.msra.mxu0 0
      %2899 = vmatprep.mubr.bf16.mxu0 0
      %2900 = vmatmul.mubr.bf16.gmra.mxu0 %v2779
      %v2901 = vpop.f32.mrf.mxu0
      %v2902 = vadd.f32 0.0, %v2901
      %v2903 = vpop.f32.mrf.mxu0
      %v2904 = vpop.f32.mrf.mxu0
      %v2905 = vadd.f32 0.0, %v2904
      %v2906 = vpop.f32.mrf.mxu0
      %2907 = vmatprep.mubr.bf16.mxu0 0
      %2908 = vmatmul.mubr.bf16.gmra.mxu0 %v2780
      %v2909 = vpop.f32.mrf.mxu0
      %v2910 = vadd.f32 0.0, %v2909
      %v2911 = vpop.f32.mrf.mxu0
      %v2912 = vpop.f32.mrf.mxu0
      %v2913 = vadd.f32 0.0, %v2912
      %v2914 = vpop.f32.mrf.mxu0
      %2915 = vmatprep.mubr.bf16.mxu0 0
      %2916 = vmatmul.mubr.bf16.gmra.mxu0 %v2781
      %v2917 = vpop.f32.mrf.mxu0
      %v2918 = vadd.f32 0.0, %v2917
      %v2919 = vpop.f32.mrf.mxu0
      %v2920 = vpop.f32.mrf.mxu0
      %v2921 = vadd.f32 0.0, %v2920
      %v2922 = vpop.f32.mrf.mxu0
      %2923 = vmatprep.mubr.bf16.mxu0 0
      %2924 = vmatmul.mubr.bf16.gmra.mxu0 %v2782
      %v2925 = vpop.f32.mrf.mxu0
      %v2926 = vadd.f32 0.0, %v2925
      %v2927 = vpop.f32.mrf.mxu0
      %v2928 = vpop.f32.mrf.mxu0
      %v2929 = vadd.f32 0.0, %v2928
      %v2930 = vpop.f32.mrf.mxu0
      %2931 = vmatprep.mubr.bf16.mxu0 0
      %2932 = vmatmul.mubr.bf16.gmra.mxu0 %v2783
      %v2933 = vpop.f32.mrf.mxu0
      %v2934 = vadd.f32 0.0, %v2933
      %v2935 = vpop.f32.mrf.mxu0
      %v2936 = vpop.f32.mrf.mxu0
      %v2937 = vadd.f32 0.0, %v2936
      %v2938 = vpop.f32.mrf.mxu0
      %2939 = vmatprep.mubr.bf16.mxu0 0
      %2940 = vmatmul.mubr.bf16.gmra.mxu0 %v2784
      %v2941 = vpop.f32.mrf.mxu0
      %v2942 = vadd.f32 0.0, %v2941
      %v2943 = vpop.f32.mrf.mxu0
      %v2944 = vpop.f32.mrf.mxu0
      %v2945 = vadd.f32 0.0, %v2944
      %v2946 = vpop.f32.mrf.mxu0
      %2947 = vmatprep.mubr.bf16.mxu0 0
      %2948 = vmatmul.mubr.bf16.gmra.mxu0 %v2785
      %v2949 = vpop.f32.mrf.mxu0
      %v2950 = vadd.f32 0.0, %v2949
      %v2951 = vpop.f32.mrf.mxu0
      %v2952 = vpop.f32.mrf.mxu0
      %v2953 = vadd.f32 0.0, %v2952
      %v2954 = vpop.f32.mrf.mxu0
      %2955 = vmatprep.mubr.bf16.mxu0 0
      %2956 = vmatmul.mubr.bf16.gmra.mxu0 %v2786
      %v2957 = vpop.f32.mrf.mxu0
      %v2958 = vadd.f32 0.0, %v2957
      %v2959 = vpop.f32.mrf.mxu0
      %v2960 = vpop.f32.mrf.mxu0
      %v2961 = vadd.f32 0.0, %v2960
      %v2962 = vpop.f32.mrf.mxu0
      %2963 = vmatprep.mubr.bf16.mxu0 0
      %2964 = vmatmul.mubr.bf16.gmra.mxu0 %v2787
      %v2965 = vpop.f32.mrf.mxu0
      %v2966 = vadd.f32 0.0, %v2965
      %v2967 = vpop.f32.mrf.mxu0
      %v2968 = vpop.f32.mrf.mxu0
      %v2969 = vadd.f32 0.0, %v2968
      %v2970 = vpop.f32.mrf.mxu0
      %2971 = vmatprep.mubr.bf16.mxu0 0
      %2972 = vmatmul.mubr.bf16.gmra.mxu0 %v2788
      %v2973 = vpop.f32.mrf.mxu0
      %v2974 = vadd.f32 0.0, %v2973
      %v2975 = vpop.f32.mrf.mxu0
      %v2976 = vpop.f32.mrf.mxu0
      %v2977 = vadd.f32 0.0, %v2976
      %v2978 = vpop.f32.mrf.mxu0
      %2979 = vmatprep.mubr.bf16.mxu0 0
      %2980 = vmatmul.mubr.bf16.gmra.mxu0 %v2789
      %v2981 = vpop.f32.mrf.mxu0
      %v2982 = vadd.f32 0.0, %v2981
      %v2983 = vpop.f32.mrf.mxu0
      %v2984 = vpop.f32.mrf.mxu0
      %v2985 = vadd.f32 0.0, %v2984
      %v2986 = vpop.f32.mrf.mxu0
      %2987 = vmatprep.mubr.bf16.mxu0 0
      %2988 = vmatmul.mubr.bf16.gmra.mxu0 %v2790
      %v2989 = vpop.f32.mrf.mxu0
      %v2990 = vadd.f32 0.0, %v2989
      %v2991 = vpop.f32.mrf.mxu0
      %v2992 = vpop.f32.mrf.mxu0
      %v2993 = vadd.f32 0.0, %v2992
      %v2994 = vpop.f32.mrf.mxu0
      %2995 = vmatprep.mubr.bf16.mxu0 0
      %2996 = vmatmul.mubr.bf16.gmra.mxu0 %v2791
      %v2997 = vpop.f32.mrf.mxu0
      %v2998 = vadd.f32 0.0, %v2997
      %v2999 = vpop.f32.mrf.mxu0
      %v3000 = vpop.f32.mrf.mxu0
      %v3001 = vadd.f32 0.0, %v3000
      %v3002 = vpop.f32.mrf.mxu0
      %3003 = vmatprep.mubr.bf16.mxu0 0
      %3004 = vmatmul.mubr.bf16.gmra.mxu0 %v2792
      %v3005 = vpop.f32.mrf.mxu0
      %v3006 = vadd.f32 0.0, %v3005
      %v3007 = vpop.f32.mrf.mxu0
      %v3008 = vpop.f32.mrf.mxu0
      %v3009 = vadd.f32 0.0, %v3008
      %v3010 = vpop.f32.mrf.mxu0
      %3011 = vmatprep.mubr.bf16.mxu0 0
      %3012 = vmatmul.mubr.bf16.gmra.mxu0 %v2793
      %v3013 = vpop.f32.mrf.mxu0
      %v3014 = vadd.f32 0.0, %v3013
      %v3015 = vpop.f32.mrf.mxu0
      %v3016 = vpop.f32.mrf.mxu0
      %v3017 = vadd.f32 0.0, %v3016
      %v3018 = vpop.f32.mrf.mxu0
      %3019 = vmatprep.mubr.bf16.mxu0 0
      %3020 = vmatmul.mubr.bf16.gmra.mxu0 %v2794
      %v3021 = vpop.f32.mrf.mxu0
      %v3022 = vadd.f32 0.0, %v3021
      %v3023 = vpop.f32.mrf.mxu0
      %v3024 = vpop.f32.mrf.mxu0
      %v3025 = vadd.f32 0.0, %v3024
      %v3026 = vpop.f32.mrf.mxu0
      %3027 = vmatprep.mubr.bf16.mxu0 0
      %3028 = vmatmul.mubr.bf16.gmra.mxu0 %v2795
      %v3029 = vpop.f32.mrf.mxu0
      %v3030 = vadd.f32 0.0, %v3029
      %v3031 = vpop.f32.mrf.mxu0
      %v3032 = vpop.f32.mrf.mxu0
      %v3033 = vadd.f32 0.0, %v3032
      %v3034 = vpop.f32.mrf.mxu0
      %3035 = vmatprep.mubr.bf16.mxu0 0
      %3036 = vmatmul.mubr.bf16.gmra.mxu0 %v2796
      %v3037 = vpop.f32.mrf.mxu0
      %v3038 = vadd.f32 0.0, %v3037
      %v3039 = vpop.f32.mrf.mxu0
      %v3040 = vpop.f32.mrf.mxu0
      %v3041 = vadd.f32 0.0, %v3040
      %v3042 = vpop.f32.mrf.mxu0
      %3043 = vmatprep.mubr.bf16.mxu0 0
      %3044 = vmatmul.mubr.bf16.gmra.mxu0 %v2797
      %v3045 = vpop.f32.mrf.mxu0
      %v3046 = vadd.f32 0.0, %v3045
      %v3047 = vpop.f32.mrf.mxu0
      %v3048 = vpop.f32.mrf.mxu0
      %v3049 = vadd.f32 0.0, %v3048
      %v3050 = vpop.f32.mrf.mxu0
      %3051 = vmatprep.mubr.bf16.mxu0 0
      %3052 = vmatmul.mubr.bf16.gmra.mxu0 %v2798
      %v3053 = vpop.f32.mrf.mxu0
      %v3054 = vadd.f32 0.0, %v3053
      %v3055 = vpop.f32.mrf.mxu0
      %v3056 = vpop.f32.mrf.mxu0
      %v3057 = vadd.f32 0.0, %v3056
      %v3058 = vpop.f32.mrf.mxu0
      %3059 = vmatprep.mubr.bf16.mxu0 0
      %3060 = vmatmul.mubr.bf16.gmra.mxu0 %v2799
      %v3061 = vpop.f32.mrf.mxu0
      %v3062 = vadd.f32 0.0, %v3061
      %v3063 = vpop.f32.mrf.mxu0
      %v3064 = vpop.f32.mrf.mxu0
      %v3065 = vadd.f32 0.0, %v3064
      %v3066 = vpop.f32.mrf.mxu0
      %3067 = vmatprep.mubr.bf16.mxu0 0
      %3068 = vmatmul.mubr.bf16.gmra.mxu0 %v2800
      %v3069 = vpop.f32.mrf.mxu0
      %v3070 = vadd.f32 0.0, %v3069
      %v3071 = vpop.f32.mrf.mxu0
      %v3072 = vpop.f32.mrf.mxu0
      %v3073 = vadd.f32 0.0, %v3072
      %v3074 = vpop.f32.mrf.mxu0
      %3075 = vmatprep.mubr.bf16.mxu0 0
      %3076 = vmatmul.mubr.bf16.gmra.mxu0 %v2801
      %v3077 = vpop.f32.mrf.mxu0
      %v3078 = vadd.f32 0.0, %v3077
      %v3079 = vpop.f32.mrf.mxu0
      %v3080 = vpop.f32.mrf.mxu0
      %v3081 = vadd.f32 0.0, %v3080
      %v3082 = vpop.f32.mrf.mxu0
      %3083 = vmatprep.mubr.bf16.mxu0 0
      %3084 = vmatmul.mubr.bf16.gmra.mxu0 %v2802
      %v3085 = vpop.f32.mrf.mxu0
      %v3086 = vadd.f32 0.0, %v3085
      %v3087 = vpop.f32.mrf.mxu0
      %v3088 = vpop.f32.mrf.mxu0
      %v3089 = vadd.f32 0.0, %v3088
      %v3090 = vpop.f32.mrf.mxu0
      %3091 = vdwg.mxu0
      %v3092 = vpack.c.bf16 %v2905, %v2902
      %v3093 = vpack.c.bf16 %v2913, %v2910
      %v3094 = vpack.c.bf16 %v2921, %v2918
      %v3095 = vpack.c.bf16 %v2929, %v2926
      %v3096 = vpack.c.bf16 %v2937, %v2934
      %v3097 = vpack.c.bf16 %v2945, %v2942
      %v3098 = vpack.c.bf16 %v2953, %v2950
      %v3099 = vpack.c.bf16 %v2961, %v2958
      %v3100 = vpack.c.bf16 %v2969, %v2966
      %v3101 = vpack.c.bf16 %v2977, %v2974
      %v3102 = vpack.c.bf16 %v2985, %v2982
      %v3103 = vpack.c.bf16 %v2993, %v2990
      %v3104 = vpack.c.bf16 %v3001, %v2998
      %v3105 = vpack.c.bf16 %v3009, %v3006
      %v3106 = vpack.c.bf16 %v3017, %v3014
      %v3107 = vpack.c.bf16 %v3025, %v3022
      %v3108 = vpack.c.bf16 %v3033, %v3030
      %v3109 = vpack.c.bf16 %v3041, %v3038
      %v3110 = vpack.c.bf16 %v3049, %v3046
      %v3111 = vpack.c.bf16 %v3057, %v3054
      %v3112 = vpack.c.bf16 %v3065, %v3062
      %v3113 = vpack.c.bf16 %v3073, %v3070
      %v3114 = vpack.c.bf16 %v3081, %v3078
      %v3115 = vpack.c.bf16 %v3089, %v3086
      %v3116 = vld [vmem:[#allocation19] sm:$0xf]
      %v3117 = vld [vmem:[#allocation19 + $0x4] sm:$0xf]
      %v3118 = vld [vmem:[#allocation19 + $0x8] sm:$0xf]
      %v3119 = vld [vmem:[#allocation19 + $0xc] sm:$0xf]
      %v3120 = vld [vmem:[#allocation19 + $0x10] sm:$0xf]
      %v3121 = vld [vmem:[#allocation19 + $0x14] sm:$0xf]
      %v3122 = vld [vmem:[#allocation19 + $0x18] sm:$0xf]
      %v3123 = vld [vmem:[#allocation19 + $0x1c] sm:$0xf]
      %v3124 = vld [vmem:[#allocation19 + $0x20] sm:$0xf]
      %v3125 = vld [vmem:[#allocation19 + $0x24] sm:$0xf]
      %v3126 = vld [vmem:[#allocation19 + $0x28] sm:$0xf]
      %v3127 = vld [vmem:[#allocation19 + $0x2c] sm:$0xf]
      %v3128 = vld [vmem:[#allocation19 + $0x30] sm:$0xf]
      %v3129 = vld [vmem:[#allocation19 + $0x34] sm:$0xf]
      %v3130 = vld [vmem:[#allocation19 + $0x38] sm:$0xf]
      %v3131 = vld [vmem:[#allocation19 + $0x3c] sm:$0xf]
      %v3148 = vunpack.c.l.b16 %v3116
      %v3149 = vunpack.c.l.b16 %v3117
      %v3150 = vunpack.c.l.b16 %v3118
      %v3151 = vunpack.c.l.b16 %v3119
      %v3152 = vunpack.c.l.b16 %v3120
      %v3153 = vunpack.c.l.b16 %v3121
      %v3154 = vunpack.c.l.b16 %v3122
      %v3155 = vunpack.c.l.b16 %v3123
      %v3156 = vunpack.c.l.b16 %v3124
      %v3157 = vunpack.c.l.b16 %v3125
      %v3158 = vunpack.c.l.b16 %v3126
      %v3159 = vunpack.c.l.b16 %v3127
      %v3160 = vunpack.c.l.b16 %v3128
      %v3161 = vunpack.c.l.b16 %v3129
      %v3162 = vunpack.c.l.b16 %v3130
      %v3163 = vunpack.c.l.b16 %v3131
      %v3164 = vpack.c.b16 %v3149, %v3148
      %v3165 = vpack.c.b16 %v3151, %v3150
      %v3166 = vpack.c.b16 %v3153, %v3152
      %v3167 = vpack.c.b16 %v3155, %v3154
      %v3168 = vpack.c.b16 %v3157, %v3156
      %v3169 = vpack.c.b16 %v3159, %v3158
      %v3170 = vpack.c.b16 %v3161, %v3160
      %v3171 = vpack.c.b16 %v3163, %v3162
      %3180 = vmatprep.subr.bf16.mxu0 0
      %3181 = vmatpush1.bf16.msra.mxu0 %v3171
      %3182 = vmatprep.subr.bf16.mxu0 0
      %3183 = vmatpush1.bf16.msra.mxu0 %v3170
      %3184 = vmatprep.subr.bf16.mxu0 0
      %3185 = vmatpush1.bf16.msra.mxu0 %v3169
      %3186 = vmatprep.subr.bf16.mxu0 0
      %3187 = vmatpush1.bf16.msra.mxu0 %v3168
      %3188 = vmatprep.subr.bf16.mxu0 0
      %3189 = vmatpush1.bf16.msra.mxu0 %v3167
      %3190 = vmatprep.subr.bf16.mxu0 0
      %3191 = vmatpush1.bf16.msra.mxu0 %v3166
      %3192 = vmatprep.subr.bf16.mxu0 0
      %3193 = vmatpush1.bf16.msra.mxu0 %v3165
      %3194 = vmatprep.subr.bf16.mxu0 0
      %3195 = vmatpush1.bf16.msra.mxu0 %v3164
      %3196 = vmatprep.subr.bf16.mxu0 0
      %3197 = vmatpush2.bf16.msra.mxu0 0
      %3198 = vmatprep.subr.bf16.mxu0 0
      %3199 = vmatpush2.bf16.msra.mxu0 0
      %3200 = vmatprep.subr.bf16.mxu0 0
      %3201 = vmatpush2.bf16.msra.mxu0 0
      %3202 = vmatprep.subr.bf16.mxu0 0
      %3203 = vmatpush2.bf16.msra.mxu0 0
      %3204 = vmatprep.subr.bf16.mxu0 0
      %3205 = vmatpush2.bf16.msra.mxu0 0
      %3206 = vmatprep.subr.bf16.mxu0 0
      %3207 = vmatpush2.bf16.msra.mxu0 0
      %3208 = vmatprep.subr.bf16.mxu0 0
      %3209 = vmatpush2.bf16.msra.mxu0 0
      %3210 = vmatprep.subr.bf16.mxu0 0
      %3211 = vmatpush2.bf16.msra.mxu0 0
      %3212 = vmatprep.mubr.bf16.mxu0 0
      %3213 = vmatmul.mubr.bf16.gmra.mxu0 %v3092
      %v3214 = vpop.f32.mrf.mxu0
      %v3215 = vadd.f32 0.0, %v3214
      %v3216 = vpop.f32.mrf.mxu0
      %v3217 = vpop.f32.mrf.mxu0
      %v3218 = vadd.f32 0.0, %v3217
      %v3219 = vpop.f32.mrf.mxu0
      %3220 = vmatprep.mubr.bf16.mxu0 0
      %3221 = vmatmul.mubr.bf16.gmra.mxu0 %v3093
      %v3222 = vpop.f32.mrf.mxu0
      %v3223 = vadd.f32 0.0, %v3222
      %v3224 = vpop.f32.mrf.mxu0
      %v3225 = vpop.f32.mrf.mxu0
      %v3226 = vadd.f32 0.0, %v3225
      %v3227 = vpop.f32.mrf.mxu0
      %3228 = vmatprep.mubr.bf16.mxu0 0
      %3229 = vmatmul.mubr.bf16.gmra.mxu0 %v3094
      %v3230 = vpop.f32.mrf.mxu0
      %v3231 = vadd.f32 0.0, %v3230
      %v3232 = vpop.f32.mrf.mxu0
      %v3233 = vpop.f32.mrf.mxu0
      %v3234 = vadd.f32 0.0, %v3233
      %v3235 = vpop.f32.mrf.mxu0
      %3236 = vmatprep.mubr.bf16.mxu0 0
      %3237 = vmatmul.mubr.bf16.gmra.mxu0 %v3095
      %v3238 = vpop.f32.mrf.mxu0
      %v3239 = vadd.f32 0.0, %v3238
      %v3240 = vpop.f32.mrf.mxu0
      %v3241 = vpop.f32.mrf.mxu0
      %v3242 = vadd.f32 0.0, %v3241
      %v3243 = vpop.f32.mrf.mxu0
      %3244 = vmatprep.mubr.bf16.mxu0 0
      %3245 = vmatmul.mubr.bf16.gmra.mxu0 %v3096
      %v3246 = vpop.f32.mrf.mxu0
      %v3247 = vadd.f32 0.0, %v3246
      %v3248 = vpop.f32.mrf.mxu0
      %v3249 = vpop.f32.mrf.mxu0
      %v3250 = vadd.f32 0.0, %v3249
      %v3251 = vpop.f32.mrf.mxu0
      %3252 = vmatprep.mubr.bf16.mxu0 0
      %3253 = vmatmul.mubr.bf16.gmra.mxu0 %v3097
      %v3254 = vpop.f32.mrf.mxu0
      %v3255 = vadd.f32 0.0, %v3254
      %v3256 = vpop.f32.mrf.mxu0
      %v3257 = vpop.f32.mrf.mxu0
      %v3258 = vadd.f32 0.0, %v3257
      %v3259 = vpop.f32.mrf.mxu0
      %3260 = vmatprep.mubr.bf16.mxu0 0
      %3261 = vmatmul.mubr.bf16.gmra.mxu0 %v3098
      %v3262 = vpop.f32.mrf.mxu0
      %v3263 = vadd.f32 0.0, %v3262
      %v3264 = vpop.f32.mrf.mxu0
      %v3265 = vpop.f32.mrf.mxu0
      %v3266 = vadd.f32 0.0, %v3265
      %v3267 = vpop.f32.mrf.mxu0
      %3268 = vmatprep.mubr.bf16.mxu0 0
      %3269 = vmatmul.mubr.bf16.gmra.mxu0 %v3099
      %v3270 = vpop.f32.mrf.mxu0
      %v3271 = vadd.f32 0.0, %v3270
      %v3272 = vpop.f32.mrf.mxu0
      %v3273 = vpop.f32.mrf.mxu0
      %v3274 = vadd.f32 0.0, %v3273
      %v3275 = vpop.f32.mrf.mxu0
      %3276 = vmatprep.mubr.bf16.mxu0 0
      %3277 = vmatmul.mubr.bf16.gmra.mxu0 %v3100
      %v3278 = vpop.f32.mrf.mxu0
      %v3279 = vadd.f32 0.0, %v3278
      %v3280 = vpop.f32.mrf.mxu0
      %v3281 = vpop.f32.mrf.mxu0
      %v3282 = vadd.f32 0.0, %v3281
      %v3283 = vpop.f32.mrf.mxu0
      %3284 = vmatprep.mubr.bf16.mxu0 0
      %3285 = vmatmul.mubr.bf16.gmra.mxu0 %v3101
      %v3286 = vpop.f32.mrf.mxu0
      %v3287 = vadd.f32 0.0, %v3286
      %v3288 = vpop.f32.mrf.mxu0
      %v3289 = vpop.f32.mrf.mxu0
      %v3290 = vadd.f32 0.0, %v3289
      %v3291 = vpop.f32.mrf.mxu0
      %3292 = vmatprep.mubr.bf16.mxu0 0
      %3293 = vmatmul.mubr.bf16.gmra.mxu0 %v3102
      %v3294 = vpop.f32.mrf.mxu0
      %v3295 = vadd.f32 0.0, %v3294
      %v3296 = vpop.f32.mrf.mxu0
      %v3297 = vpop.f32.mrf.mxu0
      %v3298 = vadd.f32 0.0, %v3297
      %v3299 = vpop.f32.mrf.mxu0
      %3300 = vmatprep.mubr.bf16.mxu0 0
      %3301 = vmatmul.mubr.bf16.gmra.mxu0 %v3103
      %v3302 = vpop.f32.mrf.mxu0
      %v3303 = vadd.f32 0.0, %v3302
      %v3304 = vpop.f32.mrf.mxu0
      %v3305 = vpop.f32.mrf.mxu0
      %v3306 = vadd.f32 0.0, %v3305
      %v3307 = vpop.f32.mrf.mxu0
      %3308 = vmatprep.mubr.bf16.mxu0 0
      %3309 = vmatmul.mubr.bf16.gmra.mxu0 %v3104
      %v3310 = vpop.f32.mrf.mxu0
      %v3311 = vadd.f32 0.0, %v3310
      %v3312 = vpop.f32.mrf.mxu0
      %v3313 = vpop.f32.mrf.mxu0
      %v3314 = vadd.f32 0.0, %v3313
      %v3315 = vpop.f32.mrf.mxu0
      %3316 = vmatprep.mubr.bf16.mxu0 0
      %3317 = vmatmul.mubr.bf16.gmra.mxu0 %v3105
      %v3318 = vpop.f32.mrf.mxu0
      %v3319 = vadd.f32 0.0, %v3318
      %v3320 = vpop.f32.mrf.mxu0
      %v3321 = vpop.f32.mrf.mxu0
      %v3322 = vadd.f32 0.0, %v3321
      %v3323 = vpop.f32.mrf.mxu0
      %3324 = vmatprep.mubr.bf16.mxu0 0
      %3325 = vmatmul.mubr.bf16.gmra.mxu0 %v3106
      %v3326 = vpop.f32.mrf.mxu0
      %v3327 = vadd.f32 0.0, %v3326
      %v3328 = vpop.f32.mrf.mxu0
      %v3329 = vpop.f32.mrf.mxu0
      %v3330 = vadd.f32 0.0, %v3329
      %v3331 = vpop.f32.mrf.mxu0
      %3332 = vmatprep.mubr.bf16.mxu0 0
      %3333 = vmatmul.mubr.bf16.gmra.mxu0 %v3107
      %v3334 = vpop.f32.mrf.mxu0
      %v3335 = vadd.f32 0.0, %v3334
      %v3336 = vpop.f32.mrf.mxu0
      %v3337 = vpop.f32.mrf.mxu0
      %v3338 = vadd.f32 0.0, %v3337
      %v3339 = vpop.f32.mrf.mxu0
      %3340 = vmatprep.mubr.bf16.mxu0 0
      %3341 = vmatmul.mubr.bf16.gmra.mxu0 %v3108
      %v3342 = vpop.f32.mrf.mxu0
      %v3343 = vadd.f32 0.0, %v3342
      %v3344 = vpop.f32.mrf.mxu0
      %v3345 = vpop.f32.mrf.mxu0
      %v3346 = vadd.f32 0.0, %v3345
      %v3347 = vpop.f32.mrf.mxu0
      %3348 = vmatprep.mubr.bf16.mxu0 0
      %3349 = vmatmul.mubr.bf16.gmra.mxu0 %v3109
      %v3350 = vpop.f32.mrf.mxu0
      %v3351 = vadd.f32 0.0, %v3350
      %v3352 = vpop.f32.mrf.mxu0
      %v3353 = vpop.f32.mrf.mxu0
      %v3354 = vadd.f32 0.0, %v3353
      %v3355 = vpop.f32.mrf.mxu0
      %3356 = vmatprep.mubr.bf16.mxu0 0
      %3357 = vmatmul.mubr.bf16.gmra.mxu0 %v3110
      %v3358 = vpop.f32.mrf.mxu0
      %v3359 = vadd.f32 0.0, %v3358
      %v3360 = vpop.f32.mrf.mxu0
      %v3361 = vpop.f32.mrf.mxu0
      %v3362 = vadd.f32 0.0, %v3361
      %v3363 = vpop.f32.mrf.mxu0
      %3364 = vmatprep.mubr.bf16.mxu0 0
      %3365 = vmatmul.mubr.bf16.gmra.mxu0 %v3111
      %v3366 = vpop.f32.mrf.mxu0
      %v3367 = vadd.f32 0.0, %v3366
      %v3368 = vpop.f32.mrf.mxu0
      %v3369 = vpop.f32.mrf.mxu0
      %v3370 = vadd.f32 0.0, %v3369
      %v3371 = vpop.f32.mrf.mxu0
      %3372 = vmatprep.mubr.bf16.mxu0 0
      %3373 = vmatmul.mubr.bf16.gmra.mxu0 %v3112
      %v3374 = vpop.f32.mrf.mxu0
      %v3375 = vadd.f32 0.0, %v3374
      %v3376 = vpop.f32.mrf.mxu0
      %v3377 = vpop.f32.mrf.mxu0
      %v3378 = vadd.f32 0.0, %v3377
      %v3379 = vpop.f32.mrf.mxu0
      %3380 = vmatprep.mubr.bf16.mxu0 0
      %3381 = vmatmul.mubr.bf16.gmra.mxu0 %v3113
      %v3382 = vpop.f32.mrf.mxu0
      %v3383 = vadd.f32 0.0, %v3382
      %v3384 = vpop.f32.mrf.mxu0
      %v3385 = vpop.f32.mrf.mxu0
      %v3386 = vadd.f32 0.0, %v3385
      %v3387 = vpop.f32.mrf.mxu0
      %3388 = vmatprep.mubr.bf16.mxu0 0
      %3389 = vmatmul.mubr.bf16.gmra.mxu0 %v3114
      %v3390 = vpop.f32.mrf.mxu0
      %v3391 = vadd.f32 0.0, %v3390
      %v3392 = vpop.f32.mrf.mxu0
      %v3393 = vpop.f32.mrf.mxu0
      %v3394 = vadd.f32 0.0, %v3393
      %v3395 = vpop.f32.mrf.mxu0
      %3396 = vmatprep.mubr.bf16.mxu0 0
      %3397 = vmatmul.mubr.bf16.gmra.mxu0 %v3115
      %v3398 = vpop.f32.mrf.mxu0
      %v3399 = vadd.f32 0.0, %v3398
      %v3400 = vpop.f32.mrf.mxu0
      %v3401 = vpop.f32.mrf.mxu0
      %v3402 = vadd.f32 0.0, %v3401
      %v3403 = vpop.f32.mrf.mxu0
      %3404 = vdwg.mxu0
      %v3405 = vmul.f32 %v2902, %v2902
      %v3406 = vmul.f32 %v2905, %v2905
      %v3407 = vmul.f32 %v2910, %v2910
      %v3408 = vmul.f32 %v2913, %v2913
      %v3409 = vmul.f32 %v2918, %v2918
      %v3410 = vmul.f32 %v2921, %v2921
      %v3411 = vmul.f32 %v2926, %v2926
      %v3412 = vmul.f32 %v2929, %v2929
      %v3413 = vmul.f32 %v2934, %v2934
      %v3414 = vmul.f32 %v2937, %v2937
      %v3415 = vmul.f32 %v2942, %v2942
      %v3416 = vmul.f32 %v2945, %v2945
      %v3417 = vmul.f32 %v2950, %v2950
      %v3418 = vmul.f32 %v2953, %v2953
      %v3419 = vmul.f32 %v2958, %v2958
      %v3420 = vmul.f32 %v2961, %v2961
      %v3421 = vmul.f32 %v2966, %v2966
      %v3422 = vmul.f32 %v2969, %v2969
      %v3423 = vmul.f32 %v2974, %v2974
      %v3424 = vmul.f32 %v2977, %v2977
      %v3425 = vmul.f32 %v2982, %v2982
      %v3426 = vmul.f32 %v2985, %v2985
      %v3427 = vmul.f32 %v2990, %v2990
      %v3428 = vmul.f32 %v2993, %v2993
      %v3429 = vmul.f32 %v2998, %v2998
      %v3430 = vmul.f32 %v3001, %v3001
      %v3431 = vmul.f32 %v3006, %v3006
      %v3432 = vmul.f32 %v3009, %v3009
      %v3433 = vmul.f32 %v3014, %v3014
      %v3434 = vmul.f32 %v3017, %v3017
      %v3435 = vmul.f32 %v3022, %v3022
      %v3436 = vmul.f32 %v3025, %v3025
      %v3437 = vadd.f32 %v3405, %v3421
      %v3438 = vadd.f32 %v3406, %v3422
      %v3439 = vadd.f32 %v3407, %v3423
      %v3440 = vadd.f32 %v3408, %v3424
      %v3441 = vadd.f32 %v3409, %v3425
      %v3442 = vadd.f32 %v3410, %v3426
      %v3443 = vadd.f32 %v3411, %v3427
      %v3444 = vadd.f32 %v3412, %v3428
      %v3445 = vadd.f32 %v3413, %v3429
      %v3446 = vadd.f32 %v3414, %v3430
      %v3447 = vadd.f32 %v3415, %v3431
      %v3448 = vadd.f32 %v3416, %v3432
      %v3449 = vadd.f32 %v3417, %v3433
      %v3450 = vadd.f32 %v3418, %v3434
      %v3451 = vadd.f32 %v3419, %v3435
      %v3452 = vadd.f32 %v3420, %v3436
      %v3453 = vmul.f32 %v3030, %v3030
      %v3454 = vmul.f32 %v3033, %v3033
      %v3455 = vmul.f32 %v3038, %v3038
      %v3456 = vmul.f32 %v3041, %v3041
      %v3457 = vmul.f32 %v3046, %v3046
      %v3458 = vmul.f32 %v3049, %v3049
      %v3459 = vmul.f32 %v3054, %v3054
      %v3460 = vmul.f32 %v3057, %v3057
      %v3461 = vmul.f32 %v3062, %v3062
      %v3462 = vmul.f32 %v3065, %v3065
      %v3463 = vmul.f32 %v3070, %v3070
      %v3464 = vmul.f32 %v3073, %v3073
      %v3465 = vmul.f32 %v3078, %v3078
      %v3466 = vmul.f32 %v3081, %v3081
      %v3467 = vmul.f32 %v3086, %v3086
      %v3468 = vmul.f32 %v3089, %v3089
      %v3469 = vadd.f32 %v3437, %v3453
      %v3470 = vadd.f32 %v3438, %v3454
      %v3471 = vadd.f32 %v3439, %v3455
      %v3472 = vadd.f32 %v3440, %v3456
      %v3473 = vadd.f32 %v3441, %v3457
      %v3474 = vadd.f32 %v3442, %v3458
      %v3475 = vadd.f32 %v3443, %v3459
      %v3476 = vadd.f32 %v3444, %v3460
      %v3477 = vadd.f32 %v3445, %v3461
      %v3478 = vadd.f32 %v3446, %v3462
      %v3479 = vadd.f32 %v3447, %v3463
      %v3480 = vadd.f32 %v3448, %v3464
      %v3481 = vadd.f32 %v3449, %v3465
      %v3482 = vadd.f32 %v3450, %v3466
      %v3483 = vadd.f32 %v3451, %v3467
      %v3484 = vadd.f32 %v3452, %v3468
      %v3485 = vrsqrt.pop %v3469
      %v3486 = vmul.f32 %v3469, %v3485
      %vm3487 = vcmp.eq.f32.partialorder %v3469, inf
      %v3488 = vsel %vm3487, %v3469, %v3486
      %vm3489 = vcmp.eq.f32.partialorder %v3469, 0.0
      %v3490 = vand.u32 %v3469, 2147483648
      %v3491 = vsel %vm3489, %v3490, %v3488
      %v3492 = vrsqrt.pop %v3470
      %v3493 = vmul.f32 %v3470, %v3492
      %vm3494 = vcmp.eq.f32.partialorder %v3470, inf
      %v3495 = vsel %vm3494, %v3470, %v3493
      %vm3496 = vcmp.eq.f32.partialorder %v3470, 0.0
      %v3497 = vand.u32 %v3470, 2147483648
      %v3498 = vsel %vm3496, %v3497, %v3495
      %v3499 = vrsqrt.pop %v3471
      %v3500 = vmul.f32 %v3471, %v3499
      %vm3501 = vcmp.eq.f32.partialorder %v3471, inf
      %v3502 = vsel %vm3501, %v3471, %v3500
      %vm3503 = vcmp.eq.f32.partialorder %v3471, 0.0
      %v3504 = vand.u32 %v3471, 2147483648
      %v3505 = vsel %vm3503, %v3504, %v3502
      %v3506 = vrsqrt.pop %v3472
      %v3507 = vmul.f32 %v3472, %v3506
      %vm3508 = vcmp.eq.f32.partialorder %v3472, inf
      %v3509 = vsel %vm3508, %v3472, %v3507
      %vm3510 = vcmp.eq.f32.partialorder %v3472, 0.0
      %v3511 = vand.u32 %v3472, 2147483648
      %v3512 = vsel %vm3510, %v3511, %v3509
      %v3513 = vrsqrt.pop %v3473
      %v3514 = vmul.f32 %v3473, %v3513
      %vm3515 = vcmp.eq.f32.partialorder %v3473, inf
      %v3516 = vsel %vm3515, %v3473, %v3514
      %vm3517 = vcmp.eq.f32.partialorder %v3473, 0.0
      %v3518 = vand.u32 %v3473, 2147483648
      %v3519 = vsel %vm3517, %v3518, %v3516
      %v3520 = vrsqrt.pop %v3474
      %v3521 = vmul.f32 %v3474, %v3520
      %vm3522 = vcmp.eq.f32.partialorder %v3474, inf
      %v3523 = vsel %vm3522, %v3474, %v3521
      %vm3524 = vcmp.eq.f32.partialorder %v3474, 0.0
      %v3525 = vand.u32 %v3474, 2147483648
      %v3526 = vsel %vm3524, %v3525, %v3523
      %v3527 = vrsqrt.pop %v3475
      %v3528 = vmul.f32 %v3475, %v3527
      %vm3529 = vcmp.eq.f32.partialorder %v3475, inf
      %v3530 = vsel %vm3529, %v3475, %v3528
      %vm3531 = vcmp.eq.f32.partialorder %v3475, 0.0
      %v3532 = vand.u32 %v3475, 2147483648
      %v3533 = vsel %vm3531, %v3532, %v3530
      %v3534 = vrsqrt.pop %v3476
      %v3535 = vmul.f32 %v3476, %v3534
      %vm3536 = vcmp.eq.f32.partialorder %v3476, inf
      %v3537 = vsel %vm3536, %v3476, %v3535
      %vm3538 = vcmp.eq.f32.partialorder %v3476, 0.0
      %v3539 = vand.u32 %v3476, 2147483648
      %v3540 = vsel %vm3538, %v3539, %v3537
      %v3541 = vrsqrt.pop %v3477
      %v3542 = vmul.f32 %v3477, %v3541
      %vm3543 = vcmp.eq.f32.partialorder %v3477, inf
      %v3544 = vsel %vm3543, %v3477, %v3542
      %vm3545 = vcmp.eq.f32.partialorder %v3477, 0.0
      %v3546 = vand.u32 %v3477, 2147483648
      %v3547 = vsel %vm3545, %v3546, %v3544
      %v3548 = vrsqrt.pop %v3478
      %v3549 = vmul.f32 %v3478, %v3548
      %vm3550 = vcmp.eq.f32.partialorder %v3478, inf
      %v3551 = vsel %vm3550, %v3478, %v3549
      %vm3552 = vcmp.eq.f32.partialorder %v3478, 0.0
      %v3553 = vand.u32 %v3478, 2147483648
      %v3554 = vsel %vm3552, %v3553, %v3551
      %v3555 = vrsqrt.pop %v3479
      %v3556 = vmul.f32 %v3479, %v3555
      %vm3557 = vcmp.eq.f32.partialorder %v3479, inf
      %v3558 = vsel %vm3557, %v3479, %v3556
      %vm3559 = vcmp.eq.f32.partialorder %v3479, 0.0
      %v3560 = vand.u32 %v3479, 2147483648
      %v3561 = vsel %vm3559, %v3560, %v3558
      %v3562 = vrsqrt.pop %v3480
      %v3563 = vmul.f32 %v3480, %v3562
      %vm3564 = vcmp.eq.f32.partialorder %v3480, inf
      %v3565 = vsel %vm3564, %v3480, %v3563
      %vm3566 = vcmp.eq.f32.partialorder %v3480, 0.0
      %v3567 = vand.u32 %v3480, 2147483648
      %v3568 = vsel %vm3566, %v3567, %v3565
      %v3569 = vrsqrt.pop %v3481
      %v3570 = vmul.f32 %v3481, %v3569
      %vm3571 = vcmp.eq.f32.partialorder %v3481, inf
      %v3572 = vsel %vm3571, %v3481, %v3570
      %vm3573 = vcmp.eq.f32.partialorder %v3481, 0.0
      %v3574 = vand.u32 %v3481, 2147483648
      %v3575 = vsel %vm3573, %v3574, %v3572
      %v3576 = vrsqrt.pop %v3482
      %v3577 = vmul.f32 %v3482, %v3576
      %vm3578 = vcmp.eq.f32.partialorder %v3482, inf
      %v3579 = vsel %vm3578, %v3482, %v3577
      %vm3580 = vcmp.eq.f32.partialorder %v3482, 0.0
      %v3581 = vand.u32 %v3482, 2147483648
      %v3582 = vsel %vm3580, %v3581, %v3579
      %v3583 = vrsqrt.pop %v3483
      %v3584 = vmul.f32 %v3483, %v3583
      %vm3585 = vcmp.eq.f32.partialorder %v3483, inf
      %v3586 = vsel %vm3585, %v3483, %v3584
      %vm3587 = vcmp.eq.f32.partialorder %v3483, 0.0
      %v3588 = vand.u32 %v3483, 2147483648
      %v3589 = vsel %vm3587, %v3588, %v3586
      %v3590 = vrsqrt.pop %v3484
      %v3591 = vmul.f32 %v3484, %v3590
      %vm3592 = vcmp.eq.f32.partialorder %v3484, inf
      %v3593 = vsel %vm3592, %v3484, %v3591
      %vm3594 = vcmp.eq.f32.partialorder %v3484, 0.0
      %v3595 = vand.u32 %v3484, 2147483648
      %v3596 = vsel %vm3594, %v3595, %v3593
      %v3597 = vpack.c.bf16 %v3498, %v3491
      %v3598 = vpack.c.bf16 %v3512, %v3505
      %v3599 = vpack.c.bf16 %v3526, %v3519
      %v3600 = vpack.c.bf16 %v3540, %v3533
      %v3601 = vpack.c.bf16 %v3554, %v3547
      %v3602 = vpack.c.bf16 %v3568, %v3561
      %v3603 = vpack.c.bf16 %v3582, %v3575
      %v3604 = vpack.c.bf16 %v3596, %v3589
      %v3605 = vld [vmem:[#allocation20] sm:$0xf]
      %v3606 = vld [vmem:[#allocation20 + $0x4] sm:$0xf]
      %v3607 = vld [vmem:[#allocation20 + $0x8] sm:$0xf]
      %v3608 = vld [vmem:[#allocation20 + $0xc] sm:$0xf]
      %v3609 = vld [vmem:[#allocation20 + $0x10] sm:$0xf]
      %v3610 = vld [vmem:[#allocation20 + $0x14] sm:$0xf]
      %v3611 = vld [vmem:[#allocation20 + $0x18] sm:$0xf]
      %v3612 = vld [vmem:[#allocation20 + $0x1c] sm:$0xf]
      %v3613 = vld [vmem:[#allocation20 + $0x20] sm:$0xf]
      %v3614 = vld [vmem:[#allocation20 + $0x24] sm:$0xf]
      %v3615 = vld [vmem:[#allocation20 + $0x28] sm:$0xf]
      %v3616 = vld [vmem:[#allocation20 + $0x2c] sm:$0xf]
      %v3617 = vld [vmem:[#allocation20 + $0x30] sm:$0xf]
      %v3618 = vld [vmem:[#allocation20 + $0x34] sm:$0xf]
      %v3619 = vld [vmem:[#allocation20 + $0x38] sm:$0xf]
      %v3620 = vld [vmem:[#allocation20 + $0x3c] sm:$0xf]
      %v3621 = vpack.c.bf16 %v2666, %v2665
      %v3622 = vpack.c.bf16 %v2668, %v2667
      %v3623 = vpack.c.bf16 %v2670, %v2669
      %v3624 = vpack.c.bf16 %v2672, %v2671
      %v3625 = vpack.c.bf16 %v2674, %v2673
      %v3626 = vpack.c.bf16 %v2676, %v2675
      %v3627 = vpack.c.bf16 %v2678, %v2677
      %v3628 = vpack.c.bf16 %v2680, %v2679
      %v3629 = vld [vmem:[#allocation22] sm:$0xf]
      %v3630 = vld [vmem:[#allocation22 + $0x4] sm:$0xf]
      %v3631 = vld [vmem:[#allocation22 + $0x8] sm:$0xf]
      %v3632 = vld [vmem:[#allocation22 + $0xc] sm:$0xf]
      %v3633 = vld [vmem:[#allocation22 + $0x10] sm:$0xf]
      %v3634 = vld [vmem:[#allocation22 + $0x14] sm:$0xf]
      %v3635 = vld [vmem:[#allocation22 + $0x18] sm:$0xf]
      %v3636 = vld [vmem:[#allocation22 + $0x1c] sm:$0xf]
      %v3637 = vld [vmem:[#allocation22 + $0x20] sm:$0xf]
      %v3638 = vld [vmem:[#allocation22 + $0x24] sm:$0xf]
      %v3639 = vld [vmem:[#allocation22 + $0x28] sm:$0xf]
      %v3640 = vld [vmem:[#allocation22 + $0x2c] sm:$0xf]
      %v3641 = vld [vmem:[#allocation22 + $0x30] sm:$0xf]
      %v3642 = vld [vmem:[#allocation22 + $0x34] sm:$0xf]
      %v3643 = vld [vmem:[#allocation22 + $0x38] sm:$0xf]
      %v3644 = vld [vmem:[#allocation22 + $0x3c] sm:$0xf]
      %v3661 = vunpack.c.l.b16 %v3629
      %v3662 = vunpack.c.l.b16 %v3630
      %v3663 = vunpack.c.l.b16 %v3631
      %v3664 = vunpack.c.l.b16 %v3632
      %v3665 = vunpack.c.l.b16 %v3633
      %v3666 = vunpack.c.l.b16 %v3634
      %v3667 = vunpack.c.l.b16 %v3635
      %v3668 = vunpack.c.l.b16 %v3636
      %v3669 = vunpack.c.l.b16 %v3637
      %v3670 = vunpack.c.l.b16 %v3638
      %v3671 = vunpack.c.l.b16 %v3639
      %v3672 = vunpack.c.l.b16 %v3640
      %v3673 = vunpack.c.l.b16 %v3641
      %v3674 = vunpack.c.l.b16 %v3642
      %v3675 = vunpack.c.l.b16 %v3643
      %v3676 = vunpack.c.l.b16 %v3644
      %v3677 = vpack.c.b16 %v3662, %v3661
      %v3678 = vpack.c.b16 %v3664, %v3663
      %v3679 = vpack.c.b16 %v3666, %v3665
      %v3680 = vpack.c.b16 %v3668, %v3667
      %v3681 = vpack.c.b16 %v3670, %v3669
      %v3682 = vpack.c.b16 %v3672, %v3671
      %v3683 = vpack.c.b16 %v3674, %v3673
      %v3684 = vpack.c.b16 %v3676, %v3675
      %3693 = vmatprep.subr.bf16.mxu0 0
      %3694 = vmatpush1.bf16.msra.mxu0 %v3684
      %3695 = vmatprep.subr.bf16.mxu0 0
      %3696 = vmatpush1.bf16.msra.mxu0 %v3683
      %3697 = vmatprep.subr.bf16.mxu0 0
      %3698 = vmatpush1.bf16.msra.mxu0 %v3682
      %3699 = vmatprep.subr.bf16.mxu0 0
      %3700 = vmatpush1.bf16.msra.mxu0 %v3681
      %3701 = vmatprep.subr.bf16.mxu0 0
      %3702 = vmatpush1.bf16.msra.mxu0 %v3680
      %3703 = vmatprep.subr.bf16.mxu0 0
      %3704 = vmatpush1.bf16.msra.mxu0 %v3679
      %3705 = vmatprep.subr.bf16.mxu0 0
      %3706 = vmatpush1.bf16.msra.mxu0 %v3678
      %3707 = vmatprep.subr.bf16.mxu0 0
      %3708 = vmatpush1.bf16.msra.mxu0 %v3677
      %3709 = vmatprep.subr.bf16.mxu0 0
      %3710 = vmatpush2.bf16.msra.mxu0 0
      %3711 = vmatprep.subr.bf16.mxu0 0
      %3712 = vmatpush2.bf16.msra.mxu0 0
      %3713 = vmatprep.subr.bf16.mxu0 0
      %3714 = vmatpush2.bf16.msra.mxu0 0
      %3715 = vmatprep.subr.bf16.mxu0 0
      %3716 = vmatpush2.bf16.msra.mxu0 0
      %3717 = vmatprep.subr.bf16.mxu0 0
      %3718 = vmatpush2.bf16.msra.mxu0 0
      %3719 = vmatprep.subr.bf16.mxu0 0
      %3720 = vmatpush2.bf16.msra.mxu0 0
      %3721 = vmatprep.subr.bf16.mxu0 0
      %3722 = vmatpush2.bf16.msra.mxu0 0
      %3723 = vmatprep.subr.bf16.mxu0 0
      %3724 = vmatpush2.bf16.msra.mxu0 0
      %3725 = vmatprep.mubr.bf16.mxu0 0
      %3726 = vmatmul.mubr.bf16.gmra.mxu0 %v3621
      %v3727 = vpop.f32.mrf.mxu0
      %v3728 = vadd.f32 0.0, %v3727
      %v3729 = vpop.f32.mrf.mxu0
      %v3730 = vpop.f32.mrf.mxu0
      %v3731 = vadd.f32 0.0, %v3730
      %v3732 = vpop.f32.mrf.mxu0
      %3733 = vmatprep.mubr.bf16.mxu0 0
      %3734 = vmatmul.mubr.bf16.gmra.mxu0 %v3622
      %v3735 = vpop.f32.mrf.mxu0
      %v3736 = vadd.f32 0.0, %v3735
      %v3737 = vpop.f32.mrf.mxu0
      %v3738 = vpop.f32.mrf.mxu0
      %v3739 = vadd.f32 0.0, %v3738
      %v3740 = vpop.f32.mrf.mxu0
      %3741 = vmatprep.mubr.bf16.mxu0 0
      %3742 = vmatmul.mubr.bf16.gmra.mxu0 %v3623
      %v3743 = vpop.f32.mrf.mxu0
      %v3744 = vadd.f32 0.0, %v3743
      %v3745 = vpop.f32.mrf.mxu0
      %v3746 = vpop.f32.mrf.mxu0
      %v3747 = vadd.f32 0.0, %v3746
      %v3748 = vpop.f32.mrf.mxu0
      %3749 = vmatprep.mubr.bf16.mxu0 0
      %3750 = vmatmul.mubr.bf16.gmra.mxu0 %v3624
      %v3751 = vpop.f32.mrf.mxu0
      %v3752 = vadd.f32 0.0, %v3751
      %v3753 = vpop.f32.mrf.mxu0
      %v3754 = vpop.f32.mrf.mxu0
      %v3755 = vadd.f32 0.0, %v3754
      %v3756 = vpop.f32.mrf.mxu0
      %3757 = vmatprep.mubr.bf16.mxu0 0
      %3758 = vmatmul.mubr.bf16.gmra.mxu0 %v3625
      %v3759 = vpop.f32.mrf.mxu0
      %v3760 = vadd.f32 0.0, %v3759
      %v3761 = vpop.f32.mrf.mxu0
      %v3762 = vpop.f32.mrf.mxu0
      %v3763 = vadd.f32 0.0, %v3762
      %v3764 = vpop.f32.mrf.mxu0
      %3765 = vmatprep.mubr.bf16.mxu0 0
      %3766 = vmatmul.mubr.bf16.gmra.mxu0 %v3626
      %v3767 = vpop.f32.mrf.mxu0
      %v3768 = vadd.f32 0.0, %v3767
      %v3769 = vpop.f32.mrf.mxu0
      %v3770 = vpop.f32.mrf.mxu0
      %v3771 = vadd.f32 0.0, %v3770
      %v3772 = vpop.f32.mrf.mxu0
      %3773 = vmatprep.mubr.bf16.mxu0 0
      %3774 = vmatmul.mubr.bf16.gmra.mxu0 %v3627
      %v3775 = vpop.f32.mrf.mxu0
      %v3776 = vadd.f32 0.0, %v3775
      %v3777 = vpop.f32.mrf.mxu0
      %v3778 = vpop.f32.mrf.mxu0
      %v3779 = vadd.f32 0.0, %v3778
      %v3780 = vpop.f32.mrf.mxu0
      %3781 = vmatprep.mubr.bf16.mxu0 0
      %3782 = vmatmul.mubr.bf16.gmra.mxu0 %v3628
      %v3783 = vpop.f32.mrf.mxu0
      %v3784 = vadd.f32 0.0, %v3783
      %v3785 = vpop.f32.mrf.mxu0
      %v3786 = vpop.f32.mrf.mxu0
      %v3787 = vadd.f32 0.0, %v3786
      %v3788 = vpop.f32.mrf.mxu0
      %3789 = vdwg.mxu0
      %v3806 = vunpack.c.l.b16 %v3605
      %v3807 = vunpack.c.l.b16 %v3606
      %v3808 = vunpack.c.l.b16 %v3607
      %v3809 = vunpack.c.l.b16 %v3608
      %v3810 = vunpack.c.l.b16 %v3609
      %v3811 = vunpack.c.l.b16 %v3610
      %v3812 = vunpack.c.l.b16 %v3611
      %v3813 = vunpack.c.l.b16 %v3612
      %v3814 = vunpack.c.l.b16 %v3613
      %v3815 = vunpack.c.l.b16 %v3614
      %v3816 = vunpack.c.l.b16 %v3615
      %v3817 = vunpack.c.l.b16 %v3616
      %v3818 = vunpack.c.l.b16 %v3617
      %v3819 = vunpack.c.l.b16 %v3618
      %v3820 = vunpack.c.l.b16 %v3619
      %v3821 = vunpack.c.l.b16 %v3620
      %v3822 = vpack.c.b16 %v3807, %v3806
      %v3823 = vpack.c.b16 %v3809, %v3808
      %v3824 = vpack.c.b16 %v3811, %v3810
      %v3825 = vpack.c.b16 %v3813, %v3812
      %v3826 = vpack.c.b16 %v3815, %v3814
      %v3827 = vpack.c.b16 %v3817, %v3816
      %v3828 = vpack.c.b16 %v3819, %v3818
      %v3829 = vpack.c.b16 %v3821, %v3820
      %3838 = vmatprep.subr.bf16.mxu0 0
      %3839 = vmatpush1.bf16.msra.mxu0 %v3829
      %3840 = vmatprep.subr.bf16.mxu0 0
      %3841 = vmatpush1.bf16.msra.mxu0 %v3828
      %3842 = vmatprep.subr.bf16.mxu0 0
      %3843 = vmatpush1.bf16.msra.mxu0 %v3827
      %3844 = vmatprep.subr.bf16.mxu0 0
      %3845 = vmatpush1.bf16.msra.mxu0 %v3826
      %3846 = vmatprep.subr.bf16.mxu0 0
      %3847 = vmatpush1.bf16.msra.mxu0 %v3825
      %3848 = vmatprep.subr.bf16.mxu0 0
      %3849 = vmatpush1.bf16.msra.mxu0 %v3824
      %3850 = vmatprep.subr.bf16.mxu0 0
      %3851 = vmatpush1.bf16.msra.mxu0 %v3823
      %3852 = vmatprep.subr.bf16.mxu0 0
      %3853 = vmatpush1.bf16.msra.mxu0 %v3822
      %3854 = vmatprep.subr.bf16.mxu0 0
      %3855 = vmatpush2.bf16.msra.mxu0 0
      %3856 = vmatprep.subr.bf16.mxu0 0
      %3857 = vmatpush2.bf16.msra.mxu0 0
      %3858 = vmatprep.subr.bf16.mxu0 0
      %3859 = vmatpush2.bf16.msra.mxu0 0
      %3860 = vmatprep.subr.bf16.mxu0 0
      %3861 = vmatpush2.bf16.msra.mxu0 0
      %3862 = vmatprep.subr.bf16.mxu0 0
      %3863 = vmatpush2.bf16.msra.mxu0 0
      %3864 = vmatprep.subr.bf16.mxu0 0
      %3865 = vmatpush2.bf16.msra.mxu0 0
      %3866 = vmatprep.subr.bf16.mxu0 0
      %3867 = vmatpush2.bf16.msra.mxu0 0
      %3868 = vmatprep.subr.bf16.mxu0 0
      %3869 = vmatpush2.bf16.msra.mxu0 0
      %3870 = vmatprep.mubr.bf16.mxu0 0
      %3871 = vmatmul.mubr.bf16.gmra.mxu0 %v3597
      %v3872 = vpop.f32.mrf.mxu0
      %v3873 = vadd.f32 %v3728, %v3872
      %v3874 = vpop.f32.mrf.mxu0
      %v3875 = vpop.f32.mrf.mxu0
      %v3876 = vadd.f32 %v3731, %v3875
      %v3877 = vpop.f32.mrf.mxu0
      %3878 = vmatprep.mubr.bf16.mxu0 0
      %3879 = vmatmul.mubr.bf16.gmra.mxu0 %v3598
      %v3880 = vpop.f32.mrf.mxu0
      %v3881 = vadd.f32 %v3736, %v3880
      %v3882 = vpop.f32.mrf.mxu0
      %v3883 = vpop.f32.mrf.mxu0
      %v3884 = vadd.f32 %v3739, %v3883
      %v3885 = vpop.f32.mrf.mxu0
      %3886 = vmatprep.mubr.bf16.mxu0 0
      %3887 = vmatmul.mubr.bf16.gmra.mxu0 %v3599
      %v3888 = vpop.f32.mrf.mxu0
      %v3889 = vadd.f32 %v3744, %v3888
      %v3890 = vpop.f32.mrf.mxu0
      %v3891 = vpop.f32.mrf.mxu0
      %v3892 = vadd.f32 %v3747, %v3891
      %v3893 = vpop.f32.mrf.mxu0
      %3894 = vmatprep.mubr.bf16.mxu0 0
      %3895 = vmatmul.mubr.bf16.gmra.mxu0 %v3600
      %v3896 = vpop.f32.mrf.mxu0
      %v3897 = vadd.f32 %v3752, %v3896
      %v3898 = vpop.f32.mrf.mxu0
      %v3899 = vpop.f32.mrf.mxu0
      %v3900 = vadd.f32 %v3755, %v3899
      %v3901 = vpop.f32.mrf.mxu0
      %3902 = vmatprep.mubr.bf16.mxu0 0
      %3903 = vmatmul.mubr.bf16.gmra.mxu0 %v3601
      %v3904 = vpop.f32.mrf.mxu0
      %v3905 = vadd.f32 %v3760, %v3904
      %v3906 = vpop.f32.mrf.mxu0
      %v3907 = vpop.f32.mrf.mxu0
      %v3908 = vadd.f32 %v3763, %v3907
      %v3909 = vpop.f32.mrf.mxu0
      %3910 = vmatprep.mubr.bf16.mxu0 0
      %3911 = vmatmul.mubr.bf16.gmra.mxu0 %v3602
      %v3912 = vpop.f32.mrf.mxu0
      %v3913 = vadd.f32 %v3768, %v3912
      %v3914 = vpop.f32.mrf.mxu0
      %v3915 = vpop.f32.mrf.mxu0
      %v3916 = vadd.f32 %v3771, %v3915
      %v3917 = vpop.f32.mrf.mxu0
      %3918 = vmatprep.mubr.bf16.mxu0 0
      %3919 = vmatmul.mubr.bf16.gmra.mxu0 %v3603
      %v3920 = vpop.f32.mrf.mxu0
      %v3921 = vadd.f32 %v3776, %v3920
      %v3922 = vpop.f32.mrf.mxu0
      %v3923 = vpop.f32.mrf.mxu0
      %v3924 = vadd.f32 %v3779, %v3923
      %v3925 = vpop.f32.mrf.mxu0
      %3926 = vmatprep.mubr.bf16.mxu0 0
      %3927 = vmatmul.mubr.bf16.gmra.mxu0 %v3604
      %v3928 = vpop.f32.mrf.mxu0
      %v3929 = vadd.f32 %v3784, %v3928
      %v3930 = vpop.f32.mrf.mxu0
      %v3931 = vpop.f32.mrf.mxu0
      %v3932 = vadd.f32 %v3787, %v3931
      %v3933 = vpop.f32.mrf.mxu0
      %3934 = vdwg.mxu0
      %v3935 = vld [vmem:[%s15] sm:$0x1]
      %v3937 = vlaneseq
      %v3938 = vshrl.u32 %v3937, 7
      %v3939 = vsub.s32 0, %v3938
      %v3940 = vrot.slane %v3935, %v3939
      %v3942 = vadd.f32 %v3873, %v3940
      %v3943 = vadd.f32 %v3876, %v3940
      %v3944 = vadd.f32 %v3881, %v3940
      %v3945 = vadd.f32 %v3884, %v3940
      %v3946 = vadd.f32 %v3889, %v3940
      %v3947 = vadd.f32 %v3892, %v3940
      %v3948 = vadd.f32 %v3897, %v3940
      %v3949 = vadd.f32 %v3900, %v3940
      %v3950 = vadd.f32 %v3905, %v3940
      %v3951 = vadd.f32 %v3908, %v3940
      %v3952 = vadd.f32 %v3913, %v3940
      %v3953 = vadd.f32 %v3916, %v3940
      %v3954 = vadd.f32 %v3921, %v3940
      %v3955 = vadd.f32 %v3924, %v3940
      %v3956 = vadd.f32 %v3929, %v3940
      %v3957 = vadd.f32 %v3932, %v3940
      %v3958 = vxor.u32 %v3942, 2147483648
      %v3959 = vxor.u32 %v3943, 2147483648
      %v3960 = vxor.u32 %v3944, 2147483648
      %v3961 = vxor.u32 %v3945, 2147483648
      %v3962 = vxor.u32 %v3946, 2147483648
      %v3963 = vxor.u32 %v3947, 2147483648
      %v3964 = vxor.u32 %v3948, 2147483648
      %v3965 = vxor.u32 %v3949, 2147483648
      %v3966 = vxor.u32 %v3950, 2147483648
      %v3967 = vxor.u32 %v3951, 2147483648
      %v3968 = vxor.u32 %v3952, 2147483648
      %v3969 = vxor.u32 %v3953, 2147483648
      %v3970 = vxor.u32 %v3954, 2147483648
      %v3971 = vxor.u32 %v3955, 2147483648
      %v3972 = vxor.u32 %v3956, 2147483648
      %v3973 = vxor.u32 %v3957, 2147483648
      %v3974 = vmul.f32 %v3958, 1.442695
      %v3975 = vpow.pop %v3974
      %v3976 = vmul.f32 %v3959, 1.442695
      %v3977 = vpow.pop %v3976
      %v3978 = vmul.f32 %v3960, 1.442695
      %v3979 = vpow.pop %v3978
      %v3980 = vmul.f32 %v3961, 1.442695
      %v3981 = vpow.pop %v3980
      %v3982 = vmul.f32 %v3962, 1.442695
      %v3983 = vpow.pop %v3982
      %v3984 = vmul.f32 %v3963, 1.442695
      %v3985 = vpow.pop %v3984
      %v3986 = vmul.f32 %v3964, 1.442695
      %v3987 = vpow.pop %v3986
      %v3988 = vmul.f32 %v3965, 1.442695
      %v3989 = vpow.pop %v3988
      %v3990 = vmul.f32 %v3966, 1.442695
      %v3991 = vpow.pop %v3990
      %v3992 = vmul.f32 %v3967, 1.442695
      %v3993 = vpow.pop %v3992
      %v3994 = vmul.f32 %v3968, 1.442695
      %v3995 = vpow.pop %v3994
      %v3996 = vmul.f32 %v3969, 1.442695
      %v3997 = vpow.pop %v3996
      %v3998 = vmul.f32 %v3970, 1.442695
      %v3999 = vpow.pop %v3998
      %v4000 = vmul.f32 %v3971, 1.442695
      %v4001 = vpow.pop %v4000
      %v4002 = vmul.f32 %v3972, 1.442695
      %v4003 = vpow.pop %v4002
      %v4004 = vmul.f32 %v3973, 1.442695
      %v4005 = vpow.pop %v4004
      %v4006 = vadd.f32 %v3975, 1.0
      %v4007 = vadd.f32 %v3977, 1.0
      %v4008 = vadd.f32 %v3979, 1.0
      %v4009 = vadd.f32 %v3981, 1.0
      %v4010 = vadd.f32 %v3983, 1.0
      %v4011 = vadd.f32 %v3985, 1.0
      %v4012 = vadd.f32 %v3987, 1.0
      %v4013 = vadd.f32 %v3989, 1.0
      %v4014 = vadd.f32 %v3991, 1.0
      %v4015 = vadd.f32 %v3993, 1.0
      %v4016 = vadd.f32 %v3995, 1.0
      %v4017 = vadd.f32 %v3997, 1.0
      %v4018 = vadd.f32 %v3999, 1.0
      %v4019 = vadd.f32 %v4001, 1.0
      %v4020 = vadd.f32 %v4003, 1.0
      %v4021 = vadd.f32 %v4005, 1.0
      %v4022 = vrcp.pop %v4006
      %v4023 = vmul.f32 1.0, %v4022
      %v4024 = vrcp.pop %v4007
      %v4025 = vmul.f32 1.0, %v4024
      %v4026 = vrcp.pop %v4008
      %v4027 = vmul.f32 1.0, %v4026
      %v4028 = vrcp.pop %v4009
      %v4029 = vmul.f32 1.0, %v4028
      %v4030 = vrcp.pop %v4010
      %v4031 = vmul.f32 1.0, %v4030
      %v4032 = vrcp.pop %v4011
      %v4033 = vmul.f32 1.0, %v4032
      %v4034 = vrcp.pop %v4012
      %v4035 = vmul.f32 1.0, %v4034
      %v4036 = vrcp.pop %v4013
      %v4037 = vmul.f32 1.0, %v4036
      %v4038 = vrcp.pop %v4014
      %v4039 = vmul.f32 1.0, %v4038
      %v4040 = vrcp.pop %v4015
      %v4041 = vmul.f32 1.0, %v4040
      %v4042 = vrcp.pop %v4016
      %v4043 = vmul.f32 1.0, %v4042
      %v4044 = vrcp.pop %v4017
      %v4045 = vmul.f32 1.0, %v4044
      %v4046 = vrcp.pop %v4018
      %v4047 = vmul.f32 1.0, %v4046
      %v4048 = vrcp.pop %v4019
      %v4049 = vmul.f32 1.0, %v4048
      %v4050 = vrcp.pop %v4020
      %v4051 = vmul.f32 1.0, %v4050
      %v4052 = vrcp.pop %v4021
      %v4053 = vmul.f32 1.0, %v4052
      %v4054 = vmul.f32 %v3942, %v4023
      %v4055 = vmul.f32 %v3943, %v4025
      %v4056 = vmul.f32 %v3944, %v4027
      %v4057 = vmul.f32 %v3945, %v4029
      %v4058 = vmul.f32 %v3946, %v4031
      %v4059 = vmul.f32 %v3947, %v4033
      %v4060 = vmul.f32 %v3948, %v4035
      %v4061 = vmul.f32 %v3949, %v4037
      %v4062 = vmul.f32 %v3950, %v4039
      %v4063 = vmul.f32 %v3951, %v4041
      %v4064 = vmul.f32 %v3952, %v4043
      %v4065 = vmul.f32 %v3953, %v4045
      %v4066 = vmul.f32 %v3954, %v4047
      %v4067 = vmul.f32 %v3955, %v4049
      %v4068 = vmul.f32 %v3956, %v4051
      %v4069 = vmul.f32 %v3957, %v4053
      %v4070 = vpack.c.bf16 %v4055, %v4054
      %v4071 = vpack.c.bf16 %v4057, %v4056
      %v4072 = vpack.c.bf16 %v4059, %v4058
      %v4073 = vpack.c.bf16 %v4061, %v4060
      %v4074 = vpack.c.bf16 %v4063, %v4062
      %v4075 = vpack.c.bf16 %v4065, %v4064
      %v4076 = vpack.c.bf16 %v4067, %v4066
      %v4077 = vpack.c.bf16 %v4069, %v4068
      %v4078 = vld [vmem:[#allocation23] sm:$0xff]
      %v4079 = vld [vmem:[#allocation23 + $0x8] sm:$0xf]
      %v4080 = vld [vmem:[#allocation23 + $0xc] sm:$0xff]
      %v4081 = vld [vmem:[#allocation23 + $0x14] sm:$0xf]
      %v4082 = vld [vmem:[#allocation23 + $0x18] sm:$0xff]
      %v4083 = vld [vmem:[#allocation23 + $0x20] sm:$0xf]
      %v4084 = vld [vmem:[#allocation23 + $0x24] sm:$0xff]
      %v4085 = vld [vmem:[#allocation23 + $0x2c] sm:$0xf]
      %v4086 = vld [vmem:[#allocation23 + $0x30] sm:$0xff]
      %v4087 = vld [vmem:[#allocation23 + $0x38] sm:$0xf]
      %v4088 = vld [vmem:[#allocation23 + $0x3c] sm:$0xff]
      %v4089 = vld [vmem:[#allocation23 + $0x44] sm:$0xf]
      %v4090 = vld [vmem:[#allocation23 + $0x48] sm:$0xff]
      %v4091 = vld [vmem:[#allocation23 + $0x50] sm:$0xf]
      %v4092 = vld [vmem:[#allocation23 + $0x54] sm:$0xff]
      %v4093 = vld [vmem:[#allocation23 + $0x5c] sm:$0xf]
      %v4094 = vld [vmem:[#allocation23 + $0x60] sm:$0xff]
      %v4095 = vld [vmem:[#allocation23 + $0x68] sm:$0xf]
      %v4096 = vld [vmem:[#allocation23 + $0x6c] sm:$0xff]
      %v4097 = vld [vmem:[#allocation23 + $0x74] sm:$0xf]
      %v4098 = vld [vmem:[#allocation23 + $0x78] sm:$0xff]
      %v4099 = vld [vmem:[#allocation23 + $0x80] sm:$0xf]
      %v4100 = vld [vmem:[#allocation23 + $0x84] sm:$0xff]
      %v4101 = vld [vmem:[#allocation23 + $0x8c] sm:$0xf]
      %v4102 = vld [vmem:[#allocation23 + $0x90] sm:$0xff]
      %v4103 = vld [vmem:[#allocation23 + $0x98] sm:$0xf]
      %v4104 = vld [vmem:[#allocation23 + $0x9c] sm:$0xff]
      %v4105 = vld [vmem:[#allocation23 + $0xa4] sm:$0xf]
      %v4106 = vld [vmem:[#allocation23 + $0xa8] sm:$0xff]
      %v4107 = vld [vmem:[#allocation23 + $0xb0] sm:$0xf]
      %v4108 = vld [vmem:[#allocation23 + $0xb4] sm:$0xff]
      %v4109 = vld [vmem:[#allocation23 + $0xbc] sm:$0xf]
      %v4110 = vld [vmem:[%s17] sm:$0x7]
      %v4112 = vlaneseq
      %v4113 = vshrl.u32 %v4112, 7
      %v4114 = vsub.s32 0, %v4113
      %v4115 = vrot.slane %v4110, %v4114
      %v4116 = vlaneseq
      %v4117 = vshrl.u32 %v4116, 7
      %v4118 = vsub.s32 1, %v4117
      %v4119 = vrot.slane %v4110, %v4118
      %v4120 = vlaneseq
      %v4121 = vshrl.u32 %v4120, 7
      %v4122 = vsub.s32 2, %v4121
      %v4123 = vrot.slane %v4110, %v4122
      %v4159 = vunpack.c.l.b16 %v4078
      %v4160 = vunpack.c.h.b16 %v4078
      %v4161 = vunpack.c.l.b16 %v4079
      %v4162 = vunpack.c.l.b16 %v4080
      %v4163 = vunpack.c.h.b16 %v4080
      %v4164 = vunpack.c.l.b16 %v4081
      %v4165 = vunpack.c.l.b16 %v4082
      %v4166 = vunpack.c.h.b16 %v4082
      %v4167 = vunpack.c.l.b16 %v4083
      %v4168 = vunpack.c.l.b16 %v4084
      %v4169 = vunpack.c.h.b16 %v4084
      %v4170 = vunpack.c.l.b16 %v4085
      %v4171 = vunpack.c.l.b16 %v4086
      %v4172 = vunpack.c.h.b16 %v4086
      %v4173 = vunpack.c.l.b16 %v4087
      %v4174 = vunpack.c.l.b16 %v4088
      %v4175 = vunpack.c.h.b16 %v4088
      %v4176 = vunpack.c.l.b16 %v4089
      %v4177 = vunpack.c.l.b16 %v4090
      %v4178 = vunpack.c.h.b16 %v4090
      %v4179 = vunpack.c.l.b16 %v4091
      %v4180 = vunpack.c.l.b16 %v4092
      %v4181 = vunpack.c.h.b16 %v4092
      %v4182 = vunpack.c.l.b16 %v4093
      %v4183 = vunpack.c.l.b16 %v4094
      %v4184 = vunpack.c.h.b16 %v4094
      %v4185 = vunpack.c.l.b16 %v4095
      %v4186 = vunpack.c.l.b16 %v4096
      %v4187 = vunpack.c.h.b16 %v4096
      %v4188 = vunpack.c.l.b16 %v4097
      %v4189 = vunpack.c.l.b16 %v4098
      %v4190 = vunpack.c.h.b16 %v4098
      %v4191 = vunpack.c.l.b16 %v4099
      %v4192 = vunpack.c.l.b16 %v4100
      %v4193 = vunpack.c.h.b16 %v4100
      %v4194 = vunpack.c.l.b16 %v4101
      %v4195 = vunpack.c.l.b16 %v4102
      %v4196 = vunpack.c.h.b16 %v4102
      %v4197 = vunpack.c.l.b16 %v4103
      %v4198 = vunpack.c.l.b16 %v4104
      %v4199 = vunpack.c.h.b16 %v4104
      %v4200 = vunpack.c.l.b16 %v4105
      %v4201 = vunpack.c.l.b16 %v4106
      %v4202 = vunpack.c.h.b16 %v4106
      %v4203 = vunpack.c.l.b16 %v4107
      %v4204 = vunpack.c.l.b16 %v4108
      %v4205 = vunpack.c.h.b16 %v4108
      %v4206 = vunpack.c.l.b16 %v4109
      %v4207 = vpack.c.b16 %v4162, %v4159
      %v4208 = vpack.c.b16 %v4163, %v4160
      %v4209 = vpack.c.b16 %v4164, %v4161
      %v4210 = vpack.c.b16 %v4168, %v4165
      %v4211 = vpack.c.b16 %v4169, %v4166
      %v4212 = vpack.c.b16 %v4170, %v4167
      %v4213 = vpack.c.b16 %v4174, %v4171
      %v4214 = vpack.c.b16 %v4175, %v4172
      %v4215 = vpack.c.b16 %v4176, %v4173
      %v4216 = vpack.c.b16 %v4180, %v4177
      %v4217 = vpack.c.b16 %v4181, %v4178
      %v4218 = vpack.c.b16 %v4182, %v4179
      %v4219 = vpack.c.b16 %v4186, %v4183
      %v4220 = vpack.c.b16 %v4187, %v4184
      %v4221 = vpack.c.b16 %v4188, %v4185
      %v4222 = vpack.c.b16 %v4192, %v4189
      %v4223 = vpack.c.b16 %v4193, %v4190
      %v4224 = vpack.c.b16 %v4194, %v4191
      %v4225 = vpack.c.b16 %v4198, %v4195
      %v4226 = vpack.c.b16 %v4199, %v4196
      %v4227 = vpack.c.b16 %v4200, %v4197
      %v4228 = vpack.c.b16 %v4204, %v4201
      %v4229 = vpack.c.b16 %v4205, %v4202
      %v4230 = vpack.c.b16 %v4206, %v4203
      %4255 = vmatprep.subr.bf16.mxu0 %v4229
      %4256 = vmatpush1.bf16.msra.mxu0 %v4228
      %4257 = vmatprep.subr.bf16.mxu0 %v4226
      %4258 = vmatpush1.bf16.msra.mxu0 %v4225
      %4259 = vmatprep.subr.bf16.mxu0 %v4223
      %4260 = vmatpush1.bf16.msra.mxu0 %v4222
      %4261 = vmatprep.subr.bf16.mxu0 %v4220
      %4262 = vmatpush1.bf16.msra.mxu0 %v4219
      %4263 = vmatprep.subr.bf16.mxu0 %v4217
      %4264 = vmatpush1.bf16.msra.mxu0 %v4216
      %4265 = vmatprep.subr.bf16.mxu0 %v4214
      %4266 = vmatpush1.bf16.msra.mxu0 %v4213
      %4267 = vmatprep.subr.bf16.mxu0 %v4211
      %4268 = vmatpush1.bf16.msra.mxu0 %v4210
      %4269 = vmatprep.subr.bf16.mxu0 %v4208
      %4270 = vmatpush1.bf16.msra.mxu0 %v4207
      %4271 = vmatprep.subr.bf16.mxu0 0
      %4272 = vmatpush2.bf16.msra.mxu0 0
      %4273 = vmatprep.subr.bf16.mxu0 0
      %4274 = vmatpush2.bf16.msra.mxu0 0
      %4275 = vmatprep.subr.bf16.mxu0 0
      %4276 = vmatpush2.bf16.msra.mxu0 0
      %4277 = vmatprep.subr.bf16.mxu0 0
      %4278 = vmatpush2.bf16.msra.mxu0 0
      %4279 = vmatprep.subr.bf16.mxu0 0
      %4280 = vmatpush2.bf16.msra.mxu0 0
      %4281 = vmatprep.subr.bf16.mxu0 0
      %4282 = vmatpush2.bf16.msra.mxu0 0
      %4283 = vmatprep.subr.bf16.mxu0 0
      %4284 = vmatpush2.bf16.msra.mxu0 0
      %4285 = vmatprep.subr.bf16.mxu0 0
      %4286 = vmatpush2.bf16.msra.mxu0 0
      %4287 = vmatprep.mubr.bf16.mxu0 0
      %4288 = vmatmul.mubr.bf16.gmra.mxu0 %v4070
      %v4289 = vpop.f32.mrf.mxu0
      %v4290 = vadd.f32 %v4115, %v4289
      %v4291 = vpop.f32.mrf.mxu0
      %v4292 = vadd.f32 %v4119, %v4291
      %v4293 = vpop.f32.mrf.mxu0
      %v4294 = vadd.f32 %v4115, %v4293
      %v4295 = vpop.f32.mrf.mxu0
      %v4296 = vadd.f32 %v4119, %v4295
      %4297 = vmatprep.mubr.bf16.mxu0 0
      %4298 = vmatmul.mubr.bf16.gmra.mxu0 %v4071
      %v4299 = vpop.f32.mrf.mxu0
      %v4300 = vadd.f32 %v4115, %v4299
      %v4301 = vpop.f32.mrf.mxu0
      %v4302 = vadd.f32 %v4119, %v4301
      %v4303 = vpop.f32.mrf.mxu0
      %v4304 = vadd.f32 %v4115, %v4303
      %v4305 = vpop.f32.mrf.mxu0
      %v4306 = vadd.f32 %v4119, %v4305
      %4307 = vmatprep.mubr.bf16.mxu0 0
      %4308 = vmatmul.mubr.bf16.gmra.mxu0 %v4072
      %v4309 = vpop.f32.mrf.mxu0
      %v4310 = vadd.f32 %v4115, %v4309
      %v4311 = vpop.f32.mrf.mxu0
      %v4312 = vadd.f32 %v4119, %v4311
      %v4313 = vpop.f32.mrf.mxu0
      %v4314 = vadd.f32 %v4115, %v4313
      %v4315 = vpop.f32.mrf.mxu0
      %v4316 = vadd.f32 %v4119, %v4315
      %4317 = vmatprep.mubr.bf16.mxu0 0
      %4318 = vmatmul.mubr.bf16.gmra.mxu0 %v4073
      %v4319 = vpop.f32.mrf.mxu0
      %v4320 = vadd.f32 %v4115, %v4319
      %v4321 = vpop.f32.mrf.mxu0
      %v4322 = vadd.f32 %v4119, %v4321
      %v4323 = vpop.f32.mrf.mxu0
      %v4324 = vadd.f32 %v4115, %v4323
      %v4325 = vpop.f32.mrf.mxu0
      %v4326 = vadd.f32 %v4119, %v4325
      %4327 = vmatprep.mubr.bf16.mxu0 0
      %4328 = vmatmul.mubr.bf16.gmra.mxu0 %v4074
      %v4329 = vpop.f32.mrf.mxu0
      %v4330 = vadd.f32 %v4115, %v4329
      %v4331 = vpop.f32.mrf.mxu0
      %v4332 = vadd.f32 %v4119, %v4331
      %v4333 = vpop.f32.mrf.mxu0
      %v4334 = vadd.f32 %v4115, %v4333
      %v4335 = vpop.f32.mrf.mxu0
      %v4336 = vadd.f32 %v4119, %v4335
      %4337 = vmatprep.mubr.bf16.mxu0 0
      %4338 = vmatmul.mubr.bf16.gmra.mxu0 %v4075
      %v4339 = vpop.f32.mrf.mxu0
      %v4340 = vadd.f32 %v4115, %v4339
      %v4341 = vpop.f32.mrf.mxu0
      %v4342 = vadd.f32 %v4119, %v4341
      %v4343 = vpop.f32.mrf.mxu0
      %v4344 = vadd.f32 %v4115, %v4343
      %v4345 = vpop.f32.mrf.mxu0
      %v4346 = vadd.f32 %v4119, %v4345
      %4347 = vmatprep.mubr.bf16.mxu0 0
      %4348 = vmatmul.mubr.bf16.gmra.mxu0 %v4076
      %v4349 = vpop.f32.mrf.mxu0
      %v4350 = vadd.f32 %v4115, %v4349
      %v4351 = vpop.f32.mrf.mxu0
      %v4352 = vadd.f32 %v4119, %v4351
      %v4353 = vpop.f32.mrf.mxu0
      %v4354 = vadd.f32 %v4115, %v4353
      %v4355 = vpop.f32.mrf.mxu0
      %v4356 = vadd.f32 %v4119, %v4355
      %4357 = vmatprep.mubr.bf16.mxu0 0
      %4358 = vmatmul.mubr.bf16.gmra.mxu0 %v4077
      %v4359 = vpop.f32.mrf.mxu0
      %v4360 = vadd.f32 %v4115, %v4359
      %v4361 = vpop.f32.mrf.mxu0
      %v4362 = vadd.f32 %v4119, %v4361
      %v4363 = vpop.f32.mrf.mxu0
      %v4364 = vadd.f32 %v4115, %v4363
      %v4365 = vpop.f32.mrf.mxu0
      %v4366 = vadd.f32 %v4119, %v4365
      %4367 = vdwg.mxu0
      %4368 = vmatprep.subr.bf16.mxu0 0
      %4369 = vmatpush1.bf16.msra.mxu0 %v4230
      %4370 = vmatprep.subr.bf16.mxu0 0
      %4371 = vmatpush1.bf16.msra.mxu0 %v4227
      %4372 = vmatprep.subr.bf16.mxu0 0
      %4373 = vmatpush1.bf16.msra.mxu0 %v4224
      %4374 = vmatprep.subr.bf16.mxu0 0
      %4375 = vmatpush1.bf16.msra.mxu0 %v4221
      %4376 = vmatprep.subr.bf16.mxu0 0
      %4377 = vmatpush1.bf16.msra.mxu0 %v4218
      %4378 = vmatprep.subr.bf16.mxu0 0
      %4379 = vmatpush1.bf16.msra.mxu0 %v4215
      %4380 = vmatprep.subr.bf16.mxu0 0
      %4381 = vmatpush1.bf16.msra.mxu0 %v4212
      %4382 = vmatprep.subr.bf16.mxu0 0
      %4383 = vmatpush1.bf16.msra.mxu0 %v4209
      %4384 = vmatprep.subr.bf16.mxu0 0
      %4385 = vmatpush2.bf16.msra.mxu0 0
      %4386 = vmatprep.subr.bf16.mxu0 0
      %4387 = vmatpush2.bf16.msra.mxu0 0
      %4388 = vmatprep.subr.bf16.mxu0 0
      %4389 = vmatpush2.bf16.msra.mxu0 0
      %4390 = vmatprep.subr.bf16.mxu0 0
      %4391 = vmatpush2.bf16.msra.mxu0 0
      %4392 = vmatprep.subr.bf16.mxu0 0
      %4393 = vmatpush2.bf16.msra.mxu0 0
      %4394 = vmatprep.subr.bf16.mxu0 0
      %4395 = vmatpush2.bf16.msra.mxu0 0
      %4396 = vmatprep.subr.bf16.mxu0 0
      %4397 = vmatpush2.bf16.msra.mxu0 0
      %4398 = vmatprep.subr.bf16.mxu0 0
      %4399 = vmatpush2.bf16.msra.mxu0 0
      %4400 = vmatprep.mubr.bf16.mxu0 0
      %4401 = vmatmul.mubr.bf16.gmra.mxu0 %v4070
      %v4402 = vpop.f32.mrf.mxu0
      %v4403 = vadd.f32 %v4123, %v4402
      %v4404 = vpop.f32.mrf.mxu0
      %v4405 = vpop.f32.mrf.mxu0
      %v4406 = vadd.f32 %v4123, %v4405
      %v4407 = vpop.f32.mrf.mxu0
      %4408 = vmatprep.mubr.bf16.mxu0 0
      %4409 = vmatmul.mubr.bf16.gmra.mxu0 %v4071
      %v4410 = vpop.f32.mrf.mxu0
      %v4411 = vadd.f32 %v4123, %v4410
      %v4412 = vpop.f32.mrf.mxu0
      %v4413 = vpop.f32.mrf.mxu0
      %v4414 = vadd.f32 %v4123, %v4413
      %v4415 = vpop.f32.mrf.mxu0
      %4416 = vmatprep.mubr.bf16.mxu0 0
      %4417 = vmatmul.mubr.bf16.gmra.mxu0 %v4072
      %v4418 = vpop.f32.mrf.mxu0
      %v4419 = vadd.f32 %v4123, %v4418
      %v4420 = vpop.f32.mrf.mxu0
      %v4421 = vpop.f32.mrf.mxu0
      %v4422 = vadd.f32 %v4123, %v4421
      %v4423 = vpop.f32.mrf.mxu0
      %4424 = vmatprep.mubr.bf16.mxu0 0
      %4425 = vmatmul.mubr.bf16.gmra.mxu0 %v4073
      %v4426 = vpop.f32.mrf.mxu0
      %v4427 = vadd.f32 %v4123, %v4426
      %v4428 = vpop.f32.mrf.mxu0
      %v4429 = vpop.f32.mrf.mxu0
      %v4430 = vadd.f32 %v4123, %v4429
      %v4431 = vpop.f32.mrf.mxu0
      %4432 = vmatprep.mubr.bf16.mxu0 0
      %4433 = vmatmul.mubr.bf16.gmra.mxu0 %v4074
      %v4434 = vpop.f32.mrf.mxu0
      %v4435 = vadd.f32 %v4123, %v4434
      %v4436 = vpop.f32.mrf.mxu0
      %v4437 = vpop.f32.mrf.mxu0
      %v4438 = vadd.f32 %v4123, %v4437
      %v4439 = vpop.f32.mrf.mxu0
      %4440 = vmatprep.mubr.bf16.mxu0 0
      %4441 = vmatmul.mubr.bf16.gmra.mxu0 %v4075
      %v4442 = vpop.f32.mrf.mxu0
      %v4443 = vadd.f32 %v4123, %v4442
      %v4444 = vpop.f32.mrf.mxu0
      %v4445 = vpop.f32.mrf.mxu0
      %v4446 = vadd.f32 %v4123, %v4445
      %v4447 = vpop.f32.mrf.mxu0
      %4448 = vmatprep.mubr.bf16.mxu0 0
      %4449 = vmatmul.mubr.bf16.gmra.mxu0 %v4076
      %v4450 = vpop.f32.mrf.mxu0
      %v4451 = vadd.f32 %v4123, %v4450
      %v4452 = vpop.f32.mrf.mxu0
      %v4453 = vpop.f32.mrf.mxu0
      %v4454 = vadd.f32 %v4123, %v4453
      %v4455 = vpop.f32.mrf.mxu0
      %4456 = vmatprep.mubr.bf16.mxu0 0
      %4457 = vmatmul.mubr.bf16.gmra.mxu0 %v4077
      %v4458 = vpop.f32.mrf.mxu0
      %v4459 = vadd.f32 %v4123, %v4458
      %v4460 = vpop.f32.mrf.mxu0
      %v4461 = vpop.f32.mrf.mxu0
      %v4462 = vadd.f32 %v4123, %v4461
      %v4463 = vpop.f32.mrf.mxu0
      %4464 = vdwg.mxu0
      %v4465 = vmul.f32 %v3215, %v4290
      %v4466 = vmul.f32 %v3218, %v4294
      %v4467 = vmul.f32 %v3223, %v4300
      %v4468 = vmul.f32 %v3226, %v4304
      %v4469 = vmul.f32 %v3231, %v4310
      %v4470 = vmul.f32 %v3234, %v4314
      %v4471 = vmul.f32 %v3239, %v4320
      %v4472 = vmul.f32 %v3242, %v4324
      %v4473 = vmul.f32 %v3247, %v4330
      %v4474 = vmul.f32 %v3250, %v4334
      %v4475 = vmul.f32 %v3255, %v4340
      %v4476 = vmul.f32 %v3258, %v4344
      %v4477 = vmul.f32 %v3263, %v4350
      %v4478 = vmul.f32 %v3266, %v4354
      %v4479 = vmul.f32 %v3271, %v4360
      %v4480 = vmul.f32 %v3274, %v4364
      %v4481 = vadd.f32 %v2697, %v4465
      %v4482 = vadd.f32 %v2698, %v4466
      %v4483 = vadd.f32 %v2699, %v4467
      %v4484 = vadd.f32 %v2700, %v4468
      %v4485 = vadd.f32 %v2701, %v4469
      %v4486 = vadd.f32 %v2702, %v4470
      %v4487 = vadd.f32 %v2703, %v4471
      %v4488 = vadd.f32 %v2704, %v4472
      %v4489 = vadd.f32 %v2705, %v4473
      %v4490 = vadd.f32 %v2706, %v4474
      %v4491 = vadd.f32 %v2707, %v4475
      %v4492 = vadd.f32 %v2708, %v4476
      %v4493 = vadd.f32 %v2709, %v4477
      %v4494 = vadd.f32 %v2710, %v4478
      %v4495 = vadd.f32 %v2711, %v4479
      %v4496 = vadd.f32 %v2712, %v4480
      %4497 = vst [vmem:[#allocation26] sm:$0xff] %v4481
      %4498 = vst [vmem:[#allocation26 + $0x8] sm:$0xff] %v4482
      %4499 = vst [vmem:[#allocation26 + $0x10] sm:$0xff] %v4483
      %4500 = vst [vmem:[#allocation26 + $0x18] sm:$0xff] %v4484
      %4501 = vst [vmem:[#allocation26 + $0x20] sm:$0xff] %v4485
      %4502 = vst [vmem:[#allocation26 + $0x28] sm:$0xff] %v4486
      %4503 = vst [vmem:[#allocation26 + $0x30] sm:$0xff] %v4487
      %4504 = vst [vmem:[#allocation26 + $0x38] sm:$0xff] %v4488
      %4505 = vst [vmem:[#allocation26 + $0x40] sm:$0xff] %v4489
      %4506 = vst [vmem:[#allocation26 + $0x48] sm:$0xff] %v4490
      %4507 = vst [vmem:[#allocation26 + $0x50] sm:$0xff] %v4491
      %4508 = vst [vmem:[#allocation26 + $0x58] sm:$0xff] %v4492
      %4509 = vst [vmem:[#allocation26 + $0x60] sm:$0xff] %v4493
      %4510 = vst [vmem:[#allocation26 + $0x68] sm:$0xff] %v4494
      %4511 = vst [vmem:[#allocation26 + $0x70] sm:$0xff] %v4495
      %4512 = vst [vmem:[#allocation26 + $0x78] sm:$0xff] %v4496
      %v4513 = vmul.f32 %v3279, %v4290
      %v4514 = vmul.f32 %v3282, %v4294
      %v4515 = vmul.f32 %v3287, %v4300
      %v4516 = vmul.f32 %v3290, %v4304
      %v4517 = vmul.f32 %v3295, %v4310
      %v4518 = vmul.f32 %v3298, %v4314
      %v4519 = vmul.f32 %v3303, %v4320
      %v4520 = vmul.f32 %v3306, %v4324
      %v4521 = vmul.f32 %v3311, %v4330
      %v4522 = vmul.f32 %v3314, %v4334
      %v4523 = vmul.f32 %v3319, %v4340
      %v4524 = vmul.f32 %v3322, %v4344
      %v4525 = vmul.f32 %v3327, %v4350
      %v4526 = vmul.f32 %v3330, %v4354
      %v4527 = vmul.f32 %v3335, %v4360
      %v4528 = vmul.f32 %v3338, %v4364
      %v4529 = vadd.f32 %v2730, %v4513
      %v4530 = vadd.f32 %v2731, %v4514
      %v4531 = vadd.f32 %v2732, %v4515
      %v4532 = vadd.f32 %v2733, %v4516
      %v4533 = vadd.f32 %v2734, %v4517
      %v4534 = vadd.f32 %v2735, %v4518
      %v4535 = vadd.f32 %v2736, %v4519
      %v4536 = vadd.f32 %v2737, %v4520
      %v4537 = vadd.f32 %v2738, %v4521
      %v4538 = vadd.f32 %v2739, %v4522
      %v4539 = vadd.f32 %v2740, %v4523
      %v4540 = vadd.f32 %v2741, %v4524
      %v4541 = vadd.f32 %v2742, %v4525
      %v4542 = vadd.f32 %v2743, %v4526
      %v4543 = vadd.f32 %v2744, %v4527
      %v4544 = vadd.f32 %v2745, %v4528
      %s4545 = scalar_lea.vmem [#allocation26], 128
      %4546 = vst [vmem:[%s4545] sm:$0xff] %v4529
      %4547 = vst [vmem:[%s4545 + $0x8] sm:$0xff] %v4530
      %4548 = vst [vmem:[%s4545 + $0x10] sm:$0xff] %v4531
      %4549 = vst [vmem:[%s4545 + $0x18] sm:$0xff] %v4532
      %4550 = vst [vmem:[%s4545 + $0x20] sm:$0xff] %v4533
      %4551 = vst [vmem:[%s4545 + $0x28] sm:$0xff] %v4534
      %4552 = vst [vmem:[%s4545 + $0x30] sm:$0xff] %v4535
      %4553 = vst [vmem:[%s4545 + $0x38] sm:$0xff] %v4536
      %4554 = vst [vmem:[%s4545 + $0x40] sm:$0xff] %v4537
      %4555 = vst [vmem:[%s4545 + $0x48] sm:$0xff] %v4538
      %4556 = vst [vmem:[%s4545 + $0x50] sm:$0xff] %v4539
      %4557 = vst [vmem:[%s4545 + $0x58] sm:$0xff] %v4540
      %4558 = vst [vmem:[%s4545 + $0x60] sm:$0xff] %v4541
      %4559 = vst [vmem:[%s4545 + $0x68] sm:$0xff] %v4542
      %4560 = vst [vmem:[%s4545 + $0x70] sm:$0xff] %v4543
      %4561 = vst [vmem:[%s4545 + $0x78] sm:$0xff] %v4544
      %v4562 = vmul.f32 %v3343, %v4290
      %v4563 = vmul.f32 %v3346, %v4294
      %v4564 = vmul.f32 %v3351, %v4300
      %v4565 = vmul.f32 %v3354, %v4304
      %v4566 = vmul.f32 %v3359, %v4310
      %v4567 = vmul.f32 %v3362, %v4314
      %v4568 = vmul.f32 %v3367, %v4320
      %v4569 = vmul.f32 %v3370, %v4324
      %v4570 = vmul.f32 %v3375, %v4330
      %v4571 = vmul.f32 %v3378, %v4334
      %v4572 = vmul.f32 %v3383, %v4340
      %v4573 = vmul.f32 %v3386, %v4344
      %v4574 = vmul.f32 %v3391, %v4350
      %v4575 = vmul.f32 %v3394, %v4354
      %v4576 = vmul.f32 %v3399, %v4360
      %v4577 = vmul.f32 %v3402, %v4364
      %v4578 = vadd.f32 %v2763, %v4562
      %v4579 = vadd.f32 %v2764, %v4563
      %v4580 = vadd.f32 %v2765, %v4564
      %v4581 = vadd.f32 %v2766, %v4565
      %v4582 = vadd.f32 %v2767, %v4566
      %v4583 = vadd.f32 %v2768, %v4567
      %v4584 = vadd.f32 %v2769, %v4568
      %v4585 = vadd.f32 %v2770, %v4569
      %v4586 = vadd.f32 %v2771, %v4570
      %v4587 = vadd.f32 %v2772, %v4571
      %v4588 = vadd.f32 %v2773, %v4572
      %v4589 = vadd.f32 %v2774, %v4573
      %v4590 = vadd.f32 %v2775, %v4574
      %v4591 = vadd.f32 %v2776, %v4575
      %v4592 = vadd.f32 %v2777, %v4576
      %v4593 = vadd.f32 %v2778, %v4577
      %s4594 = scalar_lea.vmem [#allocation26], 256
      %4595 = vst [vmem:[%s4594] sm:$0xff] %v4578
      %4596 = vst [vmem:[%s4594 + $0x8] sm:$0xff] %v4579
      %4597 = vst [vmem:[%s4594 + $0x10] sm:$0xff] %v4580
      %4598 = vst [vmem:[%s4594 + $0x18] sm:$0xff] %v4581
      %4599 = vst [vmem:[%s4594 + $0x20] sm:$0xff] %v4582
      %4600 = vst [vmem:[%s4594 + $0x28] sm:$0xff] %v4583
      %4601 = vst [vmem:[%s4594 + $0x30] sm:$0xff] %v4584
      %4602 = vst [vmem:[%s4594 + $0x38] sm:$0xff] %v4585
      %4603 = vst [vmem:[%s4594 + $0x40] sm:$0xff] %v4586
      %4604 = vst [vmem:[%s4594 + $0x48] sm:$0xff] %v4587
      %4605 = vst [vmem:[%s4594 + $0x50] sm:$0xff] %v4588
      %4606 = vst [vmem:[%s4594 + $0x58] sm:$0xff] %v4589
      %4607 = vst [vmem:[%s4594 + $0x60] sm:$0xff] %v4590
      %4608 = vst [vmem:[%s4594 + $0x68] sm:$0xff] %v4591
      %4609 = vst [vmem:[%s4594 + $0x70] sm:$0xff] %v4592
      %4610 = vst [vmem:[%s4594 + $0x78] sm:$0xff] %v4593
      %v4611 = vmul.f32 %v3215, %v2902
      %v4612 = vmul.f32 %v3218, %v2905
      %v4613 = vmul.f32 %v3223, %v2910
      %v4614 = vmul.f32 %v3226, %v2913
      %v4615 = vmul.f32 %v3231, %v2918
      %v4616 = vmul.f32 %v3234, %v2921
      %v4617 = vmul.f32 %v3239, %v2926
      %v4618 = vmul.f32 %v3242, %v2929
      %v4619 = vmul.f32 %v3247, %v2934
      %v4620 = vmul.f32 %v3250, %v2937
      %v4621 = vmul.f32 %v3255, %v2942
      %v4622 = vmul.f32 %v3258, %v2945
      %v4623 = vmul.f32 %v3263, %v2950
      %v4624 = vmul.f32 %v3266, %v2953
      %v4625 = vmul.f32 %v3271, %v2958
      %v4626 = vmul.f32 %v3274, %v2961
      %v4627 = vmul.f32 %v3279, %v2966
      %v4628 = vmul.f32 %v3282, %v2969
      %v4629 = vmul.f32 %v3287, %v2974
      %v4630 = vmul.f32 %v3290, %v2977
      %v4631 = vmul.f32 %v3295, %v2982
      %v4632 = vmul.f32 %v3298, %v2985
      %v4633 = vmul.f32 %v3303, %v2990
      %v4634 = vmul.f32 %v3306, %v2993
      %v4635 = vmul.f32 %v3311, %v2998
      %v4636 = vmul.f32 %v3314, %v3001
      %v4637 = vmul.f32 %v3319, %v3006
      %v4638 = vmul.f32 %v3322, %v3009
      %v4639 = vmul.f32 %v3327, %v3014
      %v4640 = vmul.f32 %v3330, %v3017
      %v4641 = vmul.f32 %v3335, %v3022
      %v4642 = vmul.f32 %v3338, %v3025
      %v4643 = vadd.f32 %v4611, %v4627
      %v4644 = vadd.f32 %v4612, %v4628
      %v4645 = vadd.f32 %v4613, %v4629
      %v4646 = vadd.f32 %v4614, %v4630
      %v4647 = vadd.f32 %v4615, %v4631
      %v4648 = vadd.f32 %v4616, %v4632
      %v4649 = vadd.f32 %v4617, %v4633
      %v4650 = vadd.f32 %v4618, %v4634
      %v4651 = vadd.f32 %v4619, %v4635
      %v4652 = vadd.f32 %v4620, %v4636
      %v4653 = vadd.f32 %v4621, %v4637
      %v4654 = vadd.f32 %v4622, %v4638
      %v4655 = vadd.f32 %v4623, %v4639
      %v4656 = vadd.f32 %v4624, %v4640
      %v4657 = vadd.f32 %v4625, %v4641
      %v4658 = vadd.f32 %v4626, %v4642
      %v4659 = vmul.f32 %v3343, %v3030
      %v4660 = vmul.f32 %v3346, %v3033
      %v4661 = vmul.f32 %v3351, %v3038
      %v4662 = vmul.f32 %v3354, %v3041
      %v4663 = vmul.f32 %v3359, %v3046
      %v4664 = vmul.f32 %v3362, %v3049
      %v4665 = vmul.f32 %v3367, %v3054
      %v4666 = vmul.f32 %v3370, %v3057
      %v4667 = vmul.f32 %v3375, %v3062
      %v4668 = vmul.f32 %v3378, %v3065
      %v4669 = vmul.f32 %v3383, %v3070
      %v4670 = vmul.f32 %v3386, %v3073
      %v4671 = vmul.f32 %v3391, %v3078
      %v4672 = vmul.f32 %v3394, %v3081
      %v4673 = vmul.f32 %v3399, %v3086
      %v4674 = vmul.f32 %v3402, %v3089
      %v4675 = vadd.f32 %v4643, %v4659
      %v4676 = vadd.f32 %v4644, %v4660
      %v4677 = vadd.f32 %v4645, %v4661
      %v4678 = vadd.f32 %v4646, %v4662
      %v4679 = vadd.f32 %v4647, %v4663
      %v4680 = vadd.f32 %v4648, %v4664
      %v4681 = vadd.f32 %v4649, %v4665
      %v4682 = vadd.f32 %v4650, %v4666
      %v4683 = vadd.f32 %v4651, %v4667
      %v4684 = vadd.f32 %v4652, %v4668
      %v4685 = vadd.f32 %v4653, %v4669
      %v4686 = vadd.f32 %v4654, %v4670
      %v4687 = vadd.f32 %v4655, %v4671
      %v4688 = vadd.f32 %v4656, %v4672
      %v4689 = vadd.f32 %v4657, %v4673
      %v4690 = vadd.f32 %v4658, %v4674
      %v4691 = vmul.f32 %v4675, %v4292
      %v4692 = vmul.f32 %v4676, %v4296
      %v4693 = vmul.f32 %v4677, %v4302
      %v4694 = vmul.f32 %v4678, %v4306
      %v4695 = vmul.f32 %v4679, %v4312
      %v4696 = vmul.f32 %v4680, %v4316
      %v4697 = vmul.f32 %v4681, %v4322
      %v4698 = vmul.f32 %v4682, %v4326
      %v4699 = vmul.f32 %v4683, %v4332
      %v4700 = vmul.f32 %v4684, %v4336
      %v4701 = vmul.f32 %v4685, %v4342
      %v4702 = vmul.f32 %v4686, %v4346
      %v4703 = vmul.f32 %v4687, %v4352
      %v4704 = vmul.f32 %v4688, %v4356
      %v4705 = vmul.f32 %v4689, %v4362
      %v4706 = vmul.f32 %v4690, %v4366
      %v4707 = vadd.f32 %v2665, %v4691
      %v4708 = vadd.f32 %v2666, %v4692
      %v4709 = vadd.f32 %v2667, %v4693
      %v4710 = vadd.f32 %v2668, %v4694
      %v4711 = vadd.f32 %v2669, %v4695
      %v4712 = vadd.f32 %v2670, %v4696
      %v4713 = vadd.f32 %v2671, %v4697
      %v4714 = vadd.f32 %v2672, %v4698
      %v4715 = vadd.f32 %v2673, %v4699
      %v4716 = vadd.f32 %v2674, %v4700
      %v4717 = vadd.f32 %v2675, %v4701
      %v4718 = vadd.f32 %v2676, %v4702
      %v4719 = vadd.f32 %v2677, %v4703
      %v4720 = vadd.f32 %v2678, %v4704
      %v4721 = vadd.f32 %v2679, %v4705
      %v4722 = vadd.f32 %v2680, %v4706
      %v4723 = vadd.f32 %v4707, %v4403
      %v4724 = vadd.f32 %v4708, %v4406
      %v4725 = vadd.f32 %v4709, %v4411
      %v4726 = vadd.f32 %v4710, %v4414
      %v4727 = vadd.f32 %v4711, %v4419
      %v4728 = vadd.f32 %v4712, %v4422
      %v4729 = vadd.f32 %v4713, %v4427
      %v4730 = vadd.f32 %v4714, %v4430
      %v4731 = vadd.f32 %v4715, %v4435
      %v4732 = vadd.f32 %v4716, %v4438
      %v4733 = vadd.f32 %v4717, %v4443
      %v4734 = vadd.f32 %v4718, %v4446
      %v4735 = vadd.f32 %v4719, %v4451
      %v4736 = vadd.f32 %v4720, %v4454
      %v4737 = vadd.f32 %v4721, %v4459
      %v4738 = vadd.f32 %v4722, %v4462
      %4739 = vst [vmem:[#allocation25] sm:$0xff] %v4723
      %4740 = vst [vmem:[#allocation25 + $0x8] sm:$0xff] %v4724
      %4741 = vst [vmem:[#allocation25 + $0x10] sm:$0xff] %v4725
      %4742 = vst [vmem:[#allocation25 + $0x18] sm:$0xff] %v4726
      %4743 = vst [vmem:[#allocation25 + $0x20] sm:$0xff] %v4727
      %4744 = vst [vmem:[#allocation25 + $0x28] sm:$0xff] %v4728
      %4745 = vst [vmem:[#allocation25 + $0x30] sm:$0xff] %v4729
      %4746 = vst [vmem:[#allocation25 + $0x38] sm:$0xff] %v4730
      %4747 = vst [vmem:[#allocation25 + $0x40] sm:$0xff] %v4731
      %4748 = vst [vmem:[#allocation25 + $0x48] sm:$0xff] %v4732
      %4749 = vst [vmem:[#allocation25 + $0x50] sm:$0xff] %v4733
      %4750 = vst [vmem:[#allocation25 + $0x58] sm:$0xff] %v4734
      %4751 = vst [vmem:[#allocation25 + $0x60] sm:$0xff] %v4735
      %4752 = vst [vmem:[#allocation25 + $0x68] sm:$0xff] %v4736
      %4753 = vst [vmem:[#allocation25 + $0x70] sm:$0xff] %v4737
      %4754 = vst [vmem:[#allocation25 + $0x78] sm:$0xff] %v4738
    $region129: #{tpu_custom_call.1} parent=1 // pred_fallthru
      _
    // Predicated region
    $region130: #{tpu_custom_call.1} parent=1 // pred_check
      _
    $region131: #{tpu_custom_call.1} parent=1 // pred_check_branch
      %4756 = sbr.rel (0) target = $region133
    $region132: #{tpu_custom_call.1} parent=1 // pred_region
      %s4758 = ssub.s32 2048, 2048
      %4759 = vsyncadd [#allocation7], %s4758
      %s4760 = sshll.u32 [#allocation25], 4
      %s4761 = int_to_ptr.vmem [resolvable:$true] %s4760
      %4766 = dma.vmem_to_hbm [thread:$0]  %s4761, 2048, %s18, [#allocation7], 128, 128, 8
    $region133: #{tpu_custom_call.1} parent=1 // pred_fallthru
      _
    // Predicated region
    $region134: #{tpu_custom_call.1} parent=1 // pred_check
      _
    $region135: #{tpu_custom_call.1} parent=1 // pred_check_branch
      %4768 = sbr.rel (0) target = $region137
    $region136: #{tpu_custom_call.1} parent=1 // pred_region
      %s4770 = ssub.s32 6144, 6144
      %4771 = vsyncadd [#allocation27], %s4770
      %s4772 = sshll.u32 [#allocation26], 4
      %s4773 = int_to_ptr.vmem [resolvable:$true] %s4772
      %4778 = dma.vmem_to_hbm [thread:$0]  %s4773, 6144, %s19, [#allocation27], 128, 128, 8
    $region137: #{tpu_custom_call.1} parent=1 // pred_fallthru
      _
    // Predicated region
    $region138: #{tpu_custom_call.1} parent=1 // pred_check
      _
    $region139: #{tpu_custom_call.1} parent=1 // pred_check_branch
      %4780 = sbr.rel (0) target = $region141
    $region140: #{tpu_custom_call.1} parent=1 // pred_region
      %4781 = dma.done [#allocation7], 2048
    $region141: #{tpu_custom_call.1} parent=1 // pred_fallthru
      _
    // Predicated region
    $region142: #{tpu_custom_call.1} parent=1 // pred_check
      _
    $region143: #{tpu_custom_call.1} parent=1 // pred_check_branch
      %4783 = sbr.rel (0) target = $region145
    $region144: #{tpu_custom_call.1} parent=1 // pred_region
      %4784 = dma.done [#allocation27], 6144
    $region145: #{tpu_custom_call.1} parent=1 // pred_fallthru
      _
    %4785 = vsyncpa [#allocation6], 1
    %4786 = vsyncpa [#allocation9], 1
    %4787 = vsyncpa [#allocation12], 1
    %4788 = vsyncpa [#allocation15], 1
    %4789 = vsyncpa [#allocation18], 1
    %4790 = vsyncpa [#allocation21], 1
    %4791 = vsyncpa [#allocation24], 1
    %4792 = vsyncpa [#allocation7], 1
    %4793 = vsyncpa [#allocation27], 1

</llo_original>
